<compile_context>
chip_gen: v7x
topology: tpu7x:2x2x1
jax: 0.10.0
libtpu: 0.0.40
codegen_flags: <defaults>
</compile_context>

<pallas_src>
import functools

import jax
import jax.numpy as jnp
from jax import lax
from jax.experimental import pallas as pl
from jax.experimental.pallas import tpu as pltpu


def _stability_kernel(wt_ref, rstar_ref, v0_ref, out_ref, *,
                      max_instability: float, n_iters: int, norm_every: int):
    # --- linear_perturbed_model: W_eff = diag(gain) @ W ----------------------
    # Row-vector (lane-dense) form: u_row = (v_row @ W^T) * gain_row.
    gain = 2.0 * jnp.sqrt(jnp.maximum(rstar_ref[...], 0.0))          # (1, N) f32

    wt_f32 = wt_ref[...]                                             # (N, N) = W^T
    wt_b16 = wt_f32.astype(jnp.bfloat16)                             # bf16 copy for the loop

    v = v0_ref[...]                                                  # (1, N) f32
    v = v * lax.rsqrt(jnp.sum(v * v) + 1e-30)

    def matvec(v):
        # bf16 MXU matvec with f32 accumulation; gain applied per-row.
        u = jnp.dot(v.astype(jnp.bfloat16), wt_b16,
                    preferred_element_type=jnp.float32)              # (1, N)
        return u * gain

    def outer(_, v):
        for _ in range(norm_every):          # trace-time constant -> unrolled
            v = matvec(v)
        return v * lax.rsqrt(jnp.sum(v * v) + 1e-30)

    n_outer = n_iters // norm_every
    v = lax.fori_loop(0, n_outer, outer, v, unroll=True)

    rem = n_iters - n_outer * norm_every
    if rem:                                   # trace-time Python branch
        for _ in range(rem):
            v = matvec(v)
        v = v * lax.rsqrt(jnp.sum(v * v) + 1e-30)

    # --- instability(): Rayleigh quotient of the converged direction (f32) ---
    # TODO(synk): exact eigvals spectral abscissa has no Pallas equivalent.
    u = jnp.dot(v, wt_f32, preferred_element_type=jnp.float32) * gain
    lam = jnp.sum(v * u) / (jnp.sum(v * v) + 1e-30)

    out_ref[0, 0] = jnp.float32(max_instability) - lam


def stability_con(W, r_star, v0, *, max_instability=0.99, n_iters=64,
                  norm_every=8):
    """Returns max_instability - instability(linear_perturbed_model(W, r_star))."""
    N = W.shape[0]
    w_t = jnp.transpose(W).astype(jnp.float32)          # row-vector matvec: v @ W^T
    r_row = jnp.reshape(r_star, (1, N)).astype(jnp.float32)
    v_row = jnp.reshape(v0, (1, N)).astype(jnp.float32)

    kernel = functools.partial(
        _stability_kernel, max_instability=max_instability,
        n_iters=n_iters, norm_every=norm_every)

    out = pl.pallas_call(
        kernel,
        out_shape=jax.ShapeDtypeStruct((1, 1), jnp.float32),
        in_specs=[
            pl.BlockSpec((N, N), lambda: (0, 0)),        # W^T, single VMEM block
            pl.BlockSpec((1, N), lambda: (0, 0)),        # r_star (lane-dense row)
            pl.BlockSpec((1, N), lambda: (0, 0)),        # v0     (lane-dense row)
        ],
        out_specs=pl.BlockSpec(memory_space=pltpu.SMEM),  # scalar result -> SMEM
        compiler_params=pltpu.CompilerParams(vmem_limit_bytes=32 << 20),
    )(w_t, r_row, v_row)
    # TODO(synk): for N >~ 2k (or batched (W, r_star) instances) switch to a
    # tiled-K grid / parallel batch axis; at N=128 a single block is optimal.
    return out[0, 0]


# ---------------------------------------------------------------------------
# Plain-JAX glue: discretize a 2-cell-type (E/I) Gaussian connectivity kernel
# onto a periodic 8x8 grid, mimicking a_model.numerical_model(grid).
# ---------------------------------------------------------------------------
def build_numerical_W(H=8, Wg=8):
    n_types = 2                                   # [E, I]
    amp = jnp.array([[1.00, -1.50],
                     [1.20, -1.00]], dtype=jnp.float32)        # amp[post, pre]
    sigma = jnp.array([[0.125, 0.100],
                       [0.150, 0.100]], dtype=jnp.float32)     # grid units (0..1)

    ys = jnp.arange(H, dtype=jnp.float32) / H
    xs = jnp.arange(Wg, dtype=jnp.float32) / Wg
    yy, xx = jnp.meshgrid(ys, xs, indexing="ij")               # (H, Wg)
    pos = jnp.stack([yy.ravel(), xx.ravel()], axis=-1)         # (L, 2)

    d = pos[:, None, :] - pos[None, :, :]                      # periodic distance
    d = jnp.minimum(jnp.abs(d), 1.0 - jnp.abs(d))
    d2 = jnp.sum(d * d, axis=-1)                               # (L, L)

    blocks = []
    for a in range(n_types):
        row = []
        for b in range(n_types):
            g = jnp.exp(-d2 / (2.0 * sigma[a, b] ** 2))
            g = g / jnp.sum(g, axis=1, keepdims=True)          # normalize kernel mass
            row.append(amp[a, b] * g)
        blocks.append(jnp.concatenate(row, axis=1))
    W = jnp.concatenate(blocks, axis=0)                        # (N, N)
    return W.astype(jnp.float32)


if __name__ == "__main__":
    H, Wg = 8, 8
    N = 2 * H * Wg                                             # 128
    N_ITERS, NORM_EVERY = 64, 8

    key = jax.random.PRNGKey(0)
    k1, k2 = jax.random.split(key)

    W = build_numerical_W(H, Wg)                               # (128, 128)
    r_star = jax.random.uniform(k1, (N, 1), jnp.float32,
                                minval=0.5, maxval=2.0)        # fixed-point rates
    v0 = jax.random.normal(k2, (N, 1), jnp.float32)            # power-iter start

    result = stability_con(W, r_star, v0, max_instability=0.99,
                           n_iters=N_ITERS, norm_every=NORM_EVERY)
    jax.block_until_ready(result)

    # Reference in plain JAX, using the exact same algorithm/schedule.
    gain = 2.0 * jnp.sqrt(jnp.maximum(r_star.reshape(1, N), 0.0))
    wt = W.T
    wt_b = wt.astype(jnp.bfloat16)
    v = v0.reshape(1, N)
    v = v * lax.rsqrt(jnp.sum(v * v) + 1e-30)
    for i in range(1, N_ITERS + 1):
        v = jnp.dot(v.astype(jnp.bfloat16), wt_b,
                    preferred_element_type=jnp.float32) * gain
        if i % NORM_EVERY == 0:
            v = v * lax.rsqrt(jnp.sum(v * v) + 1e-30)
    u = jnp.dot(v, wt, preferred_element_type=jnp.float32) * gain
    ref = 0.99 - jnp.sum(v * u) / (jnp.sum(v * v) + 1e-30)

    assert jnp.allclose(result, ref, rtol=2e-3, atol=2e-3), (result, ref)

    print("KERNEL_OK")
</pallas_src>

<mosaic_0001>
module attributes {stable_mosaic.version = 11 : i64} {
  func.func @_stability_kernel(%arg0: memref<128x128xf32, #tpu.memory_space<vmem>>, %arg1: memref<1x128xf32, #tpu.memory_space<vmem>>, %arg2: memref<1x128xf32, #tpu.memory_space<vmem>>, %arg3: memref<1x1xf32, #tpu.memory_space<smem>>) attributes {dimension_semantics = [], scalar_prefetch = 0 : i64, scratch_operands = 0 : i64, tpu.core_type = #tpu.core_type<tc>} {
    %c0 = arith.constant 0 : index
    %c0_0 = arith.constant 0 : index
    %0 = vector.load %arg1[%c0, %c0_0] : memref<1x128xf32, #tpu.memory_space<vmem>>, vector<1x128xf32>
    %cst = arith.constant 0.000000e+00 : f32
    %1 = vector.broadcast %cst : f32 to vector<1x128xf32>
    %2 = arith.maximumf %0, %1 : vector<1x128xf32>
    %3 = math.sqrt %2 : vector<1x128xf32>
    %cst_1 = arith.constant 2.000000e+00 : f32
    %4 = vector.broadcast %cst_1 : f32 to vector<1x128xf32>
    %5 = arith.mulf %4, %3 : vector<1x128xf32>
    %c0_2 = arith.constant 0 : index
    %c0_3 = arith.constant 0 : index
    %6 = vector.load %arg0[%c0_2, %c0_3] : memref<128x128xf32, #tpu.memory_space<vmem>>, vector<128x128xf32>
    %7 = arith.truncf %6 : vector<128x128xf32> to vector<128x128xbf16>
    %c0_4 = arith.constant 0 : index
    %c0_5 = arith.constant 0 : index
    %8 = vector.load %arg2[%c0_4, %c0_5] : memref<1x128xf32, #tpu.memory_space<vmem>>, vector<1x128xf32>
    %9 = arith.mulf %8, %8 : vector<1x128xf32>
    %10 = vector.shape_cast %9 : vector<1x128xf32> to vector<1x1x128xf32>
    %cst_6 = arith.constant dense<0.000000e+00> : vector<1xf32>
    %11 = vector.multi_reduction <add>, %10, %cst_6 [1, 2] : vector<1x1x128xf32> to vector<1xf32>
    %12 = vector.shape_cast %11 : vector<1xf32> to vector<1x1x1xf32>
    %13 = vector.extract %12[0, 0, 0] : f32 from vector<1x1x1xf32>
    %cst_7 = arith.constant 1.000000e-30 : f32
    %14 = arith.addf %13, %cst_7 : f32
    %15 = math.rsqrt %14 : f32
    %16 = vector.broadcast %15 : f32 to vector<1x128xf32>
    %17 = arith.mulf %8, %16 : vector<1x128xf32>
    %c0_i32 = arith.constant 0 : i32
    %18 = arith.truncf %17 : vector<1x128xf32> to vector<1x128xbf16>
    %cst_8 = arith.constant dense<0.000000e+00> : vector<1x128xf32>
    %19 = tpu.matmul %18, %7, %cst_8 {dimension_numbers = #tpu.dot_dimension_numbers<[1], [0], [0], [1], [0, 0, 1, 1], [], []>} : vector<1x128xbf16>, vector<128x128xbf16>, vector<1x128xf32> -> vector<1x128xf32>
    %20 = arith.mulf %19, %5 : vector<1x128xf32>
    %21 = arith.truncf %20 : vector<1x128xf32> to vector<1x128xbf16>
    %cst_9 = arith.constant dense<0.000000e+00> : vector<1x128xf32>
    %22 = tpu.matmul %21, %7, %cst_9 {dimension_numbers = #tpu.dot_dimension_numbers<[1], [0], [0], [1], [0, 0, 1, 1], [], []>} : vector<1x128xbf16>, vector<128x128xbf16>, vector<1x128xf32> -> vector<1x128xf32>
    %23 = arith.mulf %22, %5 : vector<1x128xf32>
    %24 = arith.truncf %23 : vector<1x128xf32> to vector<1x128xbf16>
    %cst_10 = arith.constant dense<0.000000e+00> : vector<1x128xf32>
    %25 = tpu.matmul %24, %7, %cst_10 {dimension_numbers = #tpu.dot_dimension_numbers<[1], [0], [0], [1], [0, 0, 1, 1], [], []>} : vector<1x128xbf16>, vector<128x128xbf16>, vector<1x128xf32> -> vector<1x128xf32>
    %26 = arith.mulf %25, %5 : vector<1x128xf32>
    %27 = arith.truncf %26 : vector<1x128xf32> to vector<1x128xbf16>
    %cst_11 = arith.constant dense<0.000000e+00> : vector<1x128xf32>
    %28 = tpu.matmul %27, %7, %cst_11 {dimension_numbers = #tpu.dot_dimension_numbers<[1], [0], [0], [1], [0, 0, 1, 1], [], []>} : vector<1x128xbf16>, vector<128x128xbf16>, vector<1x128xf32> -> vector<1x128xf32>
    %29 = arith.mulf %28, %5 : vector<1x128xf32>
    %30 = arith.truncf %29 : vector<1x128xf32> to vector<1x128xbf16>
    %cst_12 = arith.constant dense<0.000000e+00> : vector<1x128xf32>
    %31 = tpu.matmul %30, %7, %cst_12 {dimension_numbers = #tpu.dot_dimension_numbers<[1], [0], [0], [1], [0, 0, 1, 1], [], []>} : vector<1x128xbf16>, vector<128x128xbf16>, vector<1x128xf32> -> vector<1x128xf32>
    %32 = arith.mulf %31, %5 : vector<1x128xf32>
    %33 = arith.truncf %32 : vector<1x128xf32> to vector<1x128xbf16>
    %cst_13 = arith.constant dense<0.000000e+00> : vector<1x128xf32>
    %34 = tpu.matmul %33, %7, %cst_13 {dimension_numbers = #tpu.dot_dimension_numbers<[1], [0], [0], [1], [0, 0, 1, 1], [], []>} : vector<1x128xbf16>, vector<128x128xbf16>, vector<1x128xf32> -> vector<1x128xf32>
    %35 = arith.mulf %34, %5 : vector<1x128xf32>
    %36 = arith.truncf %35 : vector<1x128xf32> to vector<1x128xbf16>
    %cst_14 = arith.constant dense<0.000000e+00> : vector<1x128xf32>
    %37 = tpu.matmul %36, %7, %cst_14 {dimension_numbers = #tpu.dot_dimension_numbers<[1], [0], [0], [1], [0, 0, 1, 1], [], []>} : vector<1x128xbf16>, vector<128x128xbf16>, vector<1x128xf32> -> vector<1x128xf32>
    %38 = arith.mulf %37, %5 : vector<1x128xf32>
    %39 = arith.truncf %38 : vector<1x128xf32> to vector<1x128xbf16>
    %cst_15 = arith.constant dense<0.000000e+00> : vector<1x128xf32>
    %40 = tpu.matmul %39, %7, %cst_15 {dimension_numbers = #tpu.dot_dimension_numbers<[1], [0], [0], [1], [0, 0, 1, 1], [], []>} : vector<1x128xbf16>, vector<128x128xbf16>, vector<1x128xf32> -> vector<1x128xf32>
    %41 = arith.mulf %40, %5 : vector<1x128xf32>
    %42 = arith.mulf %41, %41 : vector<1x128xf32>
    %43 = vector.shape_cast %42 : vector<1x128xf32> to vector<1x1x128xf32>
    %cst_16 = arith.constant dense<0.000000e+00> : vector<1xf32>
    %44 = vector.multi_reduction <add>, %43, %cst_16 [1, 2] : vector<1x1x128xf32> to vector<1xf32>
    %45 = vector.shape_cast %44 : vector<1xf32> to vector<1x1x1xf32>
    %46 = vector.extract %45[0, 0, 0] : f32 from vector<1x1x1xf32>
    %cst_17 = arith.constant 1.000000e-30 : f32
    %47 = arith.addf %46, %cst_17 : f32
    %48 = math.rsqrt %47 : f32
    %49 = vector.broadcast %48 : f32 to vector<1x128xf32>
    %50 = arith.mulf %41, %49 : vector<1x128xf32>
    %c1_i32 = arith.constant 1 : i32
    %51 = arith.truncf %50 : vector<1x128xf32> to vector<1x128xbf16>
    %cst_18 = arith.constant dense<0.000000e+00> : vector<1x128xf32>
    %52 = tpu.matmul %51, %7, %cst_18 {dimension_numbers = #tpu.dot_dimension_numbers<[1], [0], [0], [1], [0, 0, 1, 1], [], []>} : vector<1x128xbf16>, vector<128x128xbf16>, vector<1x128xf32> -> vector<1x128xf32>
    %53 = arith.mulf %52, %5 : vector<1x128xf32>
    %54 = arith.truncf %53 : vector<1x128xf32> to vector<1x128xbf16>
    %cst_19 = arith.constant dense<0.000000e+00> : vector<1x128xf32>
    %55 = tpu.matmul %54, %7, %cst_19 {dimension_numbers = #tpu.dot_dimension_numbers<[1], [0], [0], [1], [0, 0, 1, 1], [], []>} : vector<1x128xbf16>, vector<128x128xbf16>, vector<1x128xf32> -> vector<1x128xf32>
    %56 = arith.mulf %55, %5 : vector<1x128xf32>
    %57 = arith.truncf %56 : vector<1x128xf32> to vector<1x128xbf16>
    %cst_20 = arith.constant dense<0.000000e+00> : vector<1x128xf32>
    %58 = tpu.matmul %57, %7, %cst_20 {dimension_numbers = #tpu.dot_dimension_numbers<[1], [0], [0], [1], [0, 0, 1, 1], [], []>} : vector<1x128xbf16>, vector<128x128xbf16>, vector<1x128xf32> -> vector<1x128xf32>
    %59 = arith.mulf %58, %5 : vector<1x128xf32>
    %60 = arith.truncf %59 : vector<1x128xf32> to vector<1x128xbf16>
    %cst_21 = arith.constant dense<0.000000e+00> : vector<1x128xf32>
    %61 = tpu.matmul %60, %7, %cst_21 {dimension_numbers = #tpu.dot_dimension_numbers<[1], [0], [0], [1], [0, 0, 1, 1], [], []>} : vector<1x128xbf16>, vector<128x128xbf16>, vector<1x128xf32> -> vector<1x128xf32>
    %62 = arith.mulf %61, %5 : vector<1x128xf32>
    %63 = arith.truncf %62 : vector<1x128xf32> to vector<1x128xbf16>
    %cst_22 = arith.constant dense<0.000000e+00> : vector<1x128xf32>
    %64 = tpu.matmul %63, %7, %cst_22 {dimension_numbers = #tpu.dot_dimension_numbers<[1], [0], [0], [1], [0, 0, 1, 1], [], []>} : vector<1x128xbf16>, vector<128x128xbf16>, vector<1x128xf32> -> vector<1x128xf32>
    %65 = arith.mulf %64, %5 : vector<1x128xf32>
    %66 = arith.truncf %65 : vector<1x128xf32> to vector<1x128xbf16>
    %cst_23 = arith.constant dense<0.000000e+00> : vector<1x128xf32>
    %67 = tpu.matmul %66, %7, %cst_23 {dimension_numbers = #tpu.dot_dimension_numbers<[1], [0], [0], [1], [0, 0, 1, 1], [], []>} : vector<1x128xbf16>, vector<128x128xbf16>, vector<1x128xf32> -> vector<1x128xf32>
    %68 = arith.mulf %67, %5 : vector<1x128xf32>
    %69 = arith.truncf %68 : vector<1x128xf32> to vector<1x128xbf16>
    %cst_24 = arith.constant dense<0.000000e+00> : vector<1x128xf32>
    %70 = tpu.matmul %69, %7, %cst_24 {dimension_numbers = #tpu.dot_dimension_numbers<[1], [0], [0], [1], [0, 0, 1, 1], [], []>} : vector<1x128xbf16>, vector<128x128xbf16>, vector<1x128xf32> -> vector<1x128xf32>
    %71 = arith.mulf %70, %5 : vector<1x128xf32>
    %72 = arith.truncf %71 : vector<1x128xf32> to vector<1x128xbf16>
    %cst_25 = arith.constant dense<0.000000e+00> : vector<1x128xf32>
    %73 = tpu.matmul %72, %7, %cst_25 {dimension_numbers = #tpu.dot_dimension_numbers<[1], [0], [0], [1], [0, 0, 1, 1], [], []>} : vector<1x128xbf16>, vector<128x128xbf16>, vector<1x128xf32> -> vector<1x128xf32>
    %74 = arith.mulf %73, %5 : vector<1x128xf32>
    %75 = arith.mulf %74, %74 : vector<1x128xf32>
    %76 = vector.shape_cast %75 : vector<1x128xf32> to vector<1x1x128xf32>
    %cst_26 = arith.constant dense<0.000000e+00> : vector<1xf32>
    %77 = vector.multi_reduction <add>, %76, %cst_26 [1, 2] : vector<1x1x128xf32> to vector<1xf32>
    %78 = vector.shape_cast %77 : vector<1xf32> to vector<1x1x1xf32>
    %79 = vector.extract %78[0, 0, 0] : f32 from vector<1x1x1xf32>
    %cst_27 = arith.constant 1.000000e-30 : f32
    %80 = arith.addf %79, %cst_27 : f32
    %81 = math.rsqrt %80 : f32
    %82 = vector.broadcast %81 : f32 to vector<1x128xf32>
    %83 = arith.mulf %74, %82 : vector<1x128xf32>
    %c2_i32 = arith.constant 2 : i32
    %84 = arith.truncf %83 : vector<1x128xf32> to vector<1x128xbf16>
    %cst_28 = arith.constant dense<0.000000e+00> : vector<1x128xf32>
    %85 = tpu.matmul %84, %7, %cst_28 {dimension_numbers = #tpu.dot_dimension_numbers<[1], [0], [0], [1], [0, 0, 1, 1], [], []>} : vector<1x128xbf16>, vector<128x128xbf16>, vector<1x128xf32> -> vector<1x128xf32>
    %86 = arith.mulf %85, %5 : vector<1x128xf32>
    %87 = arith.truncf %86 : vector<1x128xf32> to vector<1x128xbf16>
    %cst_29 = arith.constant dense<0.000000e+00> : vector<1x128xf32>
    %88 = tpu.matmul %87, %7, %cst_29 {dimension_numbers = #tpu.dot_dimension_numbers<[1], [0], [0], [1], [0, 0, 1, 1], [], []>} : vector<1x128xbf16>, vector<128x128xbf16>, vector<1x128xf32> -> vector<1x128xf32>
    %89 = arith.mulf %88, %5 : vector<1x128xf32>
    %90 = arith.truncf %89 : vector<1x128xf32> to vector<1x128xbf16>
    %cst_30 = arith.constant dense<0.000000e+00> : vector<1x128xf32>
    %91 = tpu.matmul %90, %7, %cst_30 {dimension_numbers = #tpu.dot_dimension_numbers<[1], [0], [0], [1], [0, 0, 1, 1], [], []>} : vector<1x128xbf16>, vector<128x128xbf16>, vector<1x128xf32> -> vector<1x128xf32>
    %92 = arith.mulf %91, %5 : vector<1x128xf32>
    %93 = arith.truncf %92 : vector<1x128xf32> to vector<1x128xbf16>
    %cst_31 = arith.constant dense<0.000000e+00> : vector<1x128xf32>
    %94 = tpu.matmul %93, %7, %cst_31 {dimension_numbers = #tpu.dot_dimension_numbers<[1], [0], [0], [1], [0, 0, 1, 1], [], []>} : vector<1x128xbf16>, vector<128x128xbf16>, vector<1x128xf32> -> vector<1x128xf32>
    %95 = arith.mulf %94, %5 : vector<1x128xf32>
    %96 = arith.truncf %95 : vector<1x128xf32> to vector<1x128xbf16>
    %cst_32 = arith.constant dense<0.000000e+00> : vector<1x128xf32>
    %97 = tpu.matmul %96, %7, %cst_32 {dimension_numbers = #tpu.dot_dimension_numbers<[1], [0], [0], [1], [0, 0, 1, 1], [], []>} : vector<1x128xbf16>, vector<128x128xbf16>, vector<1x128xf32> -> vector<1x128xf32>
    %98 = arith.mulf %97, %5 : vector<1x128xf32>
    %99 = arith.truncf %98 : vector<1x128xf32> to vector<1x128xbf16>
    %cst_33 = arith.constant dense<0.000000e+00> : vector<1x128xf32>
    %100 = tpu.matmul %99, %7, %cst_33 {dimension_numbers = #tpu.dot_dimension_numbers<[1], [0], [0], [1], [0, 0, 1, 1], [], []>} : vector<1x128xbf16>, vector<128x128xbf16>, vector<1x128xf32> -> vector<1x128xf32>
    %101 = arith.mulf %100, %5 : vector<1x128xf32>
    %102 = arith.truncf %101 : vector<1x128xf32> to vector<1x128xbf16>
    %cst_34 = arith.constant dense<0.000000e+00> : vector<1x128xf32>
    %103 = tpu.matmul %102, %7, %cst_34 {dimension_numbers = #tpu.dot_dimension_numbers<[1], [0], [0], [1], [0, 0, 1, 1], [], []>} : vector<1x128xbf16>, vector<128x128xbf16>, vector<1x128xf32> -> vector<1x128xf32>
    %104 = arith.mulf %103, %5 : vector<1x128xf32>
    %105 = arith.truncf %104 : vector<1x128xf32> to vector<1x128xbf16>
    %cst_35 = arith.constant dense<0.000000e+00> : vector<1x128xf32>
    %106 = tpu.matmul %105, %7, %cst_35 {dimension_numbers = #tpu.dot_dimension_numbers<[1], [0], [0], [1], [0, 0, 1, 1], [], []>} : vector<1x128xbf16>, vector<128x128xbf16>, vector<1x128xf32> -> vector<1x128xf32>
    %107 = arith.mulf %106, %5 : vector<1x128xf32>
    %108 = arith.mulf %107, %107 : vector<1x128xf32>
    %109 = vector.shape_cast %108 : vector<1x128xf32> to vector<1x1x128xf32>
    %cst_36 = arith.constant dense<0.000000e+00> : vector<1xf32>
    %110 = vector.multi_reduction <add>, %109, %cst_36 [1, 2] : vector<1x1x128xf32> to vector<1xf32>
    %111 = vector.shape_cast %110 : vector<1xf32> to vector<1x1x1xf32>
    %112 = vector.extract %111[0, 0, 0] : f32 from vector<1x1x1xf32>
    %cst_37 = arith.constant 1.000000e-30 : f32
    %113 = arith.addf %112, %cst_37 : f32
    %114 = math.rsqrt %113 : f32
    %115 = vector.broadcast %114 : f32 to vector<1x128xf32>
    %116 = arith.mulf %107, %115 : vector<1x128xf32>
    %c3_i32 = arith.constant 3 : i32
    %117 = arith.truncf %116 : vector<1x128xf32> to vector<1x128xbf16>
    %cst_38 = arith.constant dense<0.000000e+00> : vector<1x128xf32>
    %118 = tpu.matmul %117, %7, %cst_38 {dimension_numbers = #tpu.dot_dimension_numbers<[1], [0], [0], [1], [0, 0, 1, 1], [], []>} : vector<1x128xbf16>, vector<128x128xbf16>, vector<1x128xf32> -> vector<1x128xf32>
    %119 = arith.mulf %118, %5 : vector<1x128xf32>
    %120 = arith.truncf %119 : vector<1x128xf32> to vector<1x128xbf16>
    %cst_39 = arith.constant dense<0.000000e+00> : vector<1x128xf32>
    %121 = tpu.matmul %120, %7, %cst_39 {dimension_numbers = #tpu.dot_dimension_numbers<[1], [0], [0], [1], [0, 0, 1, 1], [], []>} : vector<1x128xbf16>, vector<128x128xbf16>, vector<1x128xf32> -> vector<1x128xf32>
    %122 = arith.mulf %121, %5 : vector<1x128xf32>
    %123 = arith.truncf %122 : vector<1x128xf32> to vector<1x128xbf16>
    %cst_40 = arith.constant dense<0.000000e+00> : vector<1x128xf32>
    %124 = tpu.matmul %123, %7, %cst_40 {dimension_numbers = #tpu.dot_dimension_numbers<[1], [0], [0], [1], [0, 0, 1, 1], [], []>} : vector<1x128xbf16>, vector<128x128xbf16>, vector<1x128xf32> -> vector<1x128xf32>
    %125 = arith.mulf %124, %5 : vector<1x128xf32>
    %126 = arith.truncf %125 : vector<1x128xf32> to vector<1x128xbf16>
    %cst_41 = arith.constant dense<0.000000e+00> : vector<1x128xf32>
    %127 = tpu.matmul %126, %7, %cst_41 {dimension_numbers = #tpu.dot_dimension_numbers<[1], [0], [0], [1], [0, 0, 1, 1], [], []>} : vector<1x128xbf16>, vector<128x128xbf16>, vector<1x128xf32> -> vector<1x128xf32>
    %128 = arith.mulf %127, %5 : vector<1x128xf32>
    %129 = arith.truncf %128 : vector<1x128xf32> to vector<1x128xbf16>
    %cst_42 = arith.constant dense<0.000000e+00> : vector<1x128xf32>
    %130 = tpu.matmul %129, %7, %cst_42 {dimension_numbers = #tpu.dot_dimension_numbers<[1], [0], [0], [1], [0, 0, 1, 1], [], []>} : vector<1x128xbf16>, vector<128x128xbf16>, vector<1x128xf32> -> vector<1x128xf32>
    %131 = arith.mulf %130, %5 : vector<1x128xf32>
    %132 = arith.truncf %131 : vector<1x128xf32> to vector<1x128xbf16>
    %cst_43 = arith.constant dense<0.000000e+00> : vector<1x128xf32>
    %133 = tpu.matmul %132, %7, %cst_43 {dimension_numbers = #tpu.dot_dimension_numbers<[1], [0], [0], [1], [0, 0, 1, 1], [], []>} : vector<1x128xbf16>, vector<128x128xbf16>, vector<1x128xf32> -> vector<1x128xf32>
    %134 = arith.mulf %133, %5 : vector<1x128xf32>
    %135 = arith.truncf %134 : vector<1x128xf32> to vector<1x128xbf16>
    %cst_44 = arith.constant dense<0.000000e+00> : vector<1x128xf32>
    %136 = tpu.matmul %135, %7, %cst_44 {dimension_numbers = #tpu.dot_dimension_numbers<[1], [0], [0], [1], [0, 0, 1, 1], [], []>} : vector<1x128xbf16>, vector<128x128xbf16>, vector<1x128xf32> -> vector<1x128xf32>
    %137 = arith.mulf %136, %5 : vector<1x128xf32>
    %138 = arith.truncf %137 : vector<1x128xf32> to vector<1x128xbf16>
    %cst_45 = arith.constant dense<0.000000e+00> : vector<1x128xf32>
    %139 = tpu.matmul %138, %7, %cst_45 {dimension_numbers = #tpu.dot_dimension_numbers<[1], [0], [0], [1], [0, 0, 1, 1], [], []>} : vector<1x128xbf16>, vector<128x128xbf16>, vector<1x128xf32> -> vector<1x128xf32>
    %140 = arith.mulf %139, %5 : vector<1x128xf32>
    %141 = arith.mulf %140, %140 : vector<1x128xf32>
    %142 = vector.shape_cast %141 : vector<1x128xf32> to vector<1x1x128xf32>
    %cst_46 = arith.constant dense<0.000000e+00> : vector<1xf32>
    %143 = vector.multi_reduction <add>, %142, %cst_46 [1, 2] : vector<1x1x128xf32> to vector<1xf32>
    %144 = vector.shape_cast %143 : vector<1xf32> to vector<1x1x1xf32>
    %145 = vector.extract %144[0, 0, 0] : f32 from vector<1x1x1xf32>
    %cst_47 = arith.constant 1.000000e-30 : f32
    %146 = arith.addf %145, %cst_47 : f32
    %147 = math.rsqrt %146 : f32
    %148 = vector.broadcast %147 : f32 to vector<1x128xf32>
    %149 = arith.mulf %140, %148 : vector<1x128xf32>
    %c4_i32 = arith.constant 4 : i32
    %150 = arith.truncf %149 : vector<1x128xf32> to vector<1x128xbf16>
    %cst_48 = arith.constant dense<0.000000e+00> : vector<1x128xf32>
    %151 = tpu.matmul %150, %7, %cst_48 {dimension_numbers = #tpu.dot_dimension_numbers<[1], [0], [0], [1], [0, 0, 1, 1], [], []>} : vector<1x128xbf16>, vector<128x128xbf16>, vector<1x128xf32> -> vector<1x128xf32>
    %152 = arith.mulf %151, %5 : vector<1x128xf32>
    %153 = arith.truncf %152 : vector<1x128xf32> to vector<1x128xbf16>
    %cst_49 = arith.constant dense<0.000000e+00> : vector<1x128xf32>
    %154 = tpu.matmul %153, %7, %cst_49 {dimension_numbers = #tpu.dot_dimension_numbers<[1], [0], [0], [1], [0, 0, 1, 1], [], []>} : vector<1x128xbf16>, vector<128x128xbf16>, vector<1x128xf32> -> vector<1x128xf32>
    %155 = arith.mulf %154, %5 : vector<1x128xf32>
    %156 = arith.truncf %155 : vector<1x128xf32> to vector<1x128xbf16>
    %cst_50 = arith.constant dense<0.000000e+00> : vector<1x128xf32>
    %157 = tpu.matmul %156, %7, %cst_50 {dimension_numbers = #tpu.dot_dimension_numbers<[1], [0], [0], [1], [0, 0, 1, 1], [], []>} : vector<1x128xbf16>, vector<128x128xbf16>, vector<1x128xf32> -> vector<1x128xf32>
    %158 = arith.mulf %157, %5 : vector<1x128xf32>
    %159 = arith.truncf %158 : vector<1x128xf32> to vector<1x128xbf16>
    %cst_51 = arith.constant dense<0.000000e+00> : vector<1x128xf32>
    %160 = tpu.matmul %159, %7, %cst_51 {dimension_numbers = #tpu.dot_dimension_numbers<[1], [0], [0], [1], [0, 0, 1, 1], [], []>} : vector<1x128xbf16>, vector<128x128xbf16>, vector<1x128xf32> -> vector<1x128xf32>
    %161 = arith.mulf %160, %5 : vector<1x128xf32>
    %162 = arith.truncf %161 : vector<1x128xf32> to vector<1x128xbf16>
    %cst_52 = arith.constant dense<0.000000e+00> : vector<1x128xf32>
    %163 = tpu.matmul %162, %7, %cst_52 {dimension_numbers = #tpu.dot_dimension_numbers<[1], [0], [0], [1], [0, 0, 1, 1], [], []>} : vector<1x128xbf16>, vector<128x128xbf16>, vector<1x128xf32> -> vector<1x128xf32>
    %164 = arith.mulf %163, %5 : vector<1x128xf32>
    %165 = arith.truncf %164 : vector<1x128xf32> to vector<1x128xbf16>
    %cst_53 = arith.constant dense<0.000000e+00> : vector<1x128xf32>
    %166 = tpu.matmul %165, %7, %cst_53 {dimension_numbers = #tpu.dot_dimension_numbers<[1], [0], [0], [1], [0, 0, 1, 1], [], []>} : vector<1x128xbf16>, vector<128x128xbf16>, vector<1x128xf32> -> vector<1x128xf32>
    %167 = arith.mulf %166, %5 : vector<1x128xf32>
    %168 = arith.truncf %167 : vector<1x128xf32> to vector<1x128xbf16>
    %cst_54 = arith.constant dense<0.000000e+00> : vector<1x128xf32>
    %169 = tpu.matmul %168, %7, %cst_54 {dimension_numbers = #tpu.dot_dimension_numbers<[1], [0], [0], [1], [0, 0, 1, 1], [], []>} : vector<1x128xbf16>, vector<128x128xbf16>, vector<1x128xf32> -> vector<1x128xf32>
    %170 = arith.mulf %169, %5 : vector<1x128xf32>
    %171 = arith.truncf %170 : vector<1x128xf32> to vector<1x128xbf16>
    %cst_55 = arith.constant dense<0.000000e+00> : vector<1x128xf32>
    %172 = tpu.matmul %171, %7, %cst_55 {dimension_numbers = #tpu.dot_dimension_numbers<[1], [0], [0], [1], [0, 0, 1, 1], [], []>} : vector<1x128xbf16>, vector<128x128xbf16>, vector<1x128xf32> -> vector<1x128xf32>
    %173 = arith.mulf %172, %5 : vector<1x128xf32>
    %174 = arith.mulf %173, %173 : vector<1x128xf32>
    %175 = vector.shape_cast %174 : vector<1x128xf32> to vector<1x1x128xf32>
    %cst_56 = arith.constant dense<0.000000e+00> : vector<1xf32>
    %176 = vector.multi_reduction <add>, %175, %cst_56 [1, 2] : vector<1x1x128xf32> to vector<1xf32>
    %177 = vector.shape_cast %176 : vector<1xf32> to vector<1x1x1xf32>
    %178 = vector.extract %177[0, 0, 0] : f32 from vector<1x1x1xf32>
    %cst_57 = arith.constant 1.000000e-30 : f32
    %179 = arith.addf %178, %cst_57 : f32
    %180 = math.rsqrt %179 : f32
    %181 = vector.broadcast %180 : f32 to vector<1x128xf32>
    %182 = arith.mulf %173, %181 : vector<1x128xf32>
    %c5_i32 = arith.constant 5 : i32
    %183 = arith.truncf %182 : vector<1x128xf32> to vector<1x128xbf16>
    %cst_58 = arith.constant dense<0.000000e+00> : vector<1x128xf32>
    %184 = tpu.matmul %183, %7, %cst_58 {dimension_numbers = #tpu.dot_dimension_numbers<[1], [0], [0], [1], [0, 0, 1, 1], [], []>} : vector<1x128xbf16>, vector<128x128xbf16>, vector<1x128xf32> -> vector<1x128xf32>
    %185 = arith.mulf %184, %5 : vector<1x128xf32>
    %186 = arith.truncf %185 : vector<1x128xf32> to vector<1x128xbf16>
    %cst_59 = arith.constant dense<0.000000e+00> : vector<1x128xf32>
    %187 = tpu.matmul %186, %7, %cst_59 {dimension_numbers = #tpu.dot_dimension_numbers<[1], [0], [0], [1], [0, 0, 1, 1], [], []>} : vector<1x128xbf16>, vector<128x128xbf16>, vector<1x128xf32> -> vector<1x128xf32>
    %188 = arith.mulf %187, %5 : vector<1x128xf32>
    %189 = arith.truncf %188 : vector<1x128xf32> to vector<1x128xbf16>
    %cst_60 = arith.constant dense<0.000000e+00> : vector<1x128xf32>
    %190 = tpu.matmul %189, %7, %cst_60 {dimension_numbers = #tpu.dot_dimension_numbers<[1], [0], [0], [1], [0, 0, 1, 1], [], []>} : vector<1x128xbf16>, vector<128x128xbf16>, vector<1x128xf32> -> vector<1x128xf32>
    %191 = arith.mulf %190, %5 : vector<1x128xf32>
    %192 = arith.truncf %191 : vector<1x128xf32> to vector<1x128xbf16>
    %cst_61 = arith.constant dense<0.000000e+00> : vector<1x128xf32>
    %193 = tpu.matmul %192, %7, %cst_61 {dimension_numbers = #tpu.dot_dimension_numbers<[1], [0], [0], [1], [0, 0, 1, 1], [], []>} : vector<1x128xbf16>, vector<128x128xbf16>, vector<1x128xf32> -> vector<1x128xf32>
    %194 = arith.mulf %193, %5 : vector<1x128xf32>
    %195 = arith.truncf %194 : vector<1x128xf32> to vector<1x128xbf16>
    %cst_62 = arith.constant dense<0.000000e+00> : vector<1x128xf32>
    %196 = tpu.matmul %195, %7, %cst_62 {dimension_numbers = #tpu.dot_dimension_numbers<[1], [0], [0], [1], [0, 0, 1, 1], [], []>} : vector<1x128xbf16>, vector<128x128xbf16>, vector<1x128xf32> -> vector<1x128xf32>
    %197 = arith.mulf %196, %5 : vector<1x128xf32>
    %198 = arith.truncf %197 : vector<1x128xf32> to vector<1x128xbf16>
    %cst_63 = arith.constant dense<0.000000e+00> : vector<1x128xf32>
    %199 = tpu.matmul %198, %7, %cst_63 {dimension_numbers = #tpu.dot_dimension_numbers<[1], [0], [0], [1], [0, 0, 1, 1], [], []>} : vector<1x128xbf16>, vector<128x128xbf16>, vector<1x128xf32> -> vector<1x128xf32>
    %200 = arith.mulf %199, %5 : vector<1x128xf32>
    %201 = arith.truncf %200 : vector<1x128xf32> to vector<1x128xbf16>
    %cst_64 = arith.constant dense<0.000000e+00> : vector<1x128xf32>
    %202 = tpu.matmul %201, %7, %cst_64 {dimension_numbers = #tpu.dot_dimension_numbers<[1], [0], [0], [1], [0, 0, 1, 1], [], []>} : vector<1x128xbf16>, vector<128x128xbf16>, vector<1x128xf32> -> vector<1x128xf32>
    %203 = arith.mulf %202, %5 : vector<1x128xf32>
    %204 = arith.truncf %203 : vector<1x128xf32> to vector<1x128xbf16>
    %cst_65 = arith.constant dense<0.000000e+00> : vector<1x128xf32>
    %205 = tpu.matmul %204, %7, %cst_65 {dimension_numbers = #tpu.dot_dimension_numbers<[1], [0], [0], [1], [0, 0, 1, 1], [], []>} : vector<1x128xbf16>, vector<128x128xbf16>, vector<1x128xf32> -> vector<1x128xf32>
    %206 = arith.mulf %205, %5 : vector<1x128xf32>
    %207 = arith.mulf %206, %206 : vector<1x128xf32>
    %208 = vector.shape_cast %207 : vector<1x128xf32> to vector<1x1x128xf32>
    %cst_66 = arith.constant dense<0.000000e+00> : vector<1xf32>
    %209 = vector.multi_reduction <add>, %208, %cst_66 [1, 2] : vector<1x1x128xf32> to vector<1xf32>
    %210 = vector.shape_cast %209 : vector<1xf32> to vector<1x1x1xf32>
    %211 = vector.extract %210[0, 0, 0] : f32 from vector<1x1x1xf32>
    %cst_67 = arith.constant 1.000000e-30 : f32
    %212 = arith.addf %211, %cst_67 : f32
    %213 = math.rsqrt %212 : f32
    %214 = vector.broadcast %213 : f32 to vector<1x128xf32>
    %215 = arith.mulf %206, %214 : vector<1x128xf32>
    %c6_i32 = arith.constant 6 : i32
    %216 = arith.truncf %215 : vector<1x128xf32> to vector<1x128xbf16>
    %cst_68 = arith.constant dense<0.000000e+00> : vector<1x128xf32>
    %217 = tpu.matmul %216, %7, %cst_68 {dimension_numbers = #tpu.dot_dimension_numbers<[1], [0], [0], [1], [0, 0, 1, 1], [], []>} : vector<1x128xbf16>, vector<128x128xbf16>, vector<1x128xf32> -> vector<1x128xf32>
    %218 = arith.mulf %217, %5 : vector<1x128xf32>
    %219 = arith.truncf %218 : vector<1x128xf32> to vector<1x128xbf16>
    %cst_69 = arith.constant dense<0.000000e+00> : vector<1x128xf32>
    %220 = tpu.matmul %219, %7, %cst_69 {dimension_numbers = #tpu.dot_dimension_numbers<[1], [0], [0], [1], [0, 0, 1, 1], [], []>} : vector<1x128xbf16>, vector<128x128xbf16>, vector<1x128xf32> -> vector<1x128xf32>
    %221 = arith.mulf %220, %5 : vector<1x128xf32>
    %222 = arith.truncf %221 : vector<1x128xf32> to vector<1x128xbf16>
    %cst_70 = arith.constant dense<0.000000e+00> : vector<1x128xf32>
    %223 = tpu.matmul %222, %7, %cst_70 {dimension_numbers = #tpu.dot_dimension_numbers<[1], [0], [0], [1], [0, 0, 1, 1], [], []>} : vector<1x128xbf16>, vector<128x128xbf16>, vector<1x128xf32> -> vector<1x128xf32>
    %224 = arith.mulf %223, %5 : vector<1x128xf32>
    %225 = arith.truncf %224 : vector<1x128xf32> to vector<1x128xbf16>
    %cst_71 = arith.constant dense<0.000000e+00> : vector<1x128xf32>
    %226 = tpu.matmul %225, %7, %cst_71 {dimension_numbers = #tpu.dot_dimension_numbers<[1], [0], [0], [1], [0, 0, 1, 1], [], []>} : vector<1x128xbf16>, vector<128x128xbf16>, vector<1x128xf32> -> vector<1x128xf32>
    %227 = arith.mulf %226, %5 : vector<1x128xf32>
    %228 = arith.truncf %227 : vector<1x128xf32> to vector<1x128xbf16>
    %cst_72 = arith.constant dense<0.000000e+00> : vector<1x128xf32>
    %229 = tpu.matmul %228, %7, %cst_72 {dimension_numbers = #tpu.dot_dimension_numbers<[1], [0], [0], [1], [0, 0, 1, 1], [], []>} : vector<1x128xbf16>, vector<128x128xbf16>, vector<1x128xf32> -> vector<1x128xf32>
    %230 = arith.mulf %229, %5 : vector<1x128xf32>
    %231 = arith.truncf %230 : vector<1x128xf32> to vector<1x128xbf16>
    %cst_73 = arith.constant dense<0.000000e+00> : vector<1x128xf32>
    %232 = tpu.matmul %231, %7, %cst_73 {dimension_numbers = #tpu.dot_dimension_numbers<[1], [0], [0], [1], [0, 0, 1, 1], [], []>} : vector<1x128xbf16>, vector<128x128xbf16>, vector<1x128xf32> -> vector<1x128xf32>
    %233 = arith.mulf %232, %5 : vector<1x128xf32>
    %234 = arith.truncf %233 : vector<1x128xf32> to vector<1x128xbf16>
    %cst_74 = arith.constant dense<0.000000e+00> : vector<1x128xf32>
    %235 = tpu.matmul %234, %7, %cst_74 {dimension_numbers = #tpu.dot_dimension_numbers<[1], [0], [0], [1], [0, 0, 1, 1], [], []>} : vector<1x128xbf16>, vector<128x128xbf16>, vector<1x128xf32> -> vector<1x128xf32>
    %236 = arith.mulf %235, %5 : vector<1x128xf32>
    %237 = arith.truncf %236 : vector<1x128xf32> to vector<1x128xbf16>
    %cst_75 = arith.constant dense<0.000000e+00> : vector<1x128xf32>
    %238 = tpu.matmul %237, %7, %cst_75 {dimension_numbers = #tpu.dot_dimension_numbers<[1], [0], [0], [1], [0, 0, 1, 1], [], []>} : vector<1x128xbf16>, vector<128x128xbf16>, vector<1x128xf32> -> vector<1x128xf32>
    %239 = arith.mulf %238, %5 : vector<1x128xf32>
    %240 = arith.mulf %239, %239 : vector<1x128xf32>
    %241 = vector.shape_cast %240 : vector<1x128xf32> to vector<1x1x128xf32>
    %cst_76 = arith.constant dense<0.000000e+00> : vector<1xf32>
    %242 = vector.multi_reduction <add>, %241, %cst_76 [1, 2] : vector<1x1x128xf32> to vector<1xf32>
    %243 = vector.shape_cast %242 : vector<1xf32> to vector<1x1x1xf32>
    %244 = vector.extract %243[0, 0, 0] : f32 from vector<1x1x1xf32>
    %cst_77 = arith.constant 1.000000e-30 : f32
    %245 = arith.addf %244, %cst_77 : f32
    %246 = math.rsqrt %245 : f32
    %247 = vector.broadcast %246 : f32 to vector<1x128xf32>
    %248 = arith.mulf %239, %247 : vector<1x128xf32>
    %c7_i32 = arith.constant 7 : i32
    %249 = arith.truncf %248 : vector<1x128xf32> to vector<1x128xbf16>
    %cst_78 = arith.constant dense<0.000000e+00> : vector<1x128xf32>
    %250 = tpu.matmul %249, %7, %cst_78 {dimension_numbers = #tpu.dot_dimension_numbers<[1], [0], [0], [1], [0, 0, 1, 1], [], []>} : vector<1x128xbf16>, vector<128x128xbf16>, vector<1x128xf32> -> vector<1x128xf32>
    %251 = arith.mulf %250, %5 : vector<1x128xf32>
    %252 = arith.truncf %251 : vector<1x128xf32> to vector<1x128xbf16>
    %cst_79 = arith.constant dense<0.000000e+00> : vector<1x128xf32>
    %253 = tpu.matmul %252, %7, %cst_79 {dimension_numbers = #tpu.dot_dimension_numbers<[1], [0], [0], [1], [0, 0, 1, 1], [], []>} : vector<1x128xbf16>, vector<128x128xbf16>, vector<1x128xf32> -> vector<1x128xf32>
    %254 = arith.mulf %253, %5 : vector<1x128xf32>
    %255 = arith.truncf %254 : vector<1x128xf32> to vector<1x128xbf16>
    %cst_80 = arith.constant dense<0.000000e+00> : vector<1x128xf32>
    %256 = tpu.matmul %255, %7, %cst_80 {dimension_numbers = #tpu.dot_dimension_numbers<[1], [0], [0], [1], [0, 0, 1, 1], [], []>} : vector<1x128xbf16>, vector<128x128xbf16>, vector<1x128xf32> -> vector<1x128xf32>
    %257 = arith.mulf %256, %5 : vector<1x128xf32>
    %258 = arith.truncf %257 : vector<1x128xf32> to vector<1x128xbf16>
    %cst_81 = arith.constant dense<0.000000e+00> : vector<1x128xf32>
    %259 = tpu.matmul %258, %7, %cst_81 {dimension_numbers = #tpu.dot_dimension_numbers<[1], [0], [0], [1], [0, 0, 1, 1], [], []>} : vector<1x128xbf16>, vector<128x128xbf16>, vector<1x128xf32> -> vector<1x128xf32>
    %260 = arith.mulf %259, %5 : vector<1x128xf32>
    %261 = arith.truncf %260 : vector<1x128xf32> to vector<1x128xbf16>
    %cst_82 = arith.constant dense<0.000000e+00> : vector<1x128xf32>
    %262 = tpu.matmul %261, %7, %cst_82 {dimension_numbers = #tpu.dot_dimension_numbers<[1], [0], [0], [1], [0, 0, 1, 1], [], []>} : vector<1x128xbf16>, vector<128x128xbf16>, vector<1x128xf32> -> vector<1x128xf32>
    %263 = arith.mulf %262, %5 : vector<1x128xf32>
    %264 = arith.truncf %263 : vector<1x128xf32> to vector<1x128xbf16>
    %cst_83 = arith.constant dense<0.000000e+00> : vector<1x128xf32>
    %265 = tpu.matmul %264, %7, %cst_83 {dimension_numbers = #tpu.dot_dimension_numbers<[1], [0], [0], [1], [0, 0, 1, 1], [], []>} : vector<1x128xbf16>, vector<128x128xbf16>, vector<1x128xf32> -> vector<1x128xf32>
    %266 = arith.mulf %265, %5 : vector<1x128xf32>
    %267 = arith.truncf %266 : vector<1x128xf32> to vector<1x128xbf16>
    %cst_84 = arith.constant dense<0.000000e+00> : vector<1x128xf32>
    %268 = tpu.matmul %267, %7, %cst_84 {dimension_numbers = #tpu.dot_dimension_numbers<[1], [0], [0], [1], [0, 0, 1, 1], [], []>} : vector<1x128xbf16>, vector<128x128xbf16>, vector<1x128xf32> -> vector<1x128xf32>
    %269 = arith.mulf %268, %5 : vector<1x128xf32>
    %270 = arith.truncf %269 : vector<1x128xf32> to vector<1x128xbf16>
    %cst_85 = arith.constant dense<0.000000e+00> : vector<1x128xf32>
    %271 = tpu.matmul %270, %7, %cst_85 {dimension_numbers = #tpu.dot_dimension_numbers<[1], [0], [0], [1], [0, 0, 1, 1], [], []>} : vector<1x128xbf16>, vector<128x128xbf16>, vector<1x128xf32> -> vector<1x128xf32>
    %272 = arith.mulf %271, %5 : vector<1x128xf32>
    %273 = arith.mulf %272, %272 : vector<1x128xf32>
    %274 = vector.shape_cast %273 : vector<1x128xf32> to vector<1x1x128xf32>
    %cst_86 = arith.constant dense<0.000000e+00> : vector<1xf32>
    %275 = vector.multi_reduction <add>, %274, %cst_86 [1, 2] : vector<1x1x128xf32> to vector<1xf32>
    %276 = vector.shape_cast %275 : vector<1xf32> to vector<1x1x1xf32>
    %277 = vector.extract %276[0, 0, 0] : f32 from vector<1x1x1xf32>
    %cst_87 = arith.constant 1.000000e-30 : f32
    %278 = arith.addf %277, %cst_87 : f32
    %279 = math.rsqrt %278 : f32
    %280 = vector.broadcast %279 : f32 to vector<1x128xf32>
    %281 = arith.mulf %272, %280 : vector<1x128xf32>
    %cst_88 = arith.constant dense<0.000000e+00> : vector<1x128xf32>
    %282 = tpu.matmul %281, %6, %cst_88 {dimension_numbers = #tpu.dot_dimension_numbers<[1], [0], [0], [1], [0, 0, 1, 1], [], []>} : vector<1x128xf32>, vector<128x128xf32>, vector<1x128xf32> -> vector<1x128xf32>
    %283 = arith.mulf %282, %5 : vector<1x128xf32>
    %284 = arith.mulf %281, %283 : vector<1x128xf32>
    %285 = vector.shape_cast %284 : vector<1x128xf32> to vector<1x1x128xf32>
    %cst_89 = arith.constant dense<0.000000e+00> : vector<1xf32>
    %286 = vector.multi_reduction <add>, %285, %cst_89 [1, 2] : vector<1x1x128xf32> to vector<1xf32>
    %287 = vector.shape_cast %286 : vector<1xf32> to vector<1x1x1xf32>
    %288 = vector.extract %287[0, 0, 0] : f32 from vector<1x1x1xf32>
    %289 = arith.mulf %281, %281 : vector<1x128xf32>
    %290 = vector.shape_cast %289 : vector<1x128xf32> to vector<1x1x128xf32>
    %cst_90 = arith.constant dense<0.000000e+00> : vector<1xf32>
    %291 = vector.multi_reduction <add>, %290, %cst_90 [1, 2] : vector<1x1x128xf32> to vector<1xf32>
    %292 = vector.shape_cast %291 : vector<1xf32> to vector<1x1x1xf32>
    %293 = vector.extract %292[0, 0, 0] : f32 from vector<1x1x1xf32>
    %cst_91 = arith.constant 1.000000e-30 : f32
    %294 = arith.addf %293, %cst_91 : f32
    %295 = arith.divf %288, %294 : f32
    %cst_92 = arith.constant 9.900000e-01 : f32
    %296 = arith.subf %cst_92, %295 : f32
    %c0_93 = arith.constant 0 : index
    %c0_94 = arith.constant 0 : index
    %297 = memref.load %arg3[%c0_93, %c0_94] : memref<1x1xf32, #tpu.memory_space<smem>>
    memref.store %296, %arg3[%c0_93, %c0_94] : memref<1x1xf32, #tpu.memory_space<smem>>
    return
  }
}

</mosaic_0001>

<llo_original>
// kernel: tpu_custom_call.1
$region0: #{tpu_custom_call.1}
  #allocation0 [shape = 'u32[]', space=smem, size = 0x4, offset = 0x4, fixed_abs, tag = 'smem constant byte address 0x4 - core index']
  #allocation1 [shape = 'u32[144,128]{1,0:T(1,128)}', space=vmem, size = 0x12000, scoped, tag = 'internal scratch']
  %s0 = inlined_call_operand.hbm [shape: f32[128,128], index: 0, kind: input, shape index: {}]
  %s1 = inlined_call_operand.vmem [shape: f32[1,128], index: 1, kind: input, shape index: {}]
  %s2 = inlined_call_operand.vmem [shape: f32[1,128], index: 2, kind: input, shape index: {}]
  %s3 = inlined_call_operand.hbm [shape: f32[1,1], index: 3, kind: output, shape index: {}]
  %s4 = sld [smem:[#allocation0]]
  $region26: #{tpu_custom_call.1} parent=0
    _
  %s6 = ssub.s32 1, %s4
  %s7 = scalar_select 0, %s6, %s4
  $region1: #{tpu_custom_call.1} parent=0
    #allocation2 [shape = 'u8[65536]{0}', space=vmem, size = 0x10000, scoped, tag = 'input window, operand 0, single buffered']
    #allocation3 [shape = 's32[1]{0}', space=sflag, size = 0x4, scoped, tag = 'scoped memory for tpu_custom_call.1']
    #allocation4 [shape = 's32[1]{0}', space=sflag, size = 0x4, scoped, tag = 'scoped memory for tpu_custom_call.1']
    #allocation5 [shape = 'u8[512]{0}', space=smem, size = 0x200, scoped, tag = 'output window, operand 0, single buffered']
    %8 = vsyncpa [#allocation3], 0
    %9 = vsyncpa [#allocation4], 0
    // Predicated region
    $region2: #{tpu_custom_call.1} parent=1 // pred_check
      _
    $region3: #{tpu_custom_call.1} parent=1 // pred_check_branch
      %11 = sbr.rel (0) target = $region5
    $region4: #{tpu_custom_call.1} parent=1 // pred_region
      %s13 = ssub.s32 2048, 2048
      %14 = vsyncadd [#allocation3], %s13
      %s15 = sshll.u32 [#allocation2], 4
      %s16 = int_to_ptr.vmem [resolvable:$true] %s15
      %21 = dma.hbm_to_vmem [thread:$0]  %s0, 2048, %s16, [#allocation3], 128, 128, 8
    $region5: #{tpu_custom_call.1} parent=1 // pred_fallthru
      _
    // Predicated region
    $region6: #{tpu_custom_call.1} parent=1 // pred_check
      _
    $region7: #{tpu_custom_call.1} parent=1 // pred_check_branch
      %23 = sbr.rel (0) target = $region9
    $region8: #{tpu_custom_call.1} parent=1 // pred_region
      _
    $region9: #{tpu_custom_call.1} parent=1 // pred_fallthru
      _
    // Predicated region
    $region10: #{tpu_custom_call.1} parent=1 // pred_check
      _
    $region11: #{tpu_custom_call.1} parent=1 // pred_check_branch
      %25 = sbr.rel (0) target = $region13
    $region12: #{tpu_custom_call.1} parent=1 // pred_region
      _
    $region13: #{tpu_custom_call.1} parent=1 // pred_fallthru
      _
    // Predicated region
    $region14: #{tpu_custom_call.1} parent=1 // pred_check
      _
    $region15: #{tpu_custom_call.1} parent=1 // pred_check_branch
      %27 = sbr.rel (0) target = $region17
    $region16: #{tpu_custom_call.1} parent=1 // pred_region
      %28 = dma.done [#allocation3], 2048
    $region17: #{tpu_custom_call.1} parent=1 // pred_fallthru
      _
    %v30 = vld [vmem:[%s1] sm:$0x1]
    %v31 = vmax.f32 %v30, 0.0
    %v32 = vrsqrt.pop %v31
    %v33 = vmul.f32 %v31, %v32
    %vm34 = vcmp.eq.f32.partialorder %v31, inf
    %v35 = vsel %vm34, %v31, %v33
    %vm36 = vcmp.eq.f32.partialorder %v31, 0.0
    %v37 = vand.u32 %v31, 2147483648
    %v38 = vsel %vm36, %v37, %v35
    %v39 = vmul.f32 %v38, 2.0
    %v40 = vld [vmem:[#allocation2] sm:$0xff]
    %v41 = vld [vmem:[#allocation2 + $0x8] sm:$0xff]
    %v42 = vld [vmem:[#allocation2 + $0x10] sm:$0xff]
    %v43 = vld [vmem:[#allocation2 + $0x18] sm:$0xff]
    %v44 = vld [vmem:[#allocation2 + $0x20] sm:$0xff]
    %v45 = vld [vmem:[#allocation2 + $0x28] sm:$0xff]
    %v46 = vld [vmem:[#allocation2 + $0x30] sm:$0xff]
    %v47 = vld [vmem:[#allocation2 + $0x38] sm:$0xff]
    %v48 = vld [vmem:[#allocation2 + $0x40] sm:$0xff]
    %v49 = vld [vmem:[#allocation2 + $0x48] sm:$0xff]
    %v50 = vld [vmem:[#allocation2 + $0x50] sm:$0xff]
    %v51 = vld [vmem:[#allocation2 + $0x58] sm:$0xff]
    %v52 = vld [vmem:[#allocation2 + $0x60] sm:$0xff]
    %v53 = vld [vmem:[#allocation2 + $0x68] sm:$0xff]
    %v54 = vld [vmem:[#allocation2 + $0x70] sm:$0xff]
    %v55 = vld [vmem:[#allocation2 + $0x78] sm:$0xff]
    %v56 = vpack.c.bf16 %v41, %v40
    %v57 = vpack.c.bf16 %v43, %v42
    %v58 = vpack.c.bf16 %v45, %v44
    %v59 = vpack.c.bf16 %v47, %v46
    %v60 = vpack.c.bf16 %v49, %v48
    %v61 = vpack.c.bf16 %v51, %v50
    %v62 = vpack.c.bf16 %v53, %v52
    %v63 = vpack.c.bf16 %v55, %v54
    %v64 = vld [vmem:[%s2] sm:$0x1]
    %v65 = vmul.f32 %v64, %v64
    %vm66 = vcmask 1040384
    %v67 = vsel %vm66, %v65, 0.0
    %68 = vadd.xlane.f32.xlu0 %v67
    %v69 = vpop.xlane.xlu0 %68
    %v70 = vrot.slane %v69, 4
    %v71 = vadd.f32 %v69, %v70
    %v72 = vrot.slane %v71, 2
    %v73 = vadd.f32 %v71, %v72
    %v74 = vrot.slane %v73, 1
    %v75 = vadd.f32 %v73, %v74
    %s76 = vtos %v75
    %s77 = sadd.f32 %s76, 1e-30
    %v78 = vstv %s77
    %v79 = vrsqrt.pop %v78
    %s80 = vtos %v79
    %v81 = vstv %s80
    %v82 = vmul.f32 %v64, %v81
    %v83 = vpack.c.bf16 %v82, %v82
    %84 = vmatprep.subr.bf16.mxu0 0
    %85 = vmatpush1.bf16.msra.mxu0 %v56
    %86 = vmatprep.subr.bf16.mxu0 0
    %87 = vmatpush1.bf16.msra.mxu0 %v57
    %88 = vmatprep.subr.bf16.mxu0 0
    %89 = vmatpush1.bf16.msra.mxu0 %v58
    %90 = vmatprep.subr.bf16.mxu0 0
    %91 = vmatpush1.bf16.msra.mxu0 %v59
    %92 = vmatprep.subr.bf16.mxu0 0
    %93 = vmatpush1.bf16.msra.mxu0 %v60
    %94 = vmatprep.subr.bf16.mxu0 0
    %95 = vmatpush1.bf16.msra.mxu0 %v61
    %96 = vmatprep.subr.bf16.mxu0 0
    %97 = vmatpush1.bf16.msra.mxu0 %v62
    %98 = vmatprep.subr.bf16.mxu0 0
    %99 = vmatpush1.bf16.msra.mxu0 %v63
    %100 = vmatprep.subr.bf16.mxu0 0
    %101 = vmatpush1.bf16.msra.mxu0 0
    %102 = vmatprep.subr.bf16.mxu0 0
    %103 = vmatpush1.bf16.msra.mxu0 0
    %104 = vmatprep.subr.bf16.mxu0 0
    %105 = vmatpush1.bf16.msra.mxu0 0
    %106 = vmatprep.subr.bf16.mxu0 0
    %107 = vmatpush1.bf16.msra.mxu0 0
    %108 = vmatprep.subr.bf16.mxu0 0
    %109 = vmatpush1.bf16.msra.mxu0 0
    %110 = vmatprep.subr.bf16.mxu0 0
    %111 = vmatpush1.bf16.msra.mxu0 0
    %112 = vmatprep.subr.bf16.mxu0 0
    %113 = vmatpush1.bf16.msra.mxu0 0
    %114 = vmatprep.subr.bf16.mxu0 0
    %115 = vmatpush1.bf16.msra.mxu0 0
    %116 = vmatprep.mubr.bf16.mxu0 0
    %117 = vmatmul.mubr.bf16.gmra.mrb[0].mxu0 %v83
    %v118 = vpop.f32.mrb[0].mxu0
    %v119 = vadd.f32 0.0, %v118
    %v120 = vpop.f32.mrb[0].mxu0
    %v121 = vpop.f32.mrb[0].mxu0
    %v122 = vpop.f32.mrb[0].mxu0
    %123 = vdwg.mxu0
    %v124 = vmul.f32 %v119, %v39
    %v125 = vpack.c.bf16 %v124, %v124
    %126 = vmatprep.subr.bf16.mxu0 0
    %127 = vmatpush1.bf16.msra.mxu0 %v56
    %128 = vmatprep.subr.bf16.mxu0 0
    %129 = vmatpush1.bf16.msra.mxu0 %v57
    %130 = vmatprep.subr.bf16.mxu0 0
    %131 = vmatpush1.bf16.msra.mxu0 %v58
    %132 = vmatprep.subr.bf16.mxu0 0
    %133 = vmatpush1.bf16.msra.mxu0 %v59
    %134 = vmatprep.subr.bf16.mxu0 0
    %135 = vmatpush1.bf16.msra.mxu0 %v60
    %136 = vmatprep.subr.bf16.mxu0 0
    %137 = vmatpush1.bf16.msra.mxu0 %v61
    %138 = vmatprep.subr.bf16.mxu0 0
    %139 = vmatpush1.bf16.msra.mxu0 %v62
    %140 = vmatprep.subr.bf16.mxu0 0
    %141 = vmatpush1.bf16.msra.mxu0 %v63
    %142 = vmatprep.subr.bf16.mxu0 0
    %143 = vmatpush1.bf16.msra.mxu0 0
    %144 = vmatprep.subr.bf16.mxu0 0
    %145 = vmatpush1.bf16.msra.mxu0 0
    %146 = vmatprep.subr.bf16.mxu0 0
    %147 = vmatpush1.bf16.msra.mxu0 0
    %148 = vmatprep.subr.bf16.mxu0 0
    %149 = vmatpush1.bf16.msra.mxu0 0
    %150 = vmatprep.subr.bf16.mxu0 0
    %151 = vmatpush1.bf16.msra.mxu0 0
    %152 = vmatprep.subr.bf16.mxu0 0
    %153 = vmatpush1.bf16.msra.mxu0 0
    %154 = vmatprep.subr.bf16.mxu0 0
    %155 = vmatpush1.bf16.msra.mxu0 0
    %156 = vmatprep.subr.bf16.mxu0 0
    %157 = vmatpush1.bf16.msra.mxu0 0
    %158 = vmatprep.mubr.bf16.mxu0 0
    %159 = vmatmul.mubr.bf16.gmra.mrb[0].mxu0 %v125
    %v160 = vpop.f32.mrb[0].mxu0
    %v161 = vadd.f32 0.0, %v160
    %v162 = vpop.f32.mrb[0].mxu0
    %v163 = vpop.f32.mrb[0].mxu0
    %v164 = vpop.f32.mrb[0].mxu0
    %165 = vdwg.mxu0
    %v166 = vmul.f32 %v161, %v39
    %v167 = vpack.c.bf16 %v166, %v166
    %168 = vmatprep.subr.bf16.mxu0 0
    %169 = vmatpush1.bf16.msra.mxu0 %v56
    %170 = vmatprep.subr.bf16.mxu0 0
    %171 = vmatpush1.bf16.msra.mxu0 %v57
    %172 = vmatprep.subr.bf16.mxu0 0
    %173 = vmatpush1.bf16.msra.mxu0 %v58
    %174 = vmatprep.subr.bf16.mxu0 0
    %175 = vmatpush1.bf16.msra.mxu0 %v59
    %176 = vmatprep.subr.bf16.mxu0 0
    %177 = vmatpush1.bf16.msra.mxu0 %v60
    %178 = vmatprep.subr.bf16.mxu0 0
    %179 = vmatpush1.bf16.msra.mxu0 %v61
    %180 = vmatprep.subr.bf16.mxu0 0
    %181 = vmatpush1.bf16.msra.mxu0 %v62
    %182 = vmatprep.subr.bf16.mxu0 0
    %183 = vmatpush1.bf16.msra.mxu0 %v63
    %184 = vmatprep.subr.bf16.mxu0 0
    %185 = vmatpush1.bf16.msra.mxu0 0
    %186 = vmatprep.subr.bf16.mxu0 0
    %187 = vmatpush1.bf16.msra.mxu0 0
    %188 = vmatprep.subr.bf16.mxu0 0
    %189 = vmatpush1.bf16.msra.mxu0 0
    %190 = vmatprep.subr.bf16.mxu0 0
    %191 = vmatpush1.bf16.msra.mxu0 0
    %192 = vmatprep.subr.bf16.mxu0 0
    %193 = vmatpush1.bf16.msra.mxu0 0
    %194 = vmatprep.subr.bf16.mxu0 0
    %195 = vmatpush1.bf16.msra.mxu0 0
    %196 = vmatprep.subr.bf16.mxu0 0
    %197 = vmatpush1.bf16.msra.mxu0 0
    %198 = vmatprep.subr.bf16.mxu0 0
    %199 = vmatpush1.bf16.msra.mxu0 0
    %200 = vmatprep.mubr.bf16.mxu0 0
    %201 = vmatmul.mubr.bf16.gmra.mrb[0].mxu0 %v167
    %v202 = vpop.f32.mrb[0].mxu0
    %v203 = vadd.f32 0.0, %v202
    %v204 = vpop.f32.mrb[0].mxu0
    %v205 = vpop.f32.mrb[0].mxu0
    %v206 = vpop.f32.mrb[0].mxu0
    %207 = vdwg.mxu0
    %v208 = vmul.f32 %v203, %v39
    %v209 = vpack.c.bf16 %v208, %v208
    %210 = vmatprep.subr.bf16.mxu0 0
    %211 = vmatpush1.bf16.msra.mxu0 %v56
    %212 = vmatprep.subr.bf16.mxu0 0
    %213 = vmatpush1.bf16.msra.mxu0 %v57
    %214 = vmatprep.subr.bf16.mxu0 0
    %215 = vmatpush1.bf16.msra.mxu0 %v58
    %216 = vmatprep.subr.bf16.mxu0 0
    %217 = vmatpush1.bf16.msra.mxu0 %v59
    %218 = vmatprep.subr.bf16.mxu0 0
    %219 = vmatpush1.bf16.msra.mxu0 %v60
    %220 = vmatprep.subr.bf16.mxu0 0
    %221 = vmatpush1.bf16.msra.mxu0 %v61
    %222 = vmatprep.subr.bf16.mxu0 0
    %223 = vmatpush1.bf16.msra.mxu0 %v62
    %224 = vmatprep.subr.bf16.mxu0 0
    %225 = vmatpush1.bf16.msra.mxu0 %v63
    %226 = vmatprep.subr.bf16.mxu0 0
    %227 = vmatpush1.bf16.msra.mxu0 0
    %228 = vmatprep.subr.bf16.mxu0 0
    %229 = vmatpush1.bf16.msra.mxu0 0
    %230 = vmatprep.subr.bf16.mxu0 0
    %231 = vmatpush1.bf16.msra.mxu0 0
    %232 = vmatprep.subr.bf16.mxu0 0
    %233 = vmatpush1.bf16.msra.mxu0 0
    %234 = vmatprep.subr.bf16.mxu0 0
    %235 = vmatpush1.bf16.msra.mxu0 0
    %236 = vmatprep.subr.bf16.mxu0 0
    %237 = vmatpush1.bf16.msra.mxu0 0
    %238 = vmatprep.subr.bf16.mxu0 0
    %239 = vmatpush1.bf16.msra.mxu0 0
    %240 = vmatprep.subr.bf16.mxu0 0
    %241 = vmatpush1.bf16.msra.mxu0 0
    %242 = vmatprep.mubr.bf16.mxu0 0
    %243 = vmatmul.mubr.bf16.gmra.mrb[0].mxu0 %v209
    %v244 = vpop.f32.mrb[0].mxu0
    %v245 = vadd.f32 0.0, %v244
    %v246 = vpop.f32.mrb[0].mxu0
    %v247 = vpop.f32.mrb[0].mxu0
    %v248 = vpop.f32.mrb[0].mxu0
    %249 = vdwg.mxu0
    %v250 = vmul.f32 %v245, %v39
    %v251 = vpack.c.bf16 %v250, %v250
    %252 = vmatprep.subr.bf16.mxu0 0
    %253 = vmatpush1.bf16.msra.mxu0 %v56
    %254 = vmatprep.subr.bf16.mxu0 0
    %255 = vmatpush1.bf16.msra.mxu0 %v57
    %256 = vmatprep.subr.bf16.mxu0 0
    %257 = vmatpush1.bf16.msra.mxu0 %v58
    %258 = vmatprep.subr.bf16.mxu0 0
    %259 = vmatpush1.bf16.msra.mxu0 %v59
    %260 = vmatprep.subr.bf16.mxu0 0
    %261 = vmatpush1.bf16.msra.mxu0 %v60
    %262 = vmatprep.subr.bf16.mxu0 0
    %263 = vmatpush1.bf16.msra.mxu0 %v61
    %264 = vmatprep.subr.bf16.mxu0 0
    %265 = vmatpush1.bf16.msra.mxu0 %v62
    %266 = vmatprep.subr.bf16.mxu0 0
    %267 = vmatpush1.bf16.msra.mxu0 %v63
    %268 = vmatprep.subr.bf16.mxu0 0
    %269 = vmatpush1.bf16.msra.mxu0 0
    %270 = vmatprep.subr.bf16.mxu0 0
    %271 = vmatpush1.bf16.msra.mxu0 0
    %272 = vmatprep.subr.bf16.mxu0 0
    %273 = vmatpush1.bf16.msra.mxu0 0
    %274 = vmatprep.subr.bf16.mxu0 0
    %275 = vmatpush1.bf16.msra.mxu0 0
    %276 = vmatprep.subr.bf16.mxu0 0
    %277 = vmatpush1.bf16.msra.mxu0 0
    %278 = vmatprep.subr.bf16.mxu0 0
    %279 = vmatpush1.bf16.msra.mxu0 0
    %280 = vmatprep.subr.bf16.mxu0 0
    %281 = vmatpush1.bf16.msra.mxu0 0
    %282 = vmatprep.subr.bf16.mxu0 0
    %283 = vmatpush1.bf16.msra.mxu0 0
    %284 = vmatprep.mubr.bf16.mxu0 0
    %285 = vmatmul.mubr.bf16.gmra.mrb[0].mxu0 %v251
    %v286 = vpop.f32.mrb[0].mxu0
    %v287 = vadd.f32 0.0, %v286
    %v288 = vpop.f32.mrb[0].mxu0
    %v289 = vpop.f32.mrb[0].mxu0
    %v290 = vpop.f32.mrb[0].mxu0
    %291 = vdwg.mxu0
    %v292 = vmul.f32 %v287, %v39
    %v293 = vpack.c.bf16 %v292, %v292
    %294 = vmatprep.subr.bf16.mxu0 0
    %295 = vmatpush1.bf16.msra.mxu0 %v56
    %296 = vmatprep.subr.bf16.mxu0 0
    %297 = vmatpush1.bf16.msra.mxu0 %v57
    %298 = vmatprep.subr.bf16.mxu0 0
    %299 = vmatpush1.bf16.msra.mxu0 %v58
    %300 = vmatprep.subr.bf16.mxu0 0
    %301 = vmatpush1.bf16.msra.mxu0 %v59
    %302 = vmatprep.subr.bf16.mxu0 0
    %303 = vmatpush1.bf16.msra.mxu0 %v60
    %304 = vmatprep.subr.bf16.mxu0 0
    %305 = vmatpush1.bf16.msra.mxu0 %v61
    %306 = vmatprep.subr.bf16.mxu0 0
    %307 = vmatpush1.bf16.msra.mxu0 %v62
    %308 = vmatprep.subr.bf16.mxu0 0
    %309 = vmatpush1.bf16.msra.mxu0 %v63
    %310 = vmatprep.subr.bf16.mxu0 0
    %311 = vmatpush1.bf16.msra.mxu0 0
    %312 = vmatprep.subr.bf16.mxu0 0
    %313 = vmatpush1.bf16.msra.mxu0 0
    %314 = vmatprep.subr.bf16.mxu0 0
    %315 = vmatpush1.bf16.msra.mxu0 0
    %316 = vmatprep.subr.bf16.mxu0 0
    %317 = vmatpush1.bf16.msra.mxu0 0
    %318 = vmatprep.subr.bf16.mxu0 0
    %319 = vmatpush1.bf16.msra.mxu0 0
    %320 = vmatprep.subr.bf16.mxu0 0
    %321 = vmatpush1.bf16.msra.mxu0 0
    %322 = vmatprep.subr.bf16.mxu0 0
    %323 = vmatpush1.bf16.msra.mxu0 0
    %324 = vmatprep.subr.bf16.mxu0 0
    %325 = vmatpush1.bf16.msra.mxu0 0
    %326 = vmatprep.mubr.bf16.mxu0 0
    %327 = vmatmul.mubr.bf16.gmra.mrb[0].mxu0 %v293
    %v328 = vpop.f32.mrb[0].mxu0
    %v329 = vadd.f32 0.0, %v328
    %v330 = vpop.f32.mrb[0].mxu0
    %v331 = vpop.f32.mrb[0].mxu0
    %v332 = vpop.f32.mrb[0].mxu0
    %333 = vdwg.mxu0
    %v334 = vmul.f32 %v329, %v39
    %v335 = vpack.c.bf16 %v334, %v334
    %336 = vmatprep.subr.bf16.mxu0 0
    %337 = vmatpush1.bf16.msra.mxu0 %v56
    %338 = vmatprep.subr.bf16.mxu0 0
    %339 = vmatpush1.bf16.msra.mxu0 %v57
    %340 = vmatprep.subr.bf16.mxu0 0
    %341 = vmatpush1.bf16.msra.mxu0 %v58
    %342 = vmatprep.subr.bf16.mxu0 0
    %343 = vmatpush1.bf16.msra.mxu0 %v59
    %344 = vmatprep.subr.bf16.mxu0 0
    %345 = vmatpush1.bf16.msra.mxu0 %v60
    %346 = vmatprep.subr.bf16.mxu0 0
    %347 = vmatpush1.bf16.msra.mxu0 %v61
    %348 = vmatprep.subr.bf16.mxu0 0
    %349 = vmatpush1.bf16.msra.mxu0 %v62
    %350 = vmatprep.subr.bf16.mxu0 0
    %351 = vmatpush1.bf16.msra.mxu0 %v63
    %352 = vmatprep.subr.bf16.mxu0 0
    %353 = vmatpush1.bf16.msra.mxu0 0
    %354 = vmatprep.subr.bf16.mxu0 0
    %355 = vmatpush1.bf16.msra.mxu0 0
    %356 = vmatprep.subr.bf16.mxu0 0
    %357 = vmatpush1.bf16.msra.mxu0 0
    %358 = vmatprep.subr.bf16.mxu0 0
    %359 = vmatpush1.bf16.msra.mxu0 0
    %360 = vmatprep.subr.bf16.mxu0 0
    %361 = vmatpush1.bf16.msra.mxu0 0
    %362 = vmatprep.subr.bf16.mxu0 0
    %363 = vmatpush1.bf16.msra.mxu0 0
    %364 = vmatprep.subr.bf16.mxu0 0
    %365 = vmatpush1.bf16.msra.mxu0 0
    %366 = vmatprep.subr.bf16.mxu0 0
    %367 = vmatpush1.bf16.msra.mxu0 0
    %368 = vmatprep.mubr.bf16.mxu0 0
    %369 = vmatmul.mubr.bf16.gmra.mrb[0].mxu0 %v335
    %v370 = vpop.f32.mrb[0].mxu0
    %v371 = vadd.f32 0.0, %v370
    %v372 = vpop.f32.mrb[0].mxu0
    %v373 = vpop.f32.mrb[0].mxu0
    %v374 = vpop.f32.mrb[0].mxu0
    %375 = vdwg.mxu0
    %v376 = vmul.f32 %v371, %v39
    %v377 = vpack.c.bf16 %v376, %v376
    %378 = vmatprep.subr.bf16.mxu0 0
    %379 = vmatpush1.bf16.msra.mxu0 %v56
    %380 = vmatprep.subr.bf16.mxu0 0
    %381 = vmatpush1.bf16.msra.mxu0 %v57
    %382 = vmatprep.subr.bf16.mxu0 0
    %383 = vmatpush1.bf16.msra.mxu0 %v58
    %384 = vmatprep.subr.bf16.mxu0 0
    %385 = vmatpush1.bf16.msra.mxu0 %v59
    %386 = vmatprep.subr.bf16.mxu0 0
    %387 = vmatpush1.bf16.msra.mxu0 %v60
    %388 = vmatprep.subr.bf16.mxu0 0
    %389 = vmatpush1.bf16.msra.mxu0 %v61
    %390 = vmatprep.subr.bf16.mxu0 0
    %391 = vmatpush1.bf16.msra.mxu0 %v62
    %392 = vmatprep.subr.bf16.mxu0 0
    %393 = vmatpush1.bf16.msra.mxu0 %v63
    %394 = vmatprep.subr.bf16.mxu0 0
    %395 = vmatpush1.bf16.msra.mxu0 0
    %396 = vmatprep.subr.bf16.mxu0 0
    %397 = vmatpush1.bf16.msra.mxu0 0
    %398 = vmatprep.subr.bf16.mxu0 0
    %399 = vmatpush1.bf16.msra.mxu0 0
    %400 = vmatprep.subr.bf16.mxu0 0
    %401 = vmatpush1.bf16.msra.mxu0 0
    %402 = vmatprep.subr.bf16.mxu0 0
    %403 = vmatpush1.bf16.msra.mxu0 0
    %404 = vmatprep.subr.bf16.mxu0 0
    %405 = vmatpush1.bf16.msra.mxu0 0
    %406 = vmatprep.subr.bf16.mxu0 0
    %407 = vmatpush1.bf16.msra.mxu0 0
    %408 = vmatprep.subr.bf16.mxu0 0
    %409 = vmatpush1.bf16.msra.mxu0 0
    %410 = vmatprep.mubr.bf16.mxu0 0
    %411 = vmatmul.mubr.bf16.gmra.mrb[0].mxu0 %v377
    %v412 = vpop.f32.mrb[0].mxu0
    %v413 = vadd.f32 0.0, %v412
    %v414 = vpop.f32.mrb[0].mxu0
    %v415 = vpop.f32.mrb[0].mxu0
    %v416 = vpop.f32.mrb[0].mxu0
    %417 = vdwg.mxu0
    %v418 = vmul.f32 %v413, %v39
    %v419 = vmul.f32 %v418, %v418
    %v420 = vsel %vm66, %v419, 0.0
    %421 = vadd.xlane.f32.xlu0 %v420
    %v422 = vpop.xlane.xlu0 %421
    %v423 = vrot.slane %v422, 4
    %v424 = vadd.f32 %v422, %v423
    %v425 = vrot.slane %v424, 2
    %v426 = vadd.f32 %v424, %v425
    %v427 = vrot.slane %v426, 1
    %v428 = vadd.f32 %v426, %v427
    %s429 = vtos %v428
    %s430 = sadd.f32 %s429, 1e-30
    %v431 = vstv %s430
    %v432 = vrsqrt.pop %v431
    %s433 = vtos %v432
    %v434 = vstv %s433
    %v435 = vmul.f32 %v418, %v434
    %v436 = vpack.c.bf16 %v435, %v435
    %437 = vmatprep.subr.bf16.mxu0 0
    %438 = vmatpush1.bf16.msra.mxu0 %v56
    %439 = vmatprep.subr.bf16.mxu0 0
    %440 = vmatpush1.bf16.msra.mxu0 %v57
    %441 = vmatprep.subr.bf16.mxu0 0
    %442 = vmatpush1.bf16.msra.mxu0 %v58
    %443 = vmatprep.subr.bf16.mxu0 0
    %444 = vmatpush1.bf16.msra.mxu0 %v59
    %445 = vmatprep.subr.bf16.mxu0 0
    %446 = vmatpush1.bf16.msra.mxu0 %v60
    %447 = vmatprep.subr.bf16.mxu0 0
    %448 = vmatpush1.bf16.msra.mxu0 %v61
    %449 = vmatprep.subr.bf16.mxu0 0
    %450 = vmatpush1.bf16.msra.mxu0 %v62
    %451 = vmatprep.subr.bf16.mxu0 0
    %452 = vmatpush1.bf16.msra.mxu0 %v63
    %453 = vmatprep.subr.bf16.mxu0 0
    %454 = vmatpush1.bf16.msra.mxu0 0
    %455 = vmatprep.subr.bf16.mxu0 0
    %456 = vmatpush1.bf16.msra.mxu0 0
    %457 = vmatprep.subr.bf16.mxu0 0
    %458 = vmatpush1.bf16.msra.mxu0 0
    %459 = vmatprep.subr.bf16.mxu0 0
    %460 = vmatpush1.bf16.msra.mxu0 0
    %461 = vmatprep.subr.bf16.mxu0 0
    %462 = vmatpush1.bf16.msra.mxu0 0
    %463 = vmatprep.subr.bf16.mxu0 0
    %464 = vmatpush1.bf16.msra.mxu0 0
    %465 = vmatprep.subr.bf16.mxu0 0
    %466 = vmatpush1.bf16.msra.mxu0 0
    %467 = vmatprep.subr.bf16.mxu0 0
    %468 = vmatpush1.bf16.msra.mxu0 0
    %469 = vmatprep.mubr.bf16.mxu0 0
    %470 = vmatmul.mubr.bf16.gmra.mrb[0].mxu0 %v436
    %v471 = vpop.f32.mrb[0].mxu0
    %v472 = vadd.f32 0.0, %v471
    %v473 = vpop.f32.mrb[0].mxu0
    %v474 = vpop.f32.mrb[0].mxu0
    %v475 = vpop.f32.mrb[0].mxu0
    %476 = vdwg.mxu0
    %v477 = vmul.f32 %v472, %v39
    %v478 = vpack.c.bf16 %v477, %v477
    %479 = vmatprep.subr.bf16.mxu0 0
    %480 = vmatpush1.bf16.msra.mxu0 %v56
    %481 = vmatprep.subr.bf16.mxu0 0
    %482 = vmatpush1.bf16.msra.mxu0 %v57
    %483 = vmatprep.subr.bf16.mxu0 0
    %484 = vmatpush1.bf16.msra.mxu0 %v58
    %485 = vmatprep.subr.bf16.mxu0 0
    %486 = vmatpush1.bf16.msra.mxu0 %v59
    %487 = vmatprep.subr.bf16.mxu0 0
    %488 = vmatpush1.bf16.msra.mxu0 %v60
    %489 = vmatprep.subr.bf16.mxu0 0
    %490 = vmatpush1.bf16.msra.mxu0 %v61
    %491 = vmatprep.subr.bf16.mxu0 0
    %492 = vmatpush1.bf16.msra.mxu0 %v62
    %493 = vmatprep.subr.bf16.mxu0 0
    %494 = vmatpush1.bf16.msra.mxu0 %v63
    %495 = vmatprep.subr.bf16.mxu0 0
    %496 = vmatpush1.bf16.msra.mxu0 0
    %497 = vmatprep.subr.bf16.mxu0 0
    %498 = vmatpush1.bf16.msra.mxu0 0
    %499 = vmatprep.subr.bf16.mxu0 0
    %500 = vmatpush1.bf16.msra.mxu0 0
    %501 = vmatprep.subr.bf16.mxu0 0
    %502 = vmatpush1.bf16.msra.mxu0 0
    %503 = vmatprep.subr.bf16.mxu0 0
    %504 = vmatpush1.bf16.msra.mxu0 0
    %505 = vmatprep.subr.bf16.mxu0 0
    %506 = vmatpush1.bf16.msra.mxu0 0
    %507 = vmatprep.subr.bf16.mxu0 0
    %508 = vmatpush1.bf16.msra.mxu0 0
    %509 = vmatprep.subr.bf16.mxu0 0
    %510 = vmatpush1.bf16.msra.mxu0 0
    %511 = vmatprep.mubr.bf16.mxu0 0
    %512 = vmatmul.mubr.bf16.gmra.mrb[0].mxu0 %v478
    %v513 = vpop.f32.mrb[0].mxu0
    %v514 = vadd.f32 0.0, %v513
    %v515 = vpop.f32.mrb[0].mxu0
    %v516 = vpop.f32.mrb[0].mxu0
    %v517 = vpop.f32.mrb[0].mxu0
    %518 = vdwg.mxu0
    %v519 = vmul.f32 %v514, %v39
    %v520 = vpack.c.bf16 %v519, %v519
    %521 = vmatprep.subr.bf16.mxu0 0
    %522 = vmatpush1.bf16.msra.mxu0 %v56
    %523 = vmatprep.subr.bf16.mxu0 0
    %524 = vmatpush1.bf16.msra.mxu0 %v57
    %525 = vmatprep.subr.bf16.mxu0 0
    %526 = vmatpush1.bf16.msra.mxu0 %v58
    %527 = vmatprep.subr.bf16.mxu0 0
    %528 = vmatpush1.bf16.msra.mxu0 %v59
    %529 = vmatprep.subr.bf16.mxu0 0
    %530 = vmatpush1.bf16.msra.mxu0 %v60
    %531 = vmatprep.subr.bf16.mxu0 0
    %532 = vmatpush1.bf16.msra.mxu0 %v61
    %533 = vmatprep.subr.bf16.mxu0 0
    %534 = vmatpush1.bf16.msra.mxu0 %v62
    %535 = vmatprep.subr.bf16.mxu0 0
    %536 = vmatpush1.bf16.msra.mxu0 %v63
    %537 = vmatprep.subr.bf16.mxu0 0
    %538 = vmatpush1.bf16.msra.mxu0 0
    %539 = vmatprep.subr.bf16.mxu0 0
    %540 = vmatpush1.bf16.msra.mxu0 0
    %541 = vmatprep.subr.bf16.mxu0 0
    %542 = vmatpush1.bf16.msra.mxu0 0
    %543 = vmatprep.subr.bf16.mxu0 0
    %544 = vmatpush1.bf16.msra.mxu0 0
    %545 = vmatprep.subr.bf16.mxu0 0
    %546 = vmatpush1.bf16.msra.mxu0 0
    %547 = vmatprep.subr.bf16.mxu0 0
    %548 = vmatpush1.bf16.msra.mxu0 0
    %549 = vmatprep.subr.bf16.mxu0 0
    %550 = vmatpush1.bf16.msra.mxu0 0
    %551 = vmatprep.subr.bf16.mxu0 0
    %552 = vmatpush1.bf16.msra.mxu0 0
    %553 = vmatprep.mubr.bf16.mxu0 0
    %554 = vmatmul.mubr.bf16.gmra.mrb[0].mxu0 %v520
    %v555 = vpop.f32.mrb[0].mxu0
    %v556 = vadd.f32 0.0, %v555
    %v557 = vpop.f32.mrb[0].mxu0
    %v558 = vpop.f32.mrb[0].mxu0
    %v559 = vpop.f32.mrb[0].mxu0
    %560 = vdwg.mxu0
    %v561 = vmul.f32 %v556, %v39
    %v562 = vpack.c.bf16 %v561, %v561
    %563 = vmatprep.subr.bf16.mxu0 0
    %564 = vmatpush1.bf16.msra.mxu0 %v56
    %565 = vmatprep.subr.bf16.mxu0 0
    %566 = vmatpush1.bf16.msra.mxu0 %v57
    %567 = vmatprep.subr.bf16.mxu0 0
    %568 = vmatpush1.bf16.msra.mxu0 %v58
    %569 = vmatprep.subr.bf16.mxu0 0
    %570 = vmatpush1.bf16.msra.mxu0 %v59
    %571 = vmatprep.subr.bf16.mxu0 0
    %572 = vmatpush1.bf16.msra.mxu0 %v60
    %573 = vmatprep.subr.bf16.mxu0 0
    %574 = vmatpush1.bf16.msra.mxu0 %v61
    %575 = vmatprep.subr.bf16.mxu0 0
    %576 = vmatpush1.bf16.msra.mxu0 %v62
    %577 = vmatprep.subr.bf16.mxu0 0
    %578 = vmatpush1.bf16.msra.mxu0 %v63
    %579 = vmatprep.subr.bf16.mxu0 0
    %580 = vmatpush1.bf16.msra.mxu0 0
    %581 = vmatprep.subr.bf16.mxu0 0
    %582 = vmatpush1.bf16.msra.mxu0 0
    %583 = vmatprep.subr.bf16.mxu0 0
    %584 = vmatpush1.bf16.msra.mxu0 0
    %585 = vmatprep.subr.bf16.mxu0 0
    %586 = vmatpush1.bf16.msra.mxu0 0
    %587 = vmatprep.subr.bf16.mxu0 0
    %588 = vmatpush1.bf16.msra.mxu0 0
    %589 = vmatprep.subr.bf16.mxu0 0
    %590 = vmatpush1.bf16.msra.mxu0 0
    %591 = vmatprep.subr.bf16.mxu0 0
    %592 = vmatpush1.bf16.msra.mxu0 0
    %593 = vmatprep.subr.bf16.mxu0 0
    %594 = vmatpush1.bf16.msra.mxu0 0
    %595 = vmatprep.mubr.bf16.mxu0 0
    %596 = vmatmul.mubr.bf16.gmra.mrb[0].mxu0 %v562
    %v597 = vpop.f32.mrb[0].mxu0
    %v598 = vadd.f32 0.0, %v597
    %v599 = vpop.f32.mrb[0].mxu0
    %v600 = vpop.f32.mrb[0].mxu0
    %v601 = vpop.f32.mrb[0].mxu0
    %602 = vdwg.mxu0
    %v603 = vmul.f32 %v598, %v39
    %v604 = vpack.c.bf16 %v603, %v603
    %605 = vmatprep.subr.bf16.mxu0 0
    %606 = vmatpush1.bf16.msra.mxu0 %v56
    %607 = vmatprep.subr.bf16.mxu0 0
    %608 = vmatpush1.bf16.msra.mxu0 %v57
    %609 = vmatprep.subr.bf16.mxu0 0
    %610 = vmatpush1.bf16.msra.mxu0 %v58
    %611 = vmatprep.subr.bf16.mxu0 0
    %612 = vmatpush1.bf16.msra.mxu0 %v59
    %613 = vmatprep.subr.bf16.mxu0 0
    %614 = vmatpush1.bf16.msra.mxu0 %v60
    %615 = vmatprep.subr.bf16.mxu0 0
    %616 = vmatpush1.bf16.msra.mxu0 %v61
    %617 = vmatprep.subr.bf16.mxu0 0
    %618 = vmatpush1.bf16.msra.mxu0 %v62
    %619 = vmatprep.subr.bf16.mxu0 0
    %620 = vmatpush1.bf16.msra.mxu0 %v63
    %621 = vmatprep.subr.bf16.mxu0 0
    %622 = vmatpush1.bf16.msra.mxu0 0
    %623 = vmatprep.subr.bf16.mxu0 0
    %624 = vmatpush1.bf16.msra.mxu0 0
    %625 = vmatprep.subr.bf16.mxu0 0
    %626 = vmatpush1.bf16.msra.mxu0 0
    %627 = vmatprep.subr.bf16.mxu0 0
    %628 = vmatpush1.bf16.msra.mxu0 0
    %629 = vmatprep.subr.bf16.mxu0 0
    %630 = vmatpush1.bf16.msra.mxu0 0
    %631 = vmatprep.subr.bf16.mxu0 0
    %632 = vmatpush1.bf16.msra.mxu0 0
    %633 = vmatprep.subr.bf16.mxu0 0
    %634 = vmatpush1.bf16.msra.mxu0 0
    %635 = vmatprep.subr.bf16.mxu0 0
    %636 = vmatpush1.bf16.msra.mxu0 0
    %637 = vmatprep.mubr.bf16.mxu0 0
    %638 = vmatmul.mubr.bf16.gmra.mrb[0].mxu0 %v604
    %v639 = vpop.f32.mrb[0].mxu0
    %v640 = vadd.f32 0.0, %v639
    %v641 = vpop.f32.mrb[0].mxu0
    %v642 = vpop.f32.mrb[0].mxu0
    %v643 = vpop.f32.mrb[0].mxu0
    %644 = vdwg.mxu0
    %v645 = vmul.f32 %v640, %v39
    %v646 = vpack.c.bf16 %v645, %v645
    %647 = vmatprep.subr.bf16.mxu0 0
    %648 = vmatpush1.bf16.msra.mxu0 %v56
    %649 = vmatprep.subr.bf16.mxu0 0
    %650 = vmatpush1.bf16.msra.mxu0 %v57
    %651 = vmatprep.subr.bf16.mxu0 0
    %652 = vmatpush1.bf16.msra.mxu0 %v58
    %653 = vmatprep.subr.bf16.mxu0 0
    %654 = vmatpush1.bf16.msra.mxu0 %v59
    %655 = vmatprep.subr.bf16.mxu0 0
    %656 = vmatpush1.bf16.msra.mxu0 %v60
    %657 = vmatprep.subr.bf16.mxu0 0
    %658 = vmatpush1.bf16.msra.mxu0 %v61
    %659 = vmatprep.subr.bf16.mxu0 0
    %660 = vmatpush1.bf16.msra.mxu0 %v62
    %661 = vmatprep.subr.bf16.mxu0 0
    %662 = vmatpush1.bf16.msra.mxu0 %v63
    %663 = vmatprep.subr.bf16.mxu0 0
    %664 = vmatpush1.bf16.msra.mxu0 0
    %665 = vmatprep.subr.bf16.mxu0 0
    %666 = vmatpush1.bf16.msra.mxu0 0
    %667 = vmatprep.subr.bf16.mxu0 0
    %668 = vmatpush1.bf16.msra.mxu0 0
    %669 = vmatprep.subr.bf16.mxu0 0
    %670 = vmatpush1.bf16.msra.mxu0 0
    %671 = vmatprep.subr.bf16.mxu0 0
    %672 = vmatpush1.bf16.msra.mxu0 0
    %673 = vmatprep.subr.bf16.mxu0 0
    %674 = vmatpush1.bf16.msra.mxu0 0
    %675 = vmatprep.subr.bf16.mxu0 0
    %676 = vmatpush1.bf16.msra.mxu0 0
    %677 = vmatprep.subr.bf16.mxu0 0
    %678 = vmatpush1.bf16.msra.mxu0 0
    %679 = vmatprep.mubr.bf16.mxu0 0
    %680 = vmatmul.mubr.bf16.gmra.mrb[0].mxu0 %v646
    %v681 = vpop.f32.mrb[0].mxu0
    %v682 = vadd.f32 0.0, %v681
    %v683 = vpop.f32.mrb[0].mxu0
    %v684 = vpop.f32.mrb[0].mxu0
    %v685 = vpop.f32.mrb[0].mxu0
    %686 = vdwg.mxu0
    %v687 = vmul.f32 %v682, %v39
    %v688 = vpack.c.bf16 %v687, %v687
    %689 = vmatprep.subr.bf16.mxu0 0
    %690 = vmatpush1.bf16.msra.mxu0 %v56
    %691 = vmatprep.subr.bf16.mxu0 0
    %692 = vmatpush1.bf16.msra.mxu0 %v57
    %693 = vmatprep.subr.bf16.mxu0 0
    %694 = vmatpush1.bf16.msra.mxu0 %v58
    %695 = vmatprep.subr.bf16.mxu0 0
    %696 = vmatpush1.bf16.msra.mxu0 %v59
    %697 = vmatprep.subr.bf16.mxu0 0
    %698 = vmatpush1.bf16.msra.mxu0 %v60
    %699 = vmatprep.subr.bf16.mxu0 0
    %700 = vmatpush1.bf16.msra.mxu0 %v61
    %701 = vmatprep.subr.bf16.mxu0 0
    %702 = vmatpush1.bf16.msra.mxu0 %v62
    %703 = vmatprep.subr.bf16.mxu0 0
    %704 = vmatpush1.bf16.msra.mxu0 %v63
    %705 = vmatprep.subr.bf16.mxu0 0
    %706 = vmatpush1.bf16.msra.mxu0 0
    %707 = vmatprep.subr.bf16.mxu0 0
    %708 = vmatpush1.bf16.msra.mxu0 0
    %709 = vmatprep.subr.bf16.mxu0 0
    %710 = vmatpush1.bf16.msra.mxu0 0
    %711 = vmatprep.subr.bf16.mxu0 0
    %712 = vmatpush1.bf16.msra.mxu0 0
    %713 = vmatprep.subr.bf16.mxu0 0
    %714 = vmatpush1.bf16.msra.mxu0 0
    %715 = vmatprep.subr.bf16.mxu0 0
    %716 = vmatpush1.bf16.msra.mxu0 0
    %717 = vmatprep.subr.bf16.mxu0 0
    %718 = vmatpush1.bf16.msra.mxu0 0
    %719 = vmatprep.subr.bf16.mxu0 0
    %720 = vmatpush1.bf16.msra.mxu0 0
    %721 = vmatprep.mubr.bf16.mxu0 0
    %722 = vmatmul.mubr.bf16.gmra.mrb[0].mxu0 %v688
    %v723 = vpop.f32.mrb[0].mxu0
    %v724 = vadd.f32 0.0, %v723
    %v725 = vpop.f32.mrb[0].mxu0
    %v726 = vpop.f32.mrb[0].mxu0
    %v727 = vpop.f32.mrb[0].mxu0
    %728 = vdwg.mxu0
    %v729 = vmul.f32 %v724, %v39
    %v730 = vpack.c.bf16 %v729, %v729
    %731 = vmatprep.subr.bf16.mxu0 0
    %732 = vmatpush1.bf16.msra.mxu0 %v56
    %733 = vmatprep.subr.bf16.mxu0 0
    %734 = vmatpush1.bf16.msra.mxu0 %v57
    %735 = vmatprep.subr.bf16.mxu0 0
    %736 = vmatpush1.bf16.msra.mxu0 %v58
    %737 = vmatprep.subr.bf16.mxu0 0
    %738 = vmatpush1.bf16.msra.mxu0 %v59
    %739 = vmatprep.subr.bf16.mxu0 0
    %740 = vmatpush1.bf16.msra.mxu0 %v60
    %741 = vmatprep.subr.bf16.mxu0 0
    %742 = vmatpush1.bf16.msra.mxu0 %v61
    %743 = vmatprep.subr.bf16.mxu0 0
    %744 = vmatpush1.bf16.msra.mxu0 %v62
    %745 = vmatprep.subr.bf16.mxu0 0
    %746 = vmatpush1.bf16.msra.mxu0 %v63
    %747 = vmatprep.subr.bf16.mxu0 0
    %748 = vmatpush1.bf16.msra.mxu0 0
    %749 = vmatprep.subr.bf16.mxu0 0
    %750 = vmatpush1.bf16.msra.mxu0 0
    %751 = vmatprep.subr.bf16.mxu0 0
    %752 = vmatpush1.bf16.msra.mxu0 0
    %753 = vmatprep.subr.bf16.mxu0 0
    %754 = vmatpush1.bf16.msra.mxu0 0
    %755 = vmatprep.subr.bf16.mxu0 0
    %756 = vmatpush1.bf16.msra.mxu0 0
    %757 = vmatprep.subr.bf16.mxu0 0
    %758 = vmatpush1.bf16.msra.mxu0 0
    %759 = vmatprep.subr.bf16.mxu0 0
    %760 = vmatpush1.bf16.msra.mxu0 0
    %761 = vmatprep.subr.bf16.mxu0 0
    %762 = vmatpush1.bf16.msra.mxu0 0
    %763 = vmatprep.mubr.bf16.mxu0 0
    %764 = vmatmul.mubr.bf16.gmra.mrb[0].mxu0 %v730
    %v765 = vpop.f32.mrb[0].mxu0
    %v766 = vadd.f32 0.0, %v765
    %v767 = vpop.f32.mrb[0].mxu0
    %v768 = vpop.f32.mrb[0].mxu0
    %v769 = vpop.f32.mrb[0].mxu0
    %770 = vdwg.mxu0
    %v771 = vmul.f32 %v766, %v39
    %v772 = vmul.f32 %v771, %v771
    %v773 = vsel %vm66, %v772, 0.0
    %774 = vadd.xlane.f32.xlu0 %v773
    %v775 = vpop.xlane.xlu0 %774
    %v776 = vrot.slane %v775, 4
    %v777 = vadd.f32 %v775, %v776
    %v778 = vrot.slane %v777, 2
    %v779 = vadd.f32 %v777, %v778
    %v780 = vrot.slane %v779, 1
    %v781 = vadd.f32 %v779, %v780
    %s782 = vtos %v781
    %s783 = sadd.f32 %s782, 1e-30
    %v784 = vstv %s783
    %v785 = vrsqrt.pop %v784
    %s786 = vtos %v785
    %v787 = vstv %s786
    %v788 = vmul.f32 %v771, %v787
    %v789 = vpack.c.bf16 %v788, %v788
    %790 = vmatprep.subr.bf16.mxu0 0
    %791 = vmatpush1.bf16.msra.mxu0 %v56
    %792 = vmatprep.subr.bf16.mxu0 0
    %793 = vmatpush1.bf16.msra.mxu0 %v57
    %794 = vmatprep.subr.bf16.mxu0 0
    %795 = vmatpush1.bf16.msra.mxu0 %v58
    %796 = vmatprep.subr.bf16.mxu0 0
    %797 = vmatpush1.bf16.msra.mxu0 %v59
    %798 = vmatprep.subr.bf16.mxu0 0
    %799 = vmatpush1.bf16.msra.mxu0 %v60
    %800 = vmatprep.subr.bf16.mxu0 0
    %801 = vmatpush1.bf16.msra.mxu0 %v61
    %802 = vmatprep.subr.bf16.mxu0 0
    %803 = vmatpush1.bf16.msra.mxu0 %v62
    %804 = vmatprep.subr.bf16.mxu0 0
    %805 = vmatpush1.bf16.msra.mxu0 %v63
    %806 = vmatprep.subr.bf16.mxu0 0
    %807 = vmatpush1.bf16.msra.mxu0 0
    %808 = vmatprep.subr.bf16.mxu0 0
    %809 = vmatpush1.bf16.msra.mxu0 0
    %810 = vmatprep.subr.bf16.mxu0 0
    %811 = vmatpush1.bf16.msra.mxu0 0
    %812 = vmatprep.subr.bf16.mxu0 0
    %813 = vmatpush1.bf16.msra.mxu0 0
    %814 = vmatprep.subr.bf16.mxu0 0
    %815 = vmatpush1.bf16.msra.mxu0 0
    %816 = vmatprep.subr.bf16.mxu0 0
    %817 = vmatpush1.bf16.msra.mxu0 0
    %818 = vmatprep.subr.bf16.mxu0 0
    %819 = vmatpush1.bf16.msra.mxu0 0
    %820 = vmatprep.subr.bf16.mxu0 0
    %821 = vmatpush1.bf16.msra.mxu0 0
    %822 = vmatprep.mubr.bf16.mxu0 0
    %823 = vmatmul.mubr.bf16.gmra.mrb[0].mxu0 %v789
    %v824 = vpop.f32.mrb[0].mxu0
    %v825 = vadd.f32 0.0, %v824
    %v826 = vpop.f32.mrb[0].mxu0
    %v827 = vpop.f32.mrb[0].mxu0
    %v828 = vpop.f32.mrb[0].mxu0
    %829 = vdwg.mxu0
    %v830 = vmul.f32 %v825, %v39
    %v831 = vpack.c.bf16 %v830, %v830
    %832 = vmatprep.subr.bf16.mxu0 0
    %833 = vmatpush1.bf16.msra.mxu0 %v56
    %834 = vmatprep.subr.bf16.mxu0 0
    %835 = vmatpush1.bf16.msra.mxu0 %v57
    %836 = vmatprep.subr.bf16.mxu0 0
    %837 = vmatpush1.bf16.msra.mxu0 %v58
    %838 = vmatprep.subr.bf16.mxu0 0
    %839 = vmatpush1.bf16.msra.mxu0 %v59
    %840 = vmatprep.subr.bf16.mxu0 0
    %841 = vmatpush1.bf16.msra.mxu0 %v60
    %842 = vmatprep.subr.bf16.mxu0 0
    %843 = vmatpush1.bf16.msra.mxu0 %v61
    %844 = vmatprep.subr.bf16.mxu0 0
    %845 = vmatpush1.bf16.msra.mxu0 %v62
    %846 = vmatprep.subr.bf16.mxu0 0
    %847 = vmatpush1.bf16.msra.mxu0 %v63
    %848 = vmatprep.subr.bf16.mxu0 0
    %849 = vmatpush1.bf16.msra.mxu0 0
    %850 = vmatprep.subr.bf16.mxu0 0
    %851 = vmatpush1.bf16.msra.mxu0 0
    %852 = vmatprep.subr.bf16.mxu0 0
    %853 = vmatpush1.bf16.msra.mxu0 0
    %854 = vmatprep.subr.bf16.mxu0 0
    %855 = vmatpush1.bf16.msra.mxu0 0
    %856 = vmatprep.subr.bf16.mxu0 0
    %857 = vmatpush1.bf16.msra.mxu0 0
    %858 = vmatprep.subr.bf16.mxu0 0
    %859 = vmatpush1.bf16.msra.mxu0 0
    %860 = vmatprep.subr.bf16.mxu0 0
    %861 = vmatpush1.bf16.msra.mxu0 0
    %862 = vmatprep.subr.bf16.mxu0 0
    %863 = vmatpush1.bf16.msra.mxu0 0
    %864 = vmatprep.mubr.bf16.mxu0 0
    %865 = vmatmul.mubr.bf16.gmra.mrb[0].mxu0 %v831
    %v866 = vpop.f32.mrb[0].mxu0
    %v867 = vadd.f32 0.0, %v866
    %v868 = vpop.f32.mrb[0].mxu0
    %v869 = vpop.f32.mrb[0].mxu0
    %v870 = vpop.f32.mrb[0].mxu0
    %871 = vdwg.mxu0
    %v872 = vmul.f32 %v867, %v39
    %v873 = vpack.c.bf16 %v872, %v872
    %874 = vmatprep.subr.bf16.mxu0 0
    %875 = vmatpush1.bf16.msra.mxu0 %v56
    %876 = vmatprep.subr.bf16.mxu0 0
    %877 = vmatpush1.bf16.msra.mxu0 %v57
    %878 = vmatprep.subr.bf16.mxu0 0
    %879 = vmatpush1.bf16.msra.mxu0 %v58
    %880 = vmatprep.subr.bf16.mxu0 0
    %881 = vmatpush1.bf16.msra.mxu0 %v59
    %882 = vmatprep.subr.bf16.mxu0 0
    %883 = vmatpush1.bf16.msra.mxu0 %v60
    %884 = vmatprep.subr.bf16.mxu0 0
    %885 = vmatpush1.bf16.msra.mxu0 %v61
    %886 = vmatprep.subr.bf16.mxu0 0
    %887 = vmatpush1.bf16.msra.mxu0 %v62
    %888 = vmatprep.subr.bf16.mxu0 0
    %889 = vmatpush1.bf16.msra.mxu0 %v63
    %890 = vmatprep.subr.bf16.mxu0 0
    %891 = vmatpush1.bf16.msra.mxu0 0
    %892 = vmatprep.subr.bf16.mxu0 0
    %893 = vmatpush1.bf16.msra.mxu0 0
    %894 = vmatprep.subr.bf16.mxu0 0
    %895 = vmatpush1.bf16.msra.mxu0 0
    %896 = vmatprep.subr.bf16.mxu0 0
    %897 = vmatpush1.bf16.msra.mxu0 0
    %898 = vmatprep.subr.bf16.mxu0 0
    %899 = vmatpush1.bf16.msra.mxu0 0
    %900 = vmatprep.subr.bf16.mxu0 0
    %901 = vmatpush1.bf16.msra.mxu0 0
    %902 = vmatprep.subr.bf16.mxu0 0
    %903 = vmatpush1.bf16.msra.mxu0 0
    %904 = vmatprep.subr.bf16.mxu0 0
    %905 = vmatpush1.bf16.msra.mxu0 0
    %906 = vmatprep.mubr.bf16.mxu0 0
    %907 = vmatmul.mubr.bf16.gmra.mrb[0].mxu0 %v873
    %v908 = vpop.f32.mrb[0].mxu0
    %v909 = vadd.f32 0.0, %v908
    %v910 = vpop.f32.mrb[0].mxu0
    %v911 = vpop.f32.mrb[0].mxu0
    %v912 = vpop.f32.mrb[0].mxu0
    %913 = vdwg.mxu0
    %v914 = vmul.f32 %v909, %v39
    %v915 = vpack.c.bf16 %v914, %v914
    %916 = vmatprep.subr.bf16.mxu0 0
    %917 = vmatpush1.bf16.msra.mxu0 %v56
    %918 = vmatprep.subr.bf16.mxu0 0
    %919 = vmatpush1.bf16.msra.mxu0 %v57
    %920 = vmatprep.subr.bf16.mxu0 0
    %921 = vmatpush1.bf16.msra.mxu0 %v58
    %922 = vmatprep.subr.bf16.mxu0 0
    %923 = vmatpush1.bf16.msra.mxu0 %v59
    %924 = vmatprep.subr.bf16.mxu0 0
    %925 = vmatpush1.bf16.msra.mxu0 %v60
    %926 = vmatprep.subr.bf16.mxu0 0
    %927 = vmatpush1.bf16.msra.mxu0 %v61
    %928 = vmatprep.subr.bf16.mxu0 0
    %929 = vmatpush1.bf16.msra.mxu0 %v62
    %930 = vmatprep.subr.bf16.mxu0 0
    %931 = vmatpush1.bf16.msra.mxu0 %v63
    %932 = vmatprep.subr.bf16.mxu0 0
    %933 = vmatpush1.bf16.msra.mxu0 0
    %934 = vmatprep.subr.bf16.mxu0 0
    %935 = vmatpush1.bf16.msra.mxu0 0
    %936 = vmatprep.subr.bf16.mxu0 0
    %937 = vmatpush1.bf16.msra.mxu0 0
    %938 = vmatprep.subr.bf16.mxu0 0
    %939 = vmatpush1.bf16.msra.mxu0 0
    %940 = vmatprep.subr.bf16.mxu0 0
    %941 = vmatpush1.bf16.msra.mxu0 0
    %942 = vmatprep.subr.bf16.mxu0 0
    %943 = vmatpush1.bf16.msra.mxu0 0
    %944 = vmatprep.subr.bf16.mxu0 0
    %945 = vmatpush1.bf16.msra.mxu0 0
    %946 = vmatprep.subr.bf16.mxu0 0
    %947 = vmatpush1.bf16.msra.mxu0 0
    %948 = vmatprep.mubr.bf16.mxu0 0
    %949 = vmatmul.mubr.bf16.gmra.mrb[0].mxu0 %v915
    %v950 = vpop.f32.mrb[0].mxu0
    %v951 = vadd.f32 0.0, %v950
    %v952 = vpop.f32.mrb[0].mxu0
    %v953 = vpop.f32.mrb[0].mxu0
    %v954 = vpop.f32.mrb[0].mxu0
    %955 = vdwg.mxu0
    %v956 = vmul.f32 %v951, %v39
    %v957 = vpack.c.bf16 %v956, %v956
    %958 = vmatprep.subr.bf16.mxu0 0
    %959 = vmatpush1.bf16.msra.mxu0 %v56
    %960 = vmatprep.subr.bf16.mxu0 0
    %961 = vmatpush1.bf16.msra.mxu0 %v57
    %962 = vmatprep.subr.bf16.mxu0 0
    %963 = vmatpush1.bf16.msra.mxu0 %v58
    %964 = vmatprep.subr.bf16.mxu0 0
    %965 = vmatpush1.bf16.msra.mxu0 %v59
    %966 = vmatprep.subr.bf16.mxu0 0
    %967 = vmatpush1.bf16.msra.mxu0 %v60
    %968 = vmatprep.subr.bf16.mxu0 0
    %969 = vmatpush1.bf16.msra.mxu0 %v61
    %970 = vmatprep.subr.bf16.mxu0 0
    %971 = vmatpush1.bf16.msra.mxu0 %v62
    %972 = vmatprep.subr.bf16.mxu0 0
    %973 = vmatpush1.bf16.msra.mxu0 %v63
    %974 = vmatprep.subr.bf16.mxu0 0
    %975 = vmatpush1.bf16.msra.mxu0 0
    %976 = vmatprep.subr.bf16.mxu0 0
    %977 = vmatpush1.bf16.msra.mxu0 0
    %978 = vmatprep.subr.bf16.mxu0 0
    %979 = vmatpush1.bf16.msra.mxu0 0
    %980 = vmatprep.subr.bf16.mxu0 0
    %981 = vmatpush1.bf16.msra.mxu0 0
    %982 = vmatprep.subr.bf16.mxu0 0
    %983 = vmatpush1.bf16.msra.mxu0 0
    %984 = vmatprep.subr.bf16.mxu0 0
    %985 = vmatpush1.bf16.msra.mxu0 0
    %986 = vmatprep.subr.bf16.mxu0 0
    %987 = vmatpush1.bf16.msra.mxu0 0
    %988 = vmatprep.subr.bf16.mxu0 0
    %989 = vmatpush1.bf16.msra.mxu0 0
    %990 = vmatprep.mubr.bf16.mxu0 0
    %991 = vmatmul.mubr.bf16.gmra.mrb[0].mxu0 %v957
    %v992 = vpop.f32.mrb[0].mxu0
    %v993 = vadd.f32 0.0, %v992
    %v994 = vpop.f32.mrb[0].mxu0
    %v995 = vpop.f32.mrb[0].mxu0
    %v996 = vpop.f32.mrb[0].mxu0
    %997 = vdwg.mxu0
    %v998 = vmul.f32 %v993, %v39
    %v999 = vpack.c.bf16 %v998, %v998
    %1000 = vmatprep.subr.bf16.mxu0 0
    %1001 = vmatpush1.bf16.msra.mxu0 %v56
    %1002 = vmatprep.subr.bf16.mxu0 0
    %1003 = vmatpush1.bf16.msra.mxu0 %v57
    %1004 = vmatprep.subr.bf16.mxu0 0
    %1005 = vmatpush1.bf16.msra.mxu0 %v58
    %1006 = vmatprep.subr.bf16.mxu0 0
    %1007 = vmatpush1.bf16.msra.mxu0 %v59
    %1008 = vmatprep.subr.bf16.mxu0 0
    %1009 = vmatpush1.bf16.msra.mxu0 %v60
    %1010 = vmatprep.subr.bf16.mxu0 0
    %1011 = vmatpush1.bf16.msra.mxu0 %v61
    %1012 = vmatprep.subr.bf16.mxu0 0
    %1013 = vmatpush1.bf16.msra.mxu0 %v62
    %1014 = vmatprep.subr.bf16.mxu0 0
    %1015 = vmatpush1.bf16.msra.mxu0 %v63
    %1016 = vmatprep.subr.bf16.mxu0 0
    %1017 = vmatpush1.bf16.msra.mxu0 0
    %1018 = vmatprep.subr.bf16.mxu0 0
    %1019 = vmatpush1.bf16.msra.mxu0 0
    %1020 = vmatprep.subr.bf16.mxu0 0
    %1021 = vmatpush1.bf16.msra.mxu0 0
    %1022 = vmatprep.subr.bf16.mxu0 0
    %1023 = vmatpush1.bf16.msra.mxu0 0
    %1024 = vmatprep.subr.bf16.mxu0 0
    %1025 = vmatpush1.bf16.msra.mxu0 0
    %1026 = vmatprep.subr.bf16.mxu0 0
    %1027 = vmatpush1.bf16.msra.mxu0 0
    %1028 = vmatprep.subr.bf16.mxu0 0
    %1029 = vmatpush1.bf16.msra.mxu0 0
    %1030 = vmatprep.subr.bf16.mxu0 0
    %1031 = vmatpush1.bf16.msra.mxu0 0
    %1032 = vmatprep.mubr.bf16.mxu0 0
    %1033 = vmatmul.mubr.bf16.gmra.mrb[0].mxu0 %v999
    %v1034 = vpop.f32.mrb[0].mxu0
    %v1035 = vadd.f32 0.0, %v1034
    %v1036 = vpop.f32.mrb[0].mxu0
    %v1037 = vpop.f32.mrb[0].mxu0
    %v1038 = vpop.f32.mrb[0].mxu0
    %1039 = vdwg.mxu0
    %v1040 = vmul.f32 %v1035, %v39
    %v1041 = vpack.c.bf16 %v1040, %v1040
    %1042 = vmatprep.subr.bf16.mxu0 0
    %1043 = vmatpush1.bf16.msra.mxu0 %v56
    %1044 = vmatprep.subr.bf16.mxu0 0
    %1045 = vmatpush1.bf16.msra.mxu0 %v57
    %1046 = vmatprep.subr.bf16.mxu0 0
    %1047 = vmatpush1.bf16.msra.mxu0 %v58
    %1048 = vmatprep.subr.bf16.mxu0 0
    %1049 = vmatpush1.bf16.msra.mxu0 %v59
    %1050 = vmatprep.subr.bf16.mxu0 0
    %1051 = vmatpush1.bf16.msra.mxu0 %v60
    %1052 = vmatprep.subr.bf16.mxu0 0
    %1053 = vmatpush1.bf16.msra.mxu0 %v61
    %1054 = vmatprep.subr.bf16.mxu0 0
    %1055 = vmatpush1.bf16.msra.mxu0 %v62
    %1056 = vmatprep.subr.bf16.mxu0 0
    %1057 = vmatpush1.bf16.msra.mxu0 %v63
    %1058 = vmatprep.subr.bf16.mxu0 0
    %1059 = vmatpush1.bf16.msra.mxu0 0
    %1060 = vmatprep.subr.bf16.mxu0 0
    %1061 = vmatpush1.bf16.msra.mxu0 0
    %1062 = vmatprep.subr.bf16.mxu0 0
    %1063 = vmatpush1.bf16.msra.mxu0 0
    %1064 = vmatprep.subr.bf16.mxu0 0
    %1065 = vmatpush1.bf16.msra.mxu0 0
    %1066 = vmatprep.subr.bf16.mxu0 0
    %1067 = vmatpush1.bf16.msra.mxu0 0
    %1068 = vmatprep.subr.bf16.mxu0 0
    %1069 = vmatpush1.bf16.msra.mxu0 0
    %1070 = vmatprep.subr.bf16.mxu0 0
    %1071 = vmatpush1.bf16.msra.mxu0 0
    %1072 = vmatprep.subr.bf16.mxu0 0
    %1073 = vmatpush1.bf16.msra.mxu0 0
    %1074 = vmatprep.mubr.bf16.mxu0 0
    %1075 = vmatmul.mubr.bf16.gmra.mrb[0].mxu0 %v1041
    %v1076 = vpop.f32.mrb[0].mxu0
    %v1077 = vadd.f32 0.0, %v1076
    %v1078 = vpop.f32.mrb[0].mxu0
    %v1079 = vpop.f32.mrb[0].mxu0
    %v1080 = vpop.f32.mrb[0].mxu0
    %1081 = vdwg.mxu0
    %v1082 = vmul.f32 %v1077, %v39
    %v1083 = vpack.c.bf16 %v1082, %v1082
    %1084 = vmatprep.subr.bf16.mxu0 0
    %1085 = vmatpush1.bf16.msra.mxu0 %v56
    %1086 = vmatprep.subr.bf16.mxu0 0
    %1087 = vmatpush1.bf16.msra.mxu0 %v57
    %1088 = vmatprep.subr.bf16.mxu0 0
    %1089 = vmatpush1.bf16.msra.mxu0 %v58
    %1090 = vmatprep.subr.bf16.mxu0 0
    %1091 = vmatpush1.bf16.msra.mxu0 %v59
    %1092 = vmatprep.subr.bf16.mxu0 0
    %1093 = vmatpush1.bf16.msra.mxu0 %v60
    %1094 = vmatprep.subr.bf16.mxu0 0
    %1095 = vmatpush1.bf16.msra.mxu0 %v61
    %1096 = vmatprep.subr.bf16.mxu0 0
    %1097 = vmatpush1.bf16.msra.mxu0 %v62
    %1098 = vmatprep.subr.bf16.mxu0 0
    %1099 = vmatpush1.bf16.msra.mxu0 %v63
    %1100 = vmatprep.subr.bf16.mxu0 0
    %1101 = vmatpush1.bf16.msra.mxu0 0
    %1102 = vmatprep.subr.bf16.mxu0 0
    %1103 = vmatpush1.bf16.msra.mxu0 0
    %1104 = vmatprep.subr.bf16.mxu0 0
    %1105 = vmatpush1.bf16.msra.mxu0 0
    %1106 = vmatprep.subr.bf16.mxu0 0
    %1107 = vmatpush1.bf16.msra.mxu0 0
    %1108 = vmatprep.subr.bf16.mxu0 0
    %1109 = vmatpush1.bf16.msra.mxu0 0
    %1110 = vmatprep.subr.bf16.mxu0 0
    %1111 = vmatpush1.bf16.msra.mxu0 0
    %1112 = vmatprep.subr.bf16.mxu0 0
    %1113 = vmatpush1.bf16.msra.mxu0 0
    %1114 = vmatprep.subr.bf16.mxu0 0
    %1115 = vmatpush1.bf16.msra.mxu0 0
    %1116 = vmatprep.mubr.bf16.mxu0 0
    %1117 = vmatmul.mubr.bf16.gmra.mrb[0].mxu0 %v1083
    %v1118 = vpop.f32.mrb[0].mxu0
    %v1119 = vadd.f32 0.0, %v1118
    %v1120 = vpop.f32.mrb[0].mxu0
    %v1121 = vpop.f32.mrb[0].mxu0
    %v1122 = vpop.f32.mrb[0].mxu0
    %1123 = vdwg.mxu0
    %v1124 = vmul.f32 %v1119, %v39
    %v1125 = vmul.f32 %v1124, %v1124
    %v1126 = vsel %vm66, %v1125, 0.0
    %1127 = vadd.xlane.f32.xlu0 %v1126
    %v1128 = vpop.xlane.xlu0 %1127
    %v1129 = vrot.slane %v1128, 4
    %v1130 = vadd.f32 %v1128, %v1129
    %v1131 = vrot.slane %v1130, 2
    %v1132 = vadd.f32 %v1130, %v1131
    %v1133 = vrot.slane %v1132, 1
    %v1134 = vadd.f32 %v1132, %v1133
    %s1135 = vtos %v1134
    %s1136 = sadd.f32 %s1135, 1e-30
    %v1137 = vstv %s1136
    %v1138 = vrsqrt.pop %v1137
    %s1139 = vtos %v1138
    %v1140 = vstv %s1139
    %v1141 = vmul.f32 %v1124, %v1140
    %v1142 = vpack.c.bf16 %v1141, %v1141
    %1143 = vmatprep.subr.bf16.mxu0 0
    %1144 = vmatpush1.bf16.msra.mxu0 %v56
    %1145 = vmatprep.subr.bf16.mxu0 0
    %1146 = vmatpush1.bf16.msra.mxu0 %v57
    %1147 = vmatprep.subr.bf16.mxu0 0
    %1148 = vmatpush1.bf16.msra.mxu0 %v58
    %1149 = vmatprep.subr.bf16.mxu0 0
    %1150 = vmatpush1.bf16.msra.mxu0 %v59
    %1151 = vmatprep.subr.bf16.mxu0 0
    %1152 = vmatpush1.bf16.msra.mxu0 %v60
    %1153 = vmatprep.subr.bf16.mxu0 0
    %1154 = vmatpush1.bf16.msra.mxu0 %v61
    %1155 = vmatprep.subr.bf16.mxu0 0
    %1156 = vmatpush1.bf16.msra.mxu0 %v62
    %1157 = vmatprep.subr.bf16.mxu0 0
    %1158 = vmatpush1.bf16.msra.mxu0 %v63
    %1159 = vmatprep.subr.bf16.mxu0 0
    %1160 = vmatpush1.bf16.msra.mxu0 0
    %1161 = vmatprep.subr.bf16.mxu0 0
    %1162 = vmatpush1.bf16.msra.mxu0 0
    %1163 = vmatprep.subr.bf16.mxu0 0
    %1164 = vmatpush1.bf16.msra.mxu0 0
    %1165 = vmatprep.subr.bf16.mxu0 0
    %1166 = vmatpush1.bf16.msra.mxu0 0
    %1167 = vmatprep.subr.bf16.mxu0 0
    %1168 = vmatpush1.bf16.msra.mxu0 0
    %1169 = vmatprep.subr.bf16.mxu0 0
    %1170 = vmatpush1.bf16.msra.mxu0 0
    %1171 = vmatprep.subr.bf16.mxu0 0
    %1172 = vmatpush1.bf16.msra.mxu0 0
    %1173 = vmatprep.subr.bf16.mxu0 0
    %1174 = vmatpush1.bf16.msra.mxu0 0
    %1175 = vmatprep.mubr.bf16.mxu0 0
    %1176 = vmatmul.mubr.bf16.gmra.mrb[0].mxu0 %v1142
    %v1177 = vpop.f32.mrb[0].mxu0
    %v1178 = vadd.f32 0.0, %v1177
    %v1179 = vpop.f32.mrb[0].mxu0
    %v1180 = vpop.f32.mrb[0].mxu0
    %v1181 = vpop.f32.mrb[0].mxu0
    %1182 = vdwg.mxu0
    %v1183 = vmul.f32 %v1178, %v39
    %v1184 = vpack.c.bf16 %v1183, %v1183
    %1185 = vmatprep.subr.bf16.mxu0 0
    %1186 = vmatpush1.bf16.msra.mxu0 %v56
    %1187 = vmatprep.subr.bf16.mxu0 0
    %1188 = vmatpush1.bf16.msra.mxu0 %v57
    %1189 = vmatprep.subr.bf16.mxu0 0
    %1190 = vmatpush1.bf16.msra.mxu0 %v58
    %1191 = vmatprep.subr.bf16.mxu0 0
    %1192 = vmatpush1.bf16.msra.mxu0 %v59
    %1193 = vmatprep.subr.bf16.mxu0 0
    %1194 = vmatpush1.bf16.msra.mxu0 %v60
    %1195 = vmatprep.subr.bf16.mxu0 0
    %1196 = vmatpush1.bf16.msra.mxu0 %v61
    %1197 = vmatprep.subr.bf16.mxu0 0
    %1198 = vmatpush1.bf16.msra.mxu0 %v62
    %1199 = vmatprep.subr.bf16.mxu0 0
    %1200 = vmatpush1.bf16.msra.mxu0 %v63
    %1201 = vmatprep.subr.bf16.mxu0 0
    %1202 = vmatpush1.bf16.msra.mxu0 0
    %1203 = vmatprep.subr.bf16.mxu0 0
    %1204 = vmatpush1.bf16.msra.mxu0 0
    %1205 = vmatprep.subr.bf16.mxu0 0
    %1206 = vmatpush1.bf16.msra.mxu0 0
    %1207 = vmatprep.subr.bf16.mxu0 0
    %1208 = vmatpush1.bf16.msra.mxu0 0
    %1209 = vmatprep.subr.bf16.mxu0 0
    %1210 = vmatpush1.bf16.msra.mxu0 0
    %1211 = vmatprep.subr.bf16.mxu0 0
    %1212 = vmatpush1.bf16.msra.mxu0 0
    %1213 = vmatprep.subr.bf16.mxu0 0
    %1214 = vmatpush1.bf16.msra.mxu0 0
    %1215 = vmatprep.subr.bf16.mxu0 0
    %1216 = vmatpush1.bf16.msra.mxu0 0
    %1217 = vmatprep.mubr.bf16.mxu0 0
    %1218 = vmatmul.mubr.bf16.gmra.mrb[0].mxu0 %v1184
    %v1219 = vpop.f32.mrb[0].mxu0
    %v1220 = vadd.f32 0.0, %v1219
    %v1221 = vpop.f32.mrb[0].mxu0
    %v1222 = vpop.f32.mrb[0].mxu0
    %v1223 = vpop.f32.mrb[0].mxu0
    %1224 = vdwg.mxu0
    %v1225 = vmul.f32 %v1220, %v39
    %v1226 = vpack.c.bf16 %v1225, %v1225
    %1227 = vmatprep.subr.bf16.mxu0 0
    %1228 = vmatpush1.bf16.msra.mxu0 %v56
    %1229 = vmatprep.subr.bf16.mxu0 0
    %1230 = vmatpush1.bf16.msra.mxu0 %v57
    %1231 = vmatprep.subr.bf16.mxu0 0
    %1232 = vmatpush1.bf16.msra.mxu0 %v58
    %1233 = vmatprep.subr.bf16.mxu0 0
    %1234 = vmatpush1.bf16.msra.mxu0 %v59
    %1235 = vmatprep.subr.bf16.mxu0 0
    %1236 = vmatpush1.bf16.msra.mxu0 %v60
    %1237 = vmatprep.subr.bf16.mxu0 0
    %1238 = vmatpush1.bf16.msra.mxu0 %v61
    %1239 = vmatprep.subr.bf16.mxu0 0
    %1240 = vmatpush1.bf16.msra.mxu0 %v62
    %1241 = vmatprep.subr.bf16.mxu0 0
    %1242 = vmatpush1.bf16.msra.mxu0 %v63
    %1243 = vmatprep.subr.bf16.mxu0 0
    %1244 = vmatpush1.bf16.msra.mxu0 0
    %1245 = vmatprep.subr.bf16.mxu0 0
    %1246 = vmatpush1.bf16.msra.mxu0 0
    %1247 = vmatprep.subr.bf16.mxu0 0
    %1248 = vmatpush1.bf16.msra.mxu0 0
    %1249 = vmatprep.subr.bf16.mxu0 0
    %1250 = vmatpush1.bf16.msra.mxu0 0
    %1251 = vmatprep.subr.bf16.mxu0 0
    %1252 = vmatpush1.bf16.msra.mxu0 0
    %1253 = vmatprep.subr.bf16.mxu0 0
    %1254 = vmatpush1.bf16.msra.mxu0 0
    %1255 = vmatprep.subr.bf16.mxu0 0
    %1256 = vmatpush1.bf16.msra.mxu0 0
    %1257 = vmatprep.subr.bf16.mxu0 0
    %1258 = vmatpush1.bf16.msra.mxu0 0
    %1259 = vmatprep.mubr.bf16.mxu0 0
    %1260 = vmatmul.mubr.bf16.gmra.mrb[0].mxu0 %v1226
    %v1261 = vpop.f32.mrb[0].mxu0
    %v1262 = vadd.f32 0.0, %v1261
    %v1263 = vpop.f32.mrb[0].mxu0
    %v1264 = vpop.f32.mrb[0].mxu0
    %v1265 = vpop.f32.mrb[0].mxu0
    %1266 = vdwg.mxu0
    %v1267 = vmul.f32 %v1262, %v39
    %v1268 = vpack.c.bf16 %v1267, %v1267
    %1269 = vmatprep.subr.bf16.mxu0 0
    %1270 = vmatpush1.bf16.msra.mxu0 %v56
    %1271 = vmatprep.subr.bf16.mxu0 0
    %1272 = vmatpush1.bf16.msra.mxu0 %v57
    %1273 = vmatprep.subr.bf16.mxu0 0
    %1274 = vmatpush1.bf16.msra.mxu0 %v58
    %1275 = vmatprep.subr.bf16.mxu0 0
    %1276 = vmatpush1.bf16.msra.mxu0 %v59
    %1277 = vmatprep.subr.bf16.mxu0 0
    %1278 = vmatpush1.bf16.msra.mxu0 %v60
    %1279 = vmatprep.subr.bf16.mxu0 0
    %1280 = vmatpush1.bf16.msra.mxu0 %v61
    %1281 = vmatprep.subr.bf16.mxu0 0
    %1282 = vmatpush1.bf16.msra.mxu0 %v62
    %1283 = vmatprep.subr.bf16.mxu0 0
    %1284 = vmatpush1.bf16.msra.mxu0 %v63
    %1285 = vmatprep.subr.bf16.mxu0 0
    %1286 = vmatpush1.bf16.msra.mxu0 0
    %1287 = vmatprep.subr.bf16.mxu0 0
    %1288 = vmatpush1.bf16.msra.mxu0 0
    %1289 = vmatprep.subr.bf16.mxu0 0
    %1290 = vmatpush1.bf16.msra.mxu0 0
    %1291 = vmatprep.subr.bf16.mxu0 0
    %1292 = vmatpush1.bf16.msra.mxu0 0
    %1293 = vmatprep.subr.bf16.mxu0 0
    %1294 = vmatpush1.bf16.msra.mxu0 0
    %1295 = vmatprep.subr.bf16.mxu0 0
    %1296 = vmatpush1.bf16.msra.mxu0 0
    %1297 = vmatprep.subr.bf16.mxu0 0
    %1298 = vmatpush1.bf16.msra.mxu0 0
    %1299 = vmatprep.subr.bf16.mxu0 0
    %1300 = vmatpush1.bf16.msra.mxu0 0
    %1301 = vmatprep.mubr.bf16.mxu0 0
    %1302 = vmatmul.mubr.bf16.gmra.mrb[0].mxu0 %v1268
    %v1303 = vpop.f32.mrb[0].mxu0
    %v1304 = vadd.f32 0.0, %v1303
    %v1305 = vpop.f32.mrb[0].mxu0
    %v1306 = vpop.f32.mrb[0].mxu0
    %v1307 = vpop.f32.mrb[0].mxu0
    %1308 = vdwg.mxu0
    %v1309 = vmul.f32 %v1304, %v39
    %v1310 = vpack.c.bf16 %v1309, %v1309
    %1311 = vmatprep.subr.bf16.mxu0 0
    %1312 = vmatpush1.bf16.msra.mxu0 %v56
    %1313 = vmatprep.subr.bf16.mxu0 0
    %1314 = vmatpush1.bf16.msra.mxu0 %v57
    %1315 = vmatprep.subr.bf16.mxu0 0
    %1316 = vmatpush1.bf16.msra.mxu0 %v58
    %1317 = vmatprep.subr.bf16.mxu0 0
    %1318 = vmatpush1.bf16.msra.mxu0 %v59
    %1319 = vmatprep.subr.bf16.mxu0 0
    %1320 = vmatpush1.bf16.msra.mxu0 %v60
    %1321 = vmatprep.subr.bf16.mxu0 0
    %1322 = vmatpush1.bf16.msra.mxu0 %v61
    %1323 = vmatprep.subr.bf16.mxu0 0
    %1324 = vmatpush1.bf16.msra.mxu0 %v62
    %1325 = vmatprep.subr.bf16.mxu0 0
    %1326 = vmatpush1.bf16.msra.mxu0 %v63
    %1327 = vmatprep.subr.bf16.mxu0 0
    %1328 = vmatpush1.bf16.msra.mxu0 0
    %1329 = vmatprep.subr.bf16.mxu0 0
    %1330 = vmatpush1.bf16.msra.mxu0 0
    %1331 = vmatprep.subr.bf16.mxu0 0
    %1332 = vmatpush1.bf16.msra.mxu0 0
    %1333 = vmatprep.subr.bf16.mxu0 0
    %1334 = vmatpush1.bf16.msra.mxu0 0
    %1335 = vmatprep.subr.bf16.mxu0 0
    %1336 = vmatpush1.bf16.msra.mxu0 0
    %1337 = vmatprep.subr.bf16.mxu0 0
    %1338 = vmatpush1.bf16.msra.mxu0 0
    %1339 = vmatprep.subr.bf16.mxu0 0
    %1340 = vmatpush1.bf16.msra.mxu0 0
    %1341 = vmatprep.subr.bf16.mxu0 0
    %1342 = vmatpush1.bf16.msra.mxu0 0
    %1343 = vmatprep.mubr.bf16.mxu0 0
    %1344 = vmatmul.mubr.bf16.gmra.mrb[0].mxu0 %v1310
    %v1345 = vpop.f32.mrb[0].mxu0
    %v1346 = vadd.f32 0.0, %v1345
    %v1347 = vpop.f32.mrb[0].mxu0
    %v1348 = vpop.f32.mrb[0].mxu0
    %v1349 = vpop.f32.mrb[0].mxu0
    %1350 = vdwg.mxu0
    %v1351 = vmul.f32 %v1346, %v39
    %v1352 = vpack.c.bf16 %v1351, %v1351
    %1353 = vmatprep.subr.bf16.mxu0 0
    %1354 = vmatpush1.bf16.msra.mxu0 %v56
    %1355 = vmatprep.subr.bf16.mxu0 0
    %1356 = vmatpush1.bf16.msra.mxu0 %v57
    %1357 = vmatprep.subr.bf16.mxu0 0
    %1358 = vmatpush1.bf16.msra.mxu0 %v58
    %1359 = vmatprep.subr.bf16.mxu0 0
    %1360 = vmatpush1.bf16.msra.mxu0 %v59
    %1361 = vmatprep.subr.bf16.mxu0 0
    %1362 = vmatpush1.bf16.msra.mxu0 %v60
    %1363 = vmatprep.subr.bf16.mxu0 0
    %1364 = vmatpush1.bf16.msra.mxu0 %v61
    %1365 = vmatprep.subr.bf16.mxu0 0
    %1366 = vmatpush1.bf16.msra.mxu0 %v62
    %1367 = vmatprep.subr.bf16.mxu0 0
    %1368 = vmatpush1.bf16.msra.mxu0 %v63
    %1369 = vmatprep.subr.bf16.mxu0 0
    %1370 = vmatpush1.bf16.msra.mxu0 0
    %1371 = vmatprep.subr.bf16.mxu0 0
    %1372 = vmatpush1.bf16.msra.mxu0 0
    %1373 = vmatprep.subr.bf16.mxu0 0
    %1374 = vmatpush1.bf16.msra.mxu0 0
    %1375 = vmatprep.subr.bf16.mxu0 0
    %1376 = vmatpush1.bf16.msra.mxu0 0
    %1377 = vmatprep.subr.bf16.mxu0 0
    %1378 = vmatpush1.bf16.msra.mxu0 0
    %1379 = vmatprep.subr.bf16.mxu0 0
    %1380 = vmatpush1.bf16.msra.mxu0 0
    %1381 = vmatprep.subr.bf16.mxu0 0
    %1382 = vmatpush1.bf16.msra.mxu0 0
    %1383 = vmatprep.subr.bf16.mxu0 0
    %1384 = vmatpush1.bf16.msra.mxu0 0
    %1385 = vmatprep.mubr.bf16.mxu0 0
    %1386 = vmatmul.mubr.bf16.gmra.mrb[0].mxu0 %v1352
    %v1387 = vpop.f32.mrb[0].mxu0
    %v1388 = vadd.f32 0.0, %v1387
    %v1389 = vpop.f32.mrb[0].mxu0
    %v1390 = vpop.f32.mrb[0].mxu0
    %v1391 = vpop.f32.mrb[0].mxu0
    %1392 = vdwg.mxu0
    %v1393 = vmul.f32 %v1388, %v39
    %v1394 = vpack.c.bf16 %v1393, %v1393
    %1395 = vmatprep.subr.bf16.mxu0 0
    %1396 = vmatpush1.bf16.msra.mxu0 %v56
    %1397 = vmatprep.subr.bf16.mxu0 0
    %1398 = vmatpush1.bf16.msra.mxu0 %v57
    %1399 = vmatprep.subr.bf16.mxu0 0
    %1400 = vmatpush1.bf16.msra.mxu0 %v58
    %1401 = vmatprep.subr.bf16.mxu0 0
    %1402 = vmatpush1.bf16.msra.mxu0 %v59
    %1403 = vmatprep.subr.bf16.mxu0 0
    %1404 = vmatpush1.bf16.msra.mxu0 %v60
    %1405 = vmatprep.subr.bf16.mxu0 0
    %1406 = vmatpush1.bf16.msra.mxu0 %v61
    %1407 = vmatprep.subr.bf16.mxu0 0
    %1408 = vmatpush1.bf16.msra.mxu0 %v62
    %1409 = vmatprep.subr.bf16.mxu0 0
    %1410 = vmatpush1.bf16.msra.mxu0 %v63
    %1411 = vmatprep.subr.bf16.mxu0 0
    %1412 = vmatpush1.bf16.msra.mxu0 0
    %1413 = vmatprep.subr.bf16.mxu0 0
    %1414 = vmatpush1.bf16.msra.mxu0 0
    %1415 = vmatprep.subr.bf16.mxu0 0
    %1416 = vmatpush1.bf16.msra.mxu0 0
    %1417 = vmatprep.subr.bf16.mxu0 0
    %1418 = vmatpush1.bf16.msra.mxu0 0
    %1419 = vmatprep.subr.bf16.mxu0 0
    %1420 = vmatpush1.bf16.msra.mxu0 0
    %1421 = vmatprep.subr.bf16.mxu0 0
    %1422 = vmatpush1.bf16.msra.mxu0 0
    %1423 = vmatprep.subr.bf16.mxu0 0
    %1424 = vmatpush1.bf16.msra.mxu0 0
    %1425 = vmatprep.subr.bf16.mxu0 0
    %1426 = vmatpush1.bf16.msra.mxu0 0
    %1427 = vmatprep.mubr.bf16.mxu0 0
    %1428 = vmatmul.mubr.bf16.gmra.mrb[0].mxu0 %v1394
    %v1429 = vpop.f32.mrb[0].mxu0
    %v1430 = vadd.f32 0.0, %v1429
    %v1431 = vpop.f32.mrb[0].mxu0
    %v1432 = vpop.f32.mrb[0].mxu0
    %v1433 = vpop.f32.mrb[0].mxu0
    %1434 = vdwg.mxu0
    %v1435 = vmul.f32 %v1430, %v39
    %v1436 = vpack.c.bf16 %v1435, %v1435
    %1437 = vmatprep.subr.bf16.mxu0 0
    %1438 = vmatpush1.bf16.msra.mxu0 %v56
    %1439 = vmatprep.subr.bf16.mxu0 0
    %1440 = vmatpush1.bf16.msra.mxu0 %v57
    %1441 = vmatprep.subr.bf16.mxu0 0
    %1442 = vmatpush1.bf16.msra.mxu0 %v58
    %1443 = vmatprep.subr.bf16.mxu0 0
    %1444 = vmatpush1.bf16.msra.mxu0 %v59
    %1445 = vmatprep.subr.bf16.mxu0 0
    %1446 = vmatpush1.bf16.msra.mxu0 %v60
    %1447 = vmatprep.subr.bf16.mxu0 0
    %1448 = vmatpush1.bf16.msra.mxu0 %v61
    %1449 = vmatprep.subr.bf16.mxu0 0
    %1450 = vmatpush1.bf16.msra.mxu0 %v62
    %1451 = vmatprep.subr.bf16.mxu0 0
    %1452 = vmatpush1.bf16.msra.mxu0 %v63
    %1453 = vmatprep.subr.bf16.mxu0 0
    %1454 = vmatpush1.bf16.msra.mxu0 0
    %1455 = vmatprep.subr.bf16.mxu0 0
    %1456 = vmatpush1.bf16.msra.mxu0 0
    %1457 = vmatprep.subr.bf16.mxu0 0
    %1458 = vmatpush1.bf16.msra.mxu0 0
    %1459 = vmatprep.subr.bf16.mxu0 0
    %1460 = vmatpush1.bf16.msra.mxu0 0
    %1461 = vmatprep.subr.bf16.mxu0 0
    %1462 = vmatpush1.bf16.msra.mxu0 0
    %1463 = vmatprep.subr.bf16.mxu0 0
    %1464 = vmatpush1.bf16.msra.mxu0 0
    %1465 = vmatprep.subr.bf16.mxu0 0
    %1466 = vmatpush1.bf16.msra.mxu0 0
    %1467 = vmatprep.subr.bf16.mxu0 0
    %1468 = vmatpush1.bf16.msra.mxu0 0
    %1469 = vmatprep.mubr.bf16.mxu0 0
    %1470 = vmatmul.mubr.bf16.gmra.mrb[0].mxu0 %v1436
    %v1471 = vpop.f32.mrb[0].mxu0
    %v1472 = vadd.f32 0.0, %v1471
    %v1473 = vpop.f32.mrb[0].mxu0
    %v1474 = vpop.f32.mrb[0].mxu0
    %v1475 = vpop.f32.mrb[0].mxu0
    %1476 = vdwg.mxu0
    %v1477 = vmul.f32 %v1472, %v39
    %v1478 = vmul.f32 %v1477, %v1477
    %v1479 = vsel %vm66, %v1478, 0.0
    %1480 = vadd.xlane.f32.xlu0 %v1479
    %v1481 = vpop.xlane.xlu0 %1480
    %v1482 = vrot.slane %v1481, 4
    %v1483 = vadd.f32 %v1481, %v1482
    %v1484 = vrot.slane %v1483, 2
    %v1485 = vadd.f32 %v1483, %v1484
    %v1486 = vrot.slane %v1485, 1
    %v1487 = vadd.f32 %v1485, %v1486
    %s1488 = vtos %v1487
    %s1489 = sadd.f32 %s1488, 1e-30
    %v1490 = vstv %s1489
    %v1491 = vrsqrt.pop %v1490
    %s1492 = vtos %v1491
    %v1493 = vstv %s1492
    %v1494 = vmul.f32 %v1477, %v1493
    %v1495 = vpack.c.bf16 %v1494, %v1494
    %1496 = vmatprep.subr.bf16.mxu0 0
    %1497 = vmatpush1.bf16.msra.mxu0 %v56
    %1498 = vmatprep.subr.bf16.mxu0 0
    %1499 = vmatpush1.bf16.msra.mxu0 %v57
    %1500 = vmatprep.subr.bf16.mxu0 0
    %1501 = vmatpush1.bf16.msra.mxu0 %v58
    %1502 = vmatprep.subr.bf16.mxu0 0
    %1503 = vmatpush1.bf16.msra.mxu0 %v59
    %1504 = vmatprep.subr.bf16.mxu0 0
    %1505 = vmatpush1.bf16.msra.mxu0 %v60
    %1506 = vmatprep.subr.bf16.mxu0 0
    %1507 = vmatpush1.bf16.msra.mxu0 %v61
    %1508 = vmatprep.subr.bf16.mxu0 0
    %1509 = vmatpush1.bf16.msra.mxu0 %v62
    %1510 = vmatprep.subr.bf16.mxu0 0
    %1511 = vmatpush1.bf16.msra.mxu0 %v63
    %1512 = vmatprep.subr.bf16.mxu0 0
    %1513 = vmatpush1.bf16.msra.mxu0 0
    %1514 = vmatprep.subr.bf16.mxu0 0
    %1515 = vmatpush1.bf16.msra.mxu0 0
    %1516 = vmatprep.subr.bf16.mxu0 0
    %1517 = vmatpush1.bf16.msra.mxu0 0
    %1518 = vmatprep.subr.bf16.mxu0 0
    %1519 = vmatpush1.bf16.msra.mxu0 0
    %1520 = vmatprep.subr.bf16.mxu0 0
    %1521 = vmatpush1.bf16.msra.mxu0 0
    %1522 = vmatprep.subr.bf16.mxu0 0
    %1523 = vmatpush1.bf16.msra.mxu0 0
    %1524 = vmatprep.subr.bf16.mxu0 0
    %1525 = vmatpush1.bf16.msra.mxu0 0
    %1526 = vmatprep.subr.bf16.mxu0 0
    %1527 = vmatpush1.bf16.msra.mxu0 0
    %1528 = vmatprep.mubr.bf16.mxu0 0
    %1529 = vmatmul.mubr.bf16.gmra.mrb[0].mxu0 %v1495
    %v1530 = vpop.f32.mrb[0].mxu0
    %v1531 = vadd.f32 0.0, %v1530
    %v1532 = vpop.f32.mrb[0].mxu0
    %v1533 = vpop.f32.mrb[0].mxu0
    %v1534 = vpop.f32.mrb[0].mxu0
    %1535 = vdwg.mxu0
    %v1536 = vmul.f32 %v1531, %v39
    %v1537 = vpack.c.bf16 %v1536, %v1536
    %1538 = vmatprep.subr.bf16.mxu0 0
    %1539 = vmatpush1.bf16.msra.mxu0 %v56
    %1540 = vmatprep.subr.bf16.mxu0 0
    %1541 = vmatpush1.bf16.msra.mxu0 %v57
    %1542 = vmatprep.subr.bf16.mxu0 0
    %1543 = vmatpush1.bf16.msra.mxu0 %v58
    %1544 = vmatprep.subr.bf16.mxu0 0
    %1545 = vmatpush1.bf16.msra.mxu0 %v59
    %1546 = vmatprep.subr.bf16.mxu0 0
    %1547 = vmatpush1.bf16.msra.mxu0 %v60
    %1548 = vmatprep.subr.bf16.mxu0 0
    %1549 = vmatpush1.bf16.msra.mxu0 %v61
    %1550 = vmatprep.subr.bf16.mxu0 0
    %1551 = vmatpush1.bf16.msra.mxu0 %v62
    %1552 = vmatprep.subr.bf16.mxu0 0
    %1553 = vmatpush1.bf16.msra.mxu0 %v63
    %1554 = vmatprep.subr.bf16.mxu0 0
    %1555 = vmatpush1.bf16.msra.mxu0 0
    %1556 = vmatprep.subr.bf16.mxu0 0
    %1557 = vmatpush1.bf16.msra.mxu0 0
    %1558 = vmatprep.subr.bf16.mxu0 0
    %1559 = vmatpush1.bf16.msra.mxu0 0
    %1560 = vmatprep.subr.bf16.mxu0 0
    %1561 = vmatpush1.bf16.msra.mxu0 0
    %1562 = vmatprep.subr.bf16.mxu0 0
    %1563 = vmatpush1.bf16.msra.mxu0 0
    %1564 = vmatprep.subr.bf16.mxu0 0
    %1565 = vmatpush1.bf16.msra.mxu0 0
    %1566 = vmatprep.subr.bf16.mxu0 0
    %1567 = vmatpush1.bf16.msra.mxu0 0
    %1568 = vmatprep.subr.bf16.mxu0 0
    %1569 = vmatpush1.bf16.msra.mxu0 0
    %1570 = vmatprep.mubr.bf16.mxu0 0
    %1571 = vmatmul.mubr.bf16.gmra.mrb[0].mxu0 %v1537
    %v1572 = vpop.f32.mrb[0].mxu0
    %v1573 = vadd.f32 0.0, %v1572
    %v1574 = vpop.f32.mrb[0].mxu0
    %v1575 = vpop.f32.mrb[0].mxu0
    %v1576 = vpop.f32.mrb[0].mxu0
    %1577 = vdwg.mxu0
    %v1578 = vmul.f32 %v1573, %v39
    %v1579 = vpack.c.bf16 %v1578, %v1578
    %1580 = vmatprep.subr.bf16.mxu0 0
    %1581 = vmatpush1.bf16.msra.mxu0 %v56
    %1582 = vmatprep.subr.bf16.mxu0 0
    %1583 = vmatpush1.bf16.msra.mxu0 %v57
    %1584 = vmatprep.subr.bf16.mxu0 0
    %1585 = vmatpush1.bf16.msra.mxu0 %v58
    %1586 = vmatprep.subr.bf16.mxu0 0
    %1587 = vmatpush1.bf16.msra.mxu0 %v59
    %1588 = vmatprep.subr.bf16.mxu0 0
    %1589 = vmatpush1.bf16.msra.mxu0 %v60
    %1590 = vmatprep.subr.bf16.mxu0 0
    %1591 = vmatpush1.bf16.msra.mxu0 %v61
    %1592 = vmatprep.subr.bf16.mxu0 0
    %1593 = vmatpush1.bf16.msra.mxu0 %v62
    %1594 = vmatprep.subr.bf16.mxu0 0
    %1595 = vmatpush1.bf16.msra.mxu0 %v63
    %1596 = vmatprep.subr.bf16.mxu0 0
    %1597 = vmatpush1.bf16.msra.mxu0 0
    %1598 = vmatprep.subr.bf16.mxu0 0
    %1599 = vmatpush1.bf16.msra.mxu0 0
    %1600 = vmatprep.subr.bf16.mxu0 0
    %1601 = vmatpush1.bf16.msra.mxu0 0
    %1602 = vmatprep.subr.bf16.mxu0 0
    %1603 = vmatpush1.bf16.msra.mxu0 0
    %1604 = vmatprep.subr.bf16.mxu0 0
    %1605 = vmatpush1.bf16.msra.mxu0 0
    %1606 = vmatprep.subr.bf16.mxu0 0
    %1607 = vmatpush1.bf16.msra.mxu0 0
    %1608 = vmatprep.subr.bf16.mxu0 0
    %1609 = vmatpush1.bf16.msra.mxu0 0
    %1610 = vmatprep.subr.bf16.mxu0 0
    %1611 = vmatpush1.bf16.msra.mxu0 0
    %1612 = vmatprep.mubr.bf16.mxu0 0
    %1613 = vmatmul.mubr.bf16.gmra.mrb[0].mxu0 %v1579
    %v1614 = vpop.f32.mrb[0].mxu0
    %v1615 = vadd.f32 0.0, %v1614
    %v1616 = vpop.f32.mrb[0].mxu0
    %v1617 = vpop.f32.mrb[0].mxu0
    %v1618 = vpop.f32.mrb[0].mxu0
    %1619 = vdwg.mxu0
    %v1620 = vmul.f32 %v1615, %v39
    %v1621 = vpack.c.bf16 %v1620, %v1620
    %1622 = vmatprep.subr.bf16.mxu0 0
    %1623 = vmatpush1.bf16.msra.mxu0 %v56
    %1624 = vmatprep.subr.bf16.mxu0 0
    %1625 = vmatpush1.bf16.msra.mxu0 %v57
    %1626 = vmatprep.subr.bf16.mxu0 0
    %1627 = vmatpush1.bf16.msra.mxu0 %v58
    %1628 = vmatprep.subr.bf16.mxu0 0
    %1629 = vmatpush1.bf16.msra.mxu0 %v59
    %1630 = vmatprep.subr.bf16.mxu0 0
    %1631 = vmatpush1.bf16.msra.mxu0 %v60
    %1632 = vmatprep.subr.bf16.mxu0 0
    %1633 = vmatpush1.bf16.msra.mxu0 %v61
    %1634 = vmatprep.subr.bf16.mxu0 0
    %1635 = vmatpush1.bf16.msra.mxu0 %v62
    %1636 = vmatprep.subr.bf16.mxu0 0
    %1637 = vmatpush1.bf16.msra.mxu0 %v63
    %1638 = vmatprep.subr.bf16.mxu0 0
    %1639 = vmatpush1.bf16.msra.mxu0 0
    %1640 = vmatprep.subr.bf16.mxu0 0
    %1641 = vmatpush1.bf16.msra.mxu0 0
    %1642 = vmatprep.subr.bf16.mxu0 0
    %1643 = vmatpush1.bf16.msra.mxu0 0
    %1644 = vmatprep.subr.bf16.mxu0 0
    %1645 = vmatpush1.bf16.msra.mxu0 0
    %1646 = vmatprep.subr.bf16.mxu0 0
    %1647 = vmatpush1.bf16.msra.mxu0 0
    %1648 = vmatprep.subr.bf16.mxu0 0
    %1649 = vmatpush1.bf16.msra.mxu0 0
    %1650 = vmatprep.subr.bf16.mxu0 0
    %1651 = vmatpush1.bf16.msra.mxu0 0
    %1652 = vmatprep.subr.bf16.mxu0 0
    %1653 = vmatpush1.bf16.msra.mxu0 0
    %1654 = vmatprep.mubr.bf16.mxu0 0
    %1655 = vmatmul.mubr.bf16.gmra.mrb[0].mxu0 %v1621
    %v1656 = vpop.f32.mrb[0].mxu0
    %v1657 = vadd.f32 0.0, %v1656
    %v1658 = vpop.f32.mrb[0].mxu0
    %v1659 = vpop.f32.mrb[0].mxu0
    %v1660 = vpop.f32.mrb[0].mxu0
    %1661 = vdwg.mxu0
    %v1662 = vmul.f32 %v1657, %v39
    %v1663 = vpack.c.bf16 %v1662, %v1662
    %1664 = vmatprep.subr.bf16.mxu0 0
    %1665 = vmatpush1.bf16.msra.mxu0 %v56
    %1666 = vmatprep.subr.bf16.mxu0 0
    %1667 = vmatpush1.bf16.msra.mxu0 %v57
    %1668 = vmatprep.subr.bf16.mxu0 0
    %1669 = vmatpush1.bf16.msra.mxu0 %v58
    %1670 = vmatprep.subr.bf16.mxu0 0
    %1671 = vmatpush1.bf16.msra.mxu0 %v59
    %1672 = vmatprep.subr.bf16.mxu0 0
    %1673 = vmatpush1.bf16.msra.mxu0 %v60
    %1674 = vmatprep.subr.bf16.mxu0 0
    %1675 = vmatpush1.bf16.msra.mxu0 %v61
    %1676 = vmatprep.subr.bf16.mxu0 0
    %1677 = vmatpush1.bf16.msra.mxu0 %v62
    %1678 = vmatprep.subr.bf16.mxu0 0
    %1679 = vmatpush1.bf16.msra.mxu0 %v63
    %1680 = vmatprep.subr.bf16.mxu0 0
    %1681 = vmatpush1.bf16.msra.mxu0 0
    %1682 = vmatprep.subr.bf16.mxu0 0
    %1683 = vmatpush1.bf16.msra.mxu0 0
    %1684 = vmatprep.subr.bf16.mxu0 0
    %1685 = vmatpush1.bf16.msra.mxu0 0
    %1686 = vmatprep.subr.bf16.mxu0 0
    %1687 = vmatpush1.bf16.msra.mxu0 0
    %1688 = vmatprep.subr.bf16.mxu0 0
    %1689 = vmatpush1.bf16.msra.mxu0 0
    %1690 = vmatprep.subr.bf16.mxu0 0
    %1691 = vmatpush1.bf16.msra.mxu0 0
    %1692 = vmatprep.subr.bf16.mxu0 0
    %1693 = vmatpush1.bf16.msra.mxu0 0
    %1694 = vmatprep.subr.bf16.mxu0 0
    %1695 = vmatpush1.bf16.msra.mxu0 0
    %1696 = vmatprep.mubr.bf16.mxu0 0
    %1697 = vmatmul.mubr.bf16.gmra.mrb[0].mxu0 %v1663
    %v1698 = vpop.f32.mrb[0].mxu0
    %v1699 = vadd.f32 0.0, %v1698
    %v1700 = vpop.f32.mrb[0].mxu0
    %v1701 = vpop.f32.mrb[0].mxu0
    %v1702 = vpop.f32.mrb[0].mxu0
    %1703 = vdwg.mxu0
    %v1704 = vmul.f32 %v1699, %v39
    %v1705 = vpack.c.bf16 %v1704, %v1704
    %1706 = vmatprep.subr.bf16.mxu0 0
    %1707 = vmatpush1.bf16.msra.mxu0 %v56
    %1708 = vmatprep.subr.bf16.mxu0 0
    %1709 = vmatpush1.bf16.msra.mxu0 %v57
    %1710 = vmatprep.subr.bf16.mxu0 0
    %1711 = vmatpush1.bf16.msra.mxu0 %v58
    %1712 = vmatprep.subr.bf16.mxu0 0
    %1713 = vmatpush1.bf16.msra.mxu0 %v59
    %1714 = vmatprep.subr.bf16.mxu0 0
    %1715 = vmatpush1.bf16.msra.mxu0 %v60
    %1716 = vmatprep.subr.bf16.mxu0 0
    %1717 = vmatpush1.bf16.msra.mxu0 %v61
    %1718 = vmatprep.subr.bf16.mxu0 0
    %1719 = vmatpush1.bf16.msra.mxu0 %v62
    %1720 = vmatprep.subr.bf16.mxu0 0
    %1721 = vmatpush1.bf16.msra.mxu0 %v63
    %1722 = vmatprep.subr.bf16.mxu0 0
    %1723 = vmatpush1.bf16.msra.mxu0 0
    %1724 = vmatprep.subr.bf16.mxu0 0
    %1725 = vmatpush1.bf16.msra.mxu0 0
    %1726 = vmatprep.subr.bf16.mxu0 0
    %1727 = vmatpush1.bf16.msra.mxu0 0
    %1728 = vmatprep.subr.bf16.mxu0 0
    %1729 = vmatpush1.bf16.msra.mxu0 0
    %1730 = vmatprep.subr.bf16.mxu0 0
    %1731 = vmatpush1.bf16.msra.mxu0 0
    %1732 = vmatprep.subr.bf16.mxu0 0
    %1733 = vmatpush1.bf16.msra.mxu0 0
    %1734 = vmatprep.subr.bf16.mxu0 0
    %1735 = vmatpush1.bf16.msra.mxu0 0
    %1736 = vmatprep.subr.bf16.mxu0 0
    %1737 = vmatpush1.bf16.msra.mxu0 0
    %1738 = vmatprep.mubr.bf16.mxu0 0
    %1739 = vmatmul.mubr.bf16.gmra.mrb[0].mxu0 %v1705
    %v1740 = vpop.f32.mrb[0].mxu0
    %v1741 = vadd.f32 0.0, %v1740
    %v1742 = vpop.f32.mrb[0].mxu0
    %v1743 = vpop.f32.mrb[0].mxu0
    %v1744 = vpop.f32.mrb[0].mxu0
    %1745 = vdwg.mxu0
    %v1746 = vmul.f32 %v1741, %v39
    %v1747 = vpack.c.bf16 %v1746, %v1746
    %1748 = vmatprep.subr.bf16.mxu0 0
    %1749 = vmatpush1.bf16.msra.mxu0 %v56
    %1750 = vmatprep.subr.bf16.mxu0 0
    %1751 = vmatpush1.bf16.msra.mxu0 %v57
    %1752 = vmatprep.subr.bf16.mxu0 0
    %1753 = vmatpush1.bf16.msra.mxu0 %v58
    %1754 = vmatprep.subr.bf16.mxu0 0
    %1755 = vmatpush1.bf16.msra.mxu0 %v59
    %1756 = vmatprep.subr.bf16.mxu0 0
    %1757 = vmatpush1.bf16.msra.mxu0 %v60
    %1758 = vmatprep.subr.bf16.mxu0 0
    %1759 = vmatpush1.bf16.msra.mxu0 %v61
    %1760 = vmatprep.subr.bf16.mxu0 0
    %1761 = vmatpush1.bf16.msra.mxu0 %v62
    %1762 = vmatprep.subr.bf16.mxu0 0
    %1763 = vmatpush1.bf16.msra.mxu0 %v63
    %1764 = vmatprep.subr.bf16.mxu0 0
    %1765 = vmatpush1.bf16.msra.mxu0 0
    %1766 = vmatprep.subr.bf16.mxu0 0
    %1767 = vmatpush1.bf16.msra.mxu0 0
    %1768 = vmatprep.subr.bf16.mxu0 0
    %1769 = vmatpush1.bf16.msra.mxu0 0
    %1770 = vmatprep.subr.bf16.mxu0 0
    %1771 = vmatpush1.bf16.msra.mxu0 0
    %1772 = vmatprep.subr.bf16.mxu0 0
    %1773 = vmatpush1.bf16.msra.mxu0 0
    %1774 = vmatprep.subr.bf16.mxu0 0
    %1775 = vmatpush1.bf16.msra.mxu0 0
    %1776 = vmatprep.subr.bf16.mxu0 0
    %1777 = vmatpush1.bf16.msra.mxu0 0
    %1778 = vmatprep.subr.bf16.mxu0 0
    %1779 = vmatpush1.bf16.msra.mxu0 0
    %1780 = vmatprep.mubr.bf16.mxu0 0
    %1781 = vmatmul.mubr.bf16.gmra.mrb[0].mxu0 %v1747
    %v1782 = vpop.f32.mrb[0].mxu0
    %v1783 = vadd.f32 0.0, %v1782
    %v1784 = vpop.f32.mrb[0].mxu0
    %v1785 = vpop.f32.mrb[0].mxu0
    %v1786 = vpop.f32.mrb[0].mxu0
    %1787 = vdwg.mxu0
    %v1788 = vmul.f32 %v1783, %v39
    %v1789 = vpack.c.bf16 %v1788, %v1788
    %1790 = vmatprep.subr.bf16.mxu0 0
    %1791 = vmatpush1.bf16.msra.mxu0 %v56
    %1792 = vmatprep.subr.bf16.mxu0 0
    %1793 = vmatpush1.bf16.msra.mxu0 %v57
    %1794 = vmatprep.subr.bf16.mxu0 0
    %1795 = vmatpush1.bf16.msra.mxu0 %v58
    %1796 = vmatprep.subr.bf16.mxu0 0
    %1797 = vmatpush1.bf16.msra.mxu0 %v59
    %1798 = vmatprep.subr.bf16.mxu0 0
    %1799 = vmatpush1.bf16.msra.mxu0 %v60
    %1800 = vmatprep.subr.bf16.mxu0 0
    %1801 = vmatpush1.bf16.msra.mxu0 %v61
    %1802 = vmatprep.subr.bf16.mxu0 0
    %1803 = vmatpush1.bf16.msra.mxu0 %v62
    %1804 = vmatprep.subr.bf16.mxu0 0
    %1805 = vmatpush1.bf16.msra.mxu0 %v63
    %1806 = vmatprep.subr.bf16.mxu0 0
    %1807 = vmatpush1.bf16.msra.mxu0 0
    %1808 = vmatprep.subr.bf16.mxu0 0
    %1809 = vmatpush1.bf16.msra.mxu0 0
    %1810 = vmatprep.subr.bf16.mxu0 0
    %1811 = vmatpush1.bf16.msra.mxu0 0
    %1812 = vmatprep.subr.bf16.mxu0 0
    %1813 = vmatpush1.bf16.msra.mxu0 0
    %1814 = vmatprep.subr.bf16.mxu0 0
    %1815 = vmatpush1.bf16.msra.mxu0 0
    %1816 = vmatprep.subr.bf16.mxu0 0
    %1817 = vmatpush1.bf16.msra.mxu0 0
    %1818 = vmatprep.subr.bf16.mxu0 0
    %1819 = vmatpush1.bf16.msra.mxu0 0
    %1820 = vmatprep.subr.bf16.mxu0 0
    %1821 = vmatpush1.bf16.msra.mxu0 0
    %1822 = vmatprep.mubr.bf16.mxu0 0
    %1823 = vmatmul.mubr.bf16.gmra.mrb[0].mxu0 %v1789
    %v1824 = vpop.f32.mrb[0].mxu0
    %v1825 = vadd.f32 0.0, %v1824
    %v1826 = vpop.f32.mrb[0].mxu0
    %v1827 = vpop.f32.mrb[0].mxu0
    %v1828 = vpop.f32.mrb[0].mxu0
    %1829 = vdwg.mxu0
    %v1830 = vmul.f32 %v1825, %v39
    %v1831 = vmul.f32 %v1830, %v1830
    %v1832 = vsel %vm66, %v1831, 0.0
    %1833 = vadd.xlane.f32.xlu0 %v1832
    %v1834 = vpop.xlane.xlu0 %1833
    %v1835 = vrot.slane %v1834, 4
    %v1836 = vadd.f32 %v1834, %v1835
    %v1837 = vrot.slane %v1836, 2
    %v1838 = vadd.f32 %v1836, %v1837
    %v1839 = vrot.slane %v1838, 1
    %v1840 = vadd.f32 %v1838, %v1839
    %s1841 = vtos %v1840
    %s1842 = sadd.f32 %s1841, 1e-30
    %v1843 = vstv %s1842
    %v1844 = vrsqrt.pop %v1843
    %s1845 = vtos %v1844
    %v1846 = vstv %s1845
    %v1847 = vmul.f32 %v1830, %v1846
    %v1848 = vpack.c.bf16 %v1847, %v1847
    %1849 = vmatprep.subr.bf16.mxu0 0
    %1850 = vmatpush1.bf16.msra.mxu0 %v56
    %1851 = vmatprep.subr.bf16.mxu0 0
    %1852 = vmatpush1.bf16.msra.mxu0 %v57
    %1853 = vmatprep.subr.bf16.mxu0 0
    %1854 = vmatpush1.bf16.msra.mxu0 %v58
    %1855 = vmatprep.subr.bf16.mxu0 0
    %1856 = vmatpush1.bf16.msra.mxu0 %v59
    %1857 = vmatprep.subr.bf16.mxu0 0
    %1858 = vmatpush1.bf16.msra.mxu0 %v60
    %1859 = vmatprep.subr.bf16.mxu0 0
    %1860 = vmatpush1.bf16.msra.mxu0 %v61
    %1861 = vmatprep.subr.bf16.mxu0 0
    %1862 = vmatpush1.bf16.msra.mxu0 %v62
    %1863 = vmatprep.subr.bf16.mxu0 0
    %1864 = vmatpush1.bf16.msra.mxu0 %v63
    %1865 = vmatprep.subr.bf16.mxu0 0
    %1866 = vmatpush1.bf16.msra.mxu0 0
    %1867 = vmatprep.subr.bf16.mxu0 0
    %1868 = vmatpush1.bf16.msra.mxu0 0
    %1869 = vmatprep.subr.bf16.mxu0 0
    %1870 = vmatpush1.bf16.msra.mxu0 0
    %1871 = vmatprep.subr.bf16.mxu0 0
    %1872 = vmatpush1.bf16.msra.mxu0 0
    %1873 = vmatprep.subr.bf16.mxu0 0
    %1874 = vmatpush1.bf16.msra.mxu0 0
    %1875 = vmatprep.subr.bf16.mxu0 0
    %1876 = vmatpush1.bf16.msra.mxu0 0
    %1877 = vmatprep.subr.bf16.mxu0 0
    %1878 = vmatpush1.bf16.msra.mxu0 0
    %1879 = vmatprep.subr.bf16.mxu0 0
    %1880 = vmatpush1.bf16.msra.mxu0 0
    %1881 = vmatprep.mubr.bf16.mxu0 0
    %1882 = vmatmul.mubr.bf16.gmra.mrb[0].mxu0 %v1848
    %v1883 = vpop.f32.mrb[0].mxu0
    %v1884 = vadd.f32 0.0, %v1883
    %v1885 = vpop.f32.mrb[0].mxu0
    %v1886 = vpop.f32.mrb[0].mxu0
    %v1887 = vpop.f32.mrb[0].mxu0
    %1888 = vdwg.mxu0
    %v1889 = vmul.f32 %v1884, %v39
    %v1890 = vpack.c.bf16 %v1889, %v1889
    %1891 = vmatprep.subr.bf16.mxu0 0
    %1892 = vmatpush1.bf16.msra.mxu0 %v56
    %1893 = vmatprep.subr.bf16.mxu0 0
    %1894 = vmatpush1.bf16.msra.mxu0 %v57
    %1895 = vmatprep.subr.bf16.mxu0 0
    %1896 = vmatpush1.bf16.msra.mxu0 %v58
    %1897 = vmatprep.subr.bf16.mxu0 0
    %1898 = vmatpush1.bf16.msra.mxu0 %v59
    %1899 = vmatprep.subr.bf16.mxu0 0
    %1900 = vmatpush1.bf16.msra.mxu0 %v60
    %1901 = vmatprep.subr.bf16.mxu0 0
    %1902 = vmatpush1.bf16.msra.mxu0 %v61
    %1903 = vmatprep.subr.bf16.mxu0 0
    %1904 = vmatpush1.bf16.msra.mxu0 %v62
    %1905 = vmatprep.subr.bf16.mxu0 0
    %1906 = vmatpush1.bf16.msra.mxu0 %v63
    %1907 = vmatprep.subr.bf16.mxu0 0
    %1908 = vmatpush1.bf16.msra.mxu0 0
    %1909 = vmatprep.subr.bf16.mxu0 0
    %1910 = vmatpush1.bf16.msra.mxu0 0
    %1911 = vmatprep.subr.bf16.mxu0 0
    %1912 = vmatpush1.bf16.msra.mxu0 0
    %1913 = vmatprep.subr.bf16.mxu0 0
    %1914 = vmatpush1.bf16.msra.mxu0 0
    %1915 = vmatprep.subr.bf16.mxu0 0
    %1916 = vmatpush1.bf16.msra.mxu0 0
    %1917 = vmatprep.subr.bf16.mxu0 0
    %1918 = vmatpush1.bf16.msra.mxu0 0
    %1919 = vmatprep.subr.bf16.mxu0 0
    %1920 = vmatpush1.bf16.msra.mxu0 0
    %1921 = vmatprep.subr.bf16.mxu0 0
    %1922 = vmatpush1.bf16.msra.mxu0 0
    %1923 = vmatprep.mubr.bf16.mxu0 0
    %1924 = vmatmul.mubr.bf16.gmra.mrb[0].mxu0 %v1890
    %v1925 = vpop.f32.mrb[0].mxu0
    %v1926 = vadd.f32 0.0, %v1925
    %v1927 = vpop.f32.mrb[0].mxu0
    %v1928 = vpop.f32.mrb[0].mxu0
    %v1929 = vpop.f32.mrb[0].mxu0
    %1930 = vdwg.mxu0
    %v1931 = vmul.f32 %v1926, %v39
    %v1932 = vpack.c.bf16 %v1931, %v1931
    %1933 = vmatprep.subr.bf16.mxu0 0
    %1934 = vmatpush1.bf16.msra.mxu0 %v56
    %1935 = vmatprep.subr.bf16.mxu0 0
    %1936 = vmatpush1.bf16.msra.mxu0 %v57
    %1937 = vmatprep.subr.bf16.mxu0 0
    %1938 = vmatpush1.bf16.msra.mxu0 %v58
    %1939 = vmatprep.subr.bf16.mxu0 0
    %1940 = vmatpush1.bf16.msra.mxu0 %v59
    %1941 = vmatprep.subr.bf16.mxu0 0
    %1942 = vmatpush1.bf16.msra.mxu0 %v60
    %1943 = vmatprep.subr.bf16.mxu0 0
    %1944 = vmatpush1.bf16.msra.mxu0 %v61
    %1945 = vmatprep.subr.bf16.mxu0 0
    %1946 = vmatpush1.bf16.msra.mxu0 %v62
    %1947 = vmatprep.subr.bf16.mxu0 0
    %1948 = vmatpush1.bf16.msra.mxu0 %v63
    %1949 = vmatprep.subr.bf16.mxu0 0
    %1950 = vmatpush1.bf16.msra.mxu0 0
    %1951 = vmatprep.subr.bf16.mxu0 0
    %1952 = vmatpush1.bf16.msra.mxu0 0
    %1953 = vmatprep.subr.bf16.mxu0 0
    %1954 = vmatpush1.bf16.msra.mxu0 0
    %1955 = vmatprep.subr.bf16.mxu0 0
    %1956 = vmatpush1.bf16.msra.mxu0 0
    %1957 = vmatprep.subr.bf16.mxu0 0
    %1958 = vmatpush1.bf16.msra.mxu0 0
    %1959 = vmatprep.subr.bf16.mxu0 0
    %1960 = vmatpush1.bf16.msra.mxu0 0
    %1961 = vmatprep.subr.bf16.mxu0 0
    %1962 = vmatpush1.bf16.msra.mxu0 0
    %1963 = vmatprep.subr.bf16.mxu0 0
    %1964 = vmatpush1.bf16.msra.mxu0 0
    %1965 = vmatprep.mubr.bf16.mxu0 0
    %1966 = vmatmul.mubr.bf16.gmra.mrb[0].mxu0 %v1932
    %v1967 = vpop.f32.mrb[0].mxu0
    %v1968 = vadd.f32 0.0, %v1967
    %v1969 = vpop.f32.mrb[0].mxu0
    %v1970 = vpop.f32.mrb[0].mxu0
    %v1971 = vpop.f32.mrb[0].mxu0
    %1972 = vdwg.mxu0
    %v1973 = vmul.f32 %v1968, %v39
    %v1974 = vpack.c.bf16 %v1973, %v1973
    %1975 = vmatprep.subr.bf16.mxu0 0
    %1976 = vmatpush1.bf16.msra.mxu0 %v56
    %1977 = vmatprep.subr.bf16.mxu0 0
    %1978 = vmatpush1.bf16.msra.mxu0 %v57
    %1979 = vmatprep.subr.bf16.mxu0 0
    %1980 = vmatpush1.bf16.msra.mxu0 %v58
    %1981 = vmatprep.subr.bf16.mxu0 0
    %1982 = vmatpush1.bf16.msra.mxu0 %v59
    %1983 = vmatprep.subr.bf16.mxu0 0
    %1984 = vmatpush1.bf16.msra.mxu0 %v60
    %1985 = vmatprep.subr.bf16.mxu0 0
    %1986 = vmatpush1.bf16.msra.mxu0 %v61
    %1987 = vmatprep.subr.bf16.mxu0 0
    %1988 = vmatpush1.bf16.msra.mxu0 %v62
    %1989 = vmatprep.subr.bf16.mxu0 0
    %1990 = vmatpush1.bf16.msra.mxu0 %v63
    %1991 = vmatprep.subr.bf16.mxu0 0
    %1992 = vmatpush1.bf16.msra.mxu0 0
    %1993 = vmatprep.subr.bf16.mxu0 0
    %1994 = vmatpush1.bf16.msra.mxu0 0
    %1995 = vmatprep.subr.bf16.mxu0 0
    %1996 = vmatpush1.bf16.msra.mxu0 0
    %1997 = vmatprep.subr.bf16.mxu0 0
    %1998 = vmatpush1.bf16.msra.mxu0 0
    %1999 = vmatprep.subr.bf16.mxu0 0
    %2000 = vmatpush1.bf16.msra.mxu0 0
    %2001 = vmatprep.subr.bf16.mxu0 0
    %2002 = vmatpush1.bf16.msra.mxu0 0
    %2003 = vmatprep.subr.bf16.mxu0 0
    %2004 = vmatpush1.bf16.msra.mxu0 0
    %2005 = vmatprep.subr.bf16.mxu0 0
    %2006 = vmatpush1.bf16.msra.mxu0 0
    %2007 = vmatprep.mubr.bf16.mxu0 0
    %2008 = vmatmul.mubr.bf16.gmra.mrb[0].mxu0 %v1974
    %v2009 = vpop.f32.mrb[0].mxu0
    %v2010 = vadd.f32 0.0, %v2009
    %v2011 = vpop.f32.mrb[0].mxu0
    %v2012 = vpop.f32.mrb[0].mxu0
    %v2013 = vpop.f32.mrb[0].mxu0
    %2014 = vdwg.mxu0
    %v2015 = vmul.f32 %v2010, %v39
    %v2016 = vpack.c.bf16 %v2015, %v2015
    %2017 = vmatprep.subr.bf16.mxu0 0
    %2018 = vmatpush1.bf16.msra.mxu0 %v56
    %2019 = vmatprep.subr.bf16.mxu0 0
    %2020 = vmatpush1.bf16.msra.mxu0 %v57
    %2021 = vmatprep.subr.bf16.mxu0 0
    %2022 = vmatpush1.bf16.msra.mxu0 %v58
    %2023 = vmatprep.subr.bf16.mxu0 0
    %2024 = vmatpush1.bf16.msra.mxu0 %v59
    %2025 = vmatprep.subr.bf16.mxu0 0
    %2026 = vmatpush1.bf16.msra.mxu0 %v60
    %2027 = vmatprep.subr.bf16.mxu0 0
    %2028 = vmatpush1.bf16.msra.mxu0 %v61
    %2029 = vmatprep.subr.bf16.mxu0 0
    %2030 = vmatpush1.bf16.msra.mxu0 %v62
    %2031 = vmatprep.subr.bf16.mxu0 0
    %2032 = vmatpush1.bf16.msra.mxu0 %v63
    %2033 = vmatprep.subr.bf16.mxu0 0
    %2034 = vmatpush1.bf16.msra.mxu0 0
    %2035 = vmatprep.subr.bf16.mxu0 0
    %2036 = vmatpush1.bf16.msra.mxu0 0
    %2037 = vmatprep.subr.bf16.mxu0 0
    %2038 = vmatpush1.bf16.msra.mxu0 0
    %2039 = vmatprep.subr.bf16.mxu0 0
    %2040 = vmatpush1.bf16.msra.mxu0 0
    %2041 = vmatprep.subr.bf16.mxu0 0
    %2042 = vmatpush1.bf16.msra.mxu0 0
    %2043 = vmatprep.subr.bf16.mxu0 0
    %2044 = vmatpush1.bf16.msra.mxu0 0
    %2045 = vmatprep.subr.bf16.mxu0 0
    %2046 = vmatpush1.bf16.msra.mxu0 0
    %2047 = vmatprep.subr.bf16.mxu0 0
    %2048 = vmatpush1.bf16.msra.mxu0 0
    %2049 = vmatprep.mubr.bf16.mxu0 0
    %2050 = vmatmul.mubr.bf16.gmra.mrb[0].mxu0 %v2016
    %v2051 = vpop.f32.mrb[0].mxu0
    %v2052 = vadd.f32 0.0, %v2051
    %v2053 = vpop.f32.mrb[0].mxu0
    %v2054 = vpop.f32.mrb[0].mxu0
    %v2055 = vpop.f32.mrb[0].mxu0
    %2056 = vdwg.mxu0
    %v2057 = vmul.f32 %v2052, %v39
    %v2058 = vpack.c.bf16 %v2057, %v2057
    %2059 = vmatprep.subr.bf16.mxu0 0
    %2060 = vmatpush1.bf16.msra.mxu0 %v56
    %2061 = vmatprep.subr.bf16.mxu0 0
    %2062 = vmatpush1.bf16.msra.mxu0 %v57
    %2063 = vmatprep.subr.bf16.mxu0 0
    %2064 = vmatpush1.bf16.msra.mxu0 %v58
    %2065 = vmatprep.subr.bf16.mxu0 0
    %2066 = vmatpush1.bf16.msra.mxu0 %v59
    %2067 = vmatprep.subr.bf16.mxu0 0
    %2068 = vmatpush1.bf16.msra.mxu0 %v60
    %2069 = vmatprep.subr.bf16.mxu0 0
    %2070 = vmatpush1.bf16.msra.mxu0 %v61
    %2071 = vmatprep.subr.bf16.mxu0 0
    %2072 = vmatpush1.bf16.msra.mxu0 %v62
    %2073 = vmatprep.subr.bf16.mxu0 0
    %2074 = vmatpush1.bf16.msra.mxu0 %v63
    %2075 = vmatprep.subr.bf16.mxu0 0
    %2076 = vmatpush1.bf16.msra.mxu0 0
    %2077 = vmatprep.subr.bf16.mxu0 0
    %2078 = vmatpush1.bf16.msra.mxu0 0
    %2079 = vmatprep.subr.bf16.mxu0 0
    %2080 = vmatpush1.bf16.msra.mxu0 0
    %2081 = vmatprep.subr.bf16.mxu0 0
    %2082 = vmatpush1.bf16.msra.mxu0 0
    %2083 = vmatprep.subr.bf16.mxu0 0
    %2084 = vmatpush1.bf16.msra.mxu0 0
    %2085 = vmatprep.subr.bf16.mxu0 0
    %2086 = vmatpush1.bf16.msra.mxu0 0
    %2087 = vmatprep.subr.bf16.mxu0 0
    %2088 = vmatpush1.bf16.msra.mxu0 0
    %2089 = vmatprep.subr.bf16.mxu0 0
    %2090 = vmatpush1.bf16.msra.mxu0 0
    %2091 = vmatprep.mubr.bf16.mxu0 0
    %2092 = vmatmul.mubr.bf16.gmra.mrb[0].mxu0 %v2058
    %v2093 = vpop.f32.mrb[0].mxu0
    %v2094 = vadd.f32 0.0, %v2093
    %v2095 = vpop.f32.mrb[0].mxu0
    %v2096 = vpop.f32.mrb[0].mxu0
    %v2097 = vpop.f32.mrb[0].mxu0
    %2098 = vdwg.mxu0
    %v2099 = vmul.f32 %v2094, %v39
    %v2100 = vpack.c.bf16 %v2099, %v2099
    %2101 = vmatprep.subr.bf16.mxu0 0
    %2102 = vmatpush1.bf16.msra.mxu0 %v56
    %2103 = vmatprep.subr.bf16.mxu0 0
    %2104 = vmatpush1.bf16.msra.mxu0 %v57
    %2105 = vmatprep.subr.bf16.mxu0 0
    %2106 = vmatpush1.bf16.msra.mxu0 %v58
    %2107 = vmatprep.subr.bf16.mxu0 0
    %2108 = vmatpush1.bf16.msra.mxu0 %v59
    %2109 = vmatprep.subr.bf16.mxu0 0
    %2110 = vmatpush1.bf16.msra.mxu0 %v60
    %2111 = vmatprep.subr.bf16.mxu0 0
    %2112 = vmatpush1.bf16.msra.mxu0 %v61
    %2113 = vmatprep.subr.bf16.mxu0 0
    %2114 = vmatpush1.bf16.msra.mxu0 %v62
    %2115 = vmatprep.subr.bf16.mxu0 0
    %2116 = vmatpush1.bf16.msra.mxu0 %v63
    %2117 = vmatprep.subr.bf16.mxu0 0
    %2118 = vmatpush1.bf16.msra.mxu0 0
    %2119 = vmatprep.subr.bf16.mxu0 0
    %2120 = vmatpush1.bf16.msra.mxu0 0
    %2121 = vmatprep.subr.bf16.mxu0 0
    %2122 = vmatpush1.bf16.msra.mxu0 0
    %2123 = vmatprep.subr.bf16.mxu0 0
    %2124 = vmatpush1.bf16.msra.mxu0 0
    %2125 = vmatprep.subr.bf16.mxu0 0
    %2126 = vmatpush1.bf16.msra.mxu0 0
    %2127 = vmatprep.subr.bf16.mxu0 0
    %2128 = vmatpush1.bf16.msra.mxu0 0
    %2129 = vmatprep.subr.bf16.mxu0 0
    %2130 = vmatpush1.bf16.msra.mxu0 0
    %2131 = vmatprep.subr.bf16.mxu0 0
    %2132 = vmatpush1.bf16.msra.mxu0 0
    %2133 = vmatprep.mubr.bf16.mxu0 0
    %2134 = vmatmul.mubr.bf16.gmra.mrb[0].mxu0 %v2100
    %v2135 = vpop.f32.mrb[0].mxu0
    %v2136 = vadd.f32 0.0, %v2135
    %v2137 = vpop.f32.mrb[0].mxu0
    %v2138 = vpop.f32.mrb[0].mxu0
    %v2139 = vpop.f32.mrb[0].mxu0
    %2140 = vdwg.mxu0
    %v2141 = vmul.f32 %v2136, %v39
    %v2142 = vpack.c.bf16 %v2141, %v2141
    %2143 = vmatprep.subr.bf16.mxu0 0
    %2144 = vmatpush1.bf16.msra.mxu0 %v56
    %2145 = vmatprep.subr.bf16.mxu0 0
    %2146 = vmatpush1.bf16.msra.mxu0 %v57
    %2147 = vmatprep.subr.bf16.mxu0 0
    %2148 = vmatpush1.bf16.msra.mxu0 %v58
    %2149 = vmatprep.subr.bf16.mxu0 0
    %2150 = vmatpush1.bf16.msra.mxu0 %v59
    %2151 = vmatprep.subr.bf16.mxu0 0
    %2152 = vmatpush1.bf16.msra.mxu0 %v60
    %2153 = vmatprep.subr.bf16.mxu0 0
    %2154 = vmatpush1.bf16.msra.mxu0 %v61
    %2155 = vmatprep.subr.bf16.mxu0 0
    %2156 = vmatpush1.bf16.msra.mxu0 %v62
    %2157 = vmatprep.subr.bf16.mxu0 0
    %2158 = vmatpush1.bf16.msra.mxu0 %v63
    %2159 = vmatprep.subr.bf16.mxu0 0
    %2160 = vmatpush1.bf16.msra.mxu0 0
    %2161 = vmatprep.subr.bf16.mxu0 0
    %2162 = vmatpush1.bf16.msra.mxu0 0
    %2163 = vmatprep.subr.bf16.mxu0 0
    %2164 = vmatpush1.bf16.msra.mxu0 0
    %2165 = vmatprep.subr.bf16.mxu0 0
    %2166 = vmatpush1.bf16.msra.mxu0 0
    %2167 = vmatprep.subr.bf16.mxu0 0
    %2168 = vmatpush1.bf16.msra.mxu0 0
    %2169 = vmatprep.subr.bf16.mxu0 0
    %2170 = vmatpush1.bf16.msra.mxu0 0
    %2171 = vmatprep.subr.bf16.mxu0 0
    %2172 = vmatpush1.bf16.msra.mxu0 0
    %2173 = vmatprep.subr.bf16.mxu0 0
    %2174 = vmatpush1.bf16.msra.mxu0 0
    %2175 = vmatprep.mubr.bf16.mxu0 0
    %2176 = vmatmul.mubr.bf16.gmra.mrb[0].mxu0 %v2142
    %v2177 = vpop.f32.mrb[0].mxu0
    %v2178 = vadd.f32 0.0, %v2177
    %v2179 = vpop.f32.mrb[0].mxu0
    %v2180 = vpop.f32.mrb[0].mxu0
    %v2181 = vpop.f32.mrb[0].mxu0
    %2182 = vdwg.mxu0
    %v2183 = vmul.f32 %v2178, %v39
    %v2184 = vmul.f32 %v2183, %v2183
    %v2185 = vsel %vm66, %v2184, 0.0
    %2186 = vadd.xlane.f32.xlu0 %v2185
    %v2187 = vpop.xlane.xlu0 %2186
    %v2188 = vrot.slane %v2187, 4
    %v2189 = vadd.f32 %v2187, %v2188
    %v2190 = vrot.slane %v2189, 2
    %v2191 = vadd.f32 %v2189, %v2190
    %v2192 = vrot.slane %v2191, 1
    %v2193 = vadd.f32 %v2191, %v2192
    %s2194 = vtos %v2193
    %s2195 = sadd.f32 %s2194, 1e-30
    %v2196 = vstv %s2195
    %v2197 = vrsqrt.pop %v2196
    %s2198 = vtos %v2197
    %v2199 = vstv %s2198
    %v2200 = vmul.f32 %v2183, %v2199
    %v2201 = vpack.c.bf16 %v2200, %v2200
    %2202 = vmatprep.subr.bf16.mxu0 0
    %2203 = vmatpush1.bf16.msra.mxu0 %v56
    %2204 = vmatprep.subr.bf16.mxu0 0
    %2205 = vmatpush1.bf16.msra.mxu0 %v57
    %2206 = vmatprep.subr.bf16.mxu0 0
    %2207 = vmatpush1.bf16.msra.mxu0 %v58
    %2208 = vmatprep.subr.bf16.mxu0 0
    %2209 = vmatpush1.bf16.msra.mxu0 %v59
    %2210 = vmatprep.subr.bf16.mxu0 0
    %2211 = vmatpush1.bf16.msra.mxu0 %v60
    %2212 = vmatprep.subr.bf16.mxu0 0
    %2213 = vmatpush1.bf16.msra.mxu0 %v61
    %2214 = vmatprep.subr.bf16.mxu0 0
    %2215 = vmatpush1.bf16.msra.mxu0 %v62
    %2216 = vmatprep.subr.bf16.mxu0 0
    %2217 = vmatpush1.bf16.msra.mxu0 %v63
    %2218 = vmatprep.subr.bf16.mxu0 0
    %2219 = vmatpush1.bf16.msra.mxu0 0
    %2220 = vmatprep.subr.bf16.mxu0 0
    %2221 = vmatpush1.bf16.msra.mxu0 0
    %2222 = vmatprep.subr.bf16.mxu0 0
    %2223 = vmatpush1.bf16.msra.mxu0 0
    %2224 = vmatprep.subr.bf16.mxu0 0
    %2225 = vmatpush1.bf16.msra.mxu0 0
    %2226 = vmatprep.subr.bf16.mxu0 0
    %2227 = vmatpush1.bf16.msra.mxu0 0
    %2228 = vmatprep.subr.bf16.mxu0 0
    %2229 = vmatpush1.bf16.msra.mxu0 0
    %2230 = vmatprep.subr.bf16.mxu0 0
    %2231 = vmatpush1.bf16.msra.mxu0 0
    %2232 = vmatprep.subr.bf16.mxu0 0
    %2233 = vmatpush1.bf16.msra.mxu0 0
    %2234 = vmatprep.mubr.bf16.mxu0 0
    %2235 = vmatmul.mubr.bf16.gmra.mrb[0].mxu0 %v2201
    %v2236 = vpop.f32.mrb[0].mxu0
    %v2237 = vadd.f32 0.0, %v2236
    %v2238 = vpop.f32.mrb[0].mxu0
    %v2239 = vpop.f32.mrb[0].mxu0
    %v2240 = vpop.f32.mrb[0].mxu0
    %2241 = vdwg.mxu0
    %v2242 = vmul.f32 %v2237, %v39
    %v2243 = vpack.c.bf16 %v2242, %v2242
    %2244 = vmatprep.subr.bf16.mxu0 0
    %2245 = vmatpush1.bf16.msra.mxu0 %v56
    %2246 = vmatprep.subr.bf16.mxu0 0
    %2247 = vmatpush1.bf16.msra.mxu0 %v57
    %2248 = vmatprep.subr.bf16.mxu0 0
    %2249 = vmatpush1.bf16.msra.mxu0 %v58
    %2250 = vmatprep.subr.bf16.mxu0 0
    %2251 = vmatpush1.bf16.msra.mxu0 %v59
    %2252 = vmatprep.subr.bf16.mxu0 0
    %2253 = vmatpush1.bf16.msra.mxu0 %v60
    %2254 = vmatprep.subr.bf16.mxu0 0
    %2255 = vmatpush1.bf16.msra.mxu0 %v61
    %2256 = vmatprep.subr.bf16.mxu0 0
    %2257 = vmatpush1.bf16.msra.mxu0 %v62
    %2258 = vmatprep.subr.bf16.mxu0 0
    %2259 = vmatpush1.bf16.msra.mxu0 %v63
    %2260 = vmatprep.subr.bf16.mxu0 0
    %2261 = vmatpush1.bf16.msra.mxu0 0
    %2262 = vmatprep.subr.bf16.mxu0 0
    %2263 = vmatpush1.bf16.msra.mxu0 0
    %2264 = vmatprep.subr.bf16.mxu0 0
    %2265 = vmatpush1.bf16.msra.mxu0 0
    %2266 = vmatprep.subr.bf16.mxu0 0
    %2267 = vmatpush1.bf16.msra.mxu0 0
    %2268 = vmatprep.subr.bf16.mxu0 0
    %2269 = vmatpush1.bf16.msra.mxu0 0
    %2270 = vmatprep.subr.bf16.mxu0 0
    %2271 = vmatpush1.bf16.msra.mxu0 0
    %2272 = vmatprep.subr.bf16.mxu0 0
    %2273 = vmatpush1.bf16.msra.mxu0 0
    %2274 = vmatprep.subr.bf16.mxu0 0
    %2275 = vmatpush1.bf16.msra.mxu0 0
    %2276 = vmatprep.mubr.bf16.mxu0 0
    %2277 = vmatmul.mubr.bf16.gmra.mrb[0].mxu0 %v2243
    %v2278 = vpop.f32.mrb[0].mxu0
    %v2279 = vadd.f32 0.0, %v2278
    %v2280 = vpop.f32.mrb[0].mxu0
    %v2281 = vpop.f32.mrb[0].mxu0
    %v2282 = vpop.f32.mrb[0].mxu0
    %2283 = vdwg.mxu0
    %v2284 = vmul.f32 %v2279, %v39
    %v2285 = vpack.c.bf16 %v2284, %v2284
    %2286 = vmatprep.subr.bf16.mxu0 0
    %2287 = vmatpush1.bf16.msra.mxu0 %v56
    %2288 = vmatprep.subr.bf16.mxu0 0
    %2289 = vmatpush1.bf16.msra.mxu0 %v57
    %2290 = vmatprep.subr.bf16.mxu0 0
    %2291 = vmatpush1.bf16.msra.mxu0 %v58
    %2292 = vmatprep.subr.bf16.mxu0 0
    %2293 = vmatpush1.bf16.msra.mxu0 %v59
    %2294 = vmatprep.subr.bf16.mxu0 0
    %2295 = vmatpush1.bf16.msra.mxu0 %v60
    %2296 = vmatprep.subr.bf16.mxu0 0
    %2297 = vmatpush1.bf16.msra.mxu0 %v61
    %2298 = vmatprep.subr.bf16.mxu0 0
    %2299 = vmatpush1.bf16.msra.mxu0 %v62
    %2300 = vmatprep.subr.bf16.mxu0 0
    %2301 = vmatpush1.bf16.msra.mxu0 %v63
    %2302 = vmatprep.subr.bf16.mxu0 0
    %2303 = vmatpush1.bf16.msra.mxu0 0
    %2304 = vmatprep.subr.bf16.mxu0 0
    %2305 = vmatpush1.bf16.msra.mxu0 0
    %2306 = vmatprep.subr.bf16.mxu0 0
    %2307 = vmatpush1.bf16.msra.mxu0 0
    %2308 = vmatprep.subr.bf16.mxu0 0
    %2309 = vmatpush1.bf16.msra.mxu0 0
    %2310 = vmatprep.subr.bf16.mxu0 0
    %2311 = vmatpush1.bf16.msra.mxu0 0
    %2312 = vmatprep.subr.bf16.mxu0 0
    %2313 = vmatpush1.bf16.msra.mxu0 0
    %2314 = vmatprep.subr.bf16.mxu0 0
    %2315 = vmatpush1.bf16.msra.mxu0 0
    %2316 = vmatprep.subr.bf16.mxu0 0
    %2317 = vmatpush1.bf16.msra.mxu0 0
    %2318 = vmatprep.mubr.bf16.mxu0 0
    %2319 = vmatmul.mubr.bf16.gmra.mrb[0].mxu0 %v2285
    %v2320 = vpop.f32.mrb[0].mxu0
    %v2321 = vadd.f32 0.0, %v2320
    %v2322 = vpop.f32.mrb[0].mxu0
    %v2323 = vpop.f32.mrb[0].mxu0
    %v2324 = vpop.f32.mrb[0].mxu0
    %2325 = vdwg.mxu0
    %v2326 = vmul.f32 %v2321, %v39
    %v2327 = vpack.c.bf16 %v2326, %v2326
    %2328 = vmatprep.subr.bf16.mxu0 0
    %2329 = vmatpush1.bf16.msra.mxu0 %v56
    %2330 = vmatprep.subr.bf16.mxu0 0
    %2331 = vmatpush1.bf16.msra.mxu0 %v57
    %2332 = vmatprep.subr.bf16.mxu0 0
    %2333 = vmatpush1.bf16.msra.mxu0 %v58
    %2334 = vmatprep.subr.bf16.mxu0 0
    %2335 = vmatpush1.bf16.msra.mxu0 %v59
    %2336 = vmatprep.subr.bf16.mxu0 0
    %2337 = vmatpush1.bf16.msra.mxu0 %v60
    %2338 = vmatprep.subr.bf16.mxu0 0
    %2339 = vmatpush1.bf16.msra.mxu0 %v61
    %2340 = vmatprep.subr.bf16.mxu0 0
    %2341 = vmatpush1.bf16.msra.mxu0 %v62
    %2342 = vmatprep.subr.bf16.mxu0 0
    %2343 = vmatpush1.bf16.msra.mxu0 %v63
    %2344 = vmatprep.subr.bf16.mxu0 0
    %2345 = vmatpush1.bf16.msra.mxu0 0
    %2346 = vmatprep.subr.bf16.mxu0 0
    %2347 = vmatpush1.bf16.msra.mxu0 0
    %2348 = vmatprep.subr.bf16.mxu0 0
    %2349 = vmatpush1.bf16.msra.mxu0 0
    %2350 = vmatprep.subr.bf16.mxu0 0
    %2351 = vmatpush1.bf16.msra.mxu0 0
    %2352 = vmatprep.subr.bf16.mxu0 0
    %2353 = vmatpush1.bf16.msra.mxu0 0
    %2354 = vmatprep.subr.bf16.mxu0 0
    %2355 = vmatpush1.bf16.msra.mxu0 0
    %2356 = vmatprep.subr.bf16.mxu0 0
    %2357 = vmatpush1.bf16.msra.mxu0 0
    %2358 = vmatprep.subr.bf16.mxu0 0
    %2359 = vmatpush1.bf16.msra.mxu0 0
    %2360 = vmatprep.mubr.bf16.mxu0 0
    %2361 = vmatmul.mubr.bf16.gmra.mrb[0].mxu0 %v2327
    %v2362 = vpop.f32.mrb[0].mxu0
    %v2363 = vadd.f32 0.0, %v2362
    %v2364 = vpop.f32.mrb[0].mxu0
    %v2365 = vpop.f32.mrb[0].mxu0
    %v2366 = vpop.f32.mrb[0].mxu0
    %2367 = vdwg.mxu0
    %v2368 = vmul.f32 %v2363, %v39
    %v2369 = vpack.c.bf16 %v2368, %v2368
    %2370 = vmatprep.subr.bf16.mxu0 0
    %2371 = vmatpush1.bf16.msra.mxu0 %v56
    %2372 = vmatprep.subr.bf16.mxu0 0
    %2373 = vmatpush1.bf16.msra.mxu0 %v57
    %2374 = vmatprep.subr.bf16.mxu0 0
    %2375 = vmatpush1.bf16.msra.mxu0 %v58
    %2376 = vmatprep.subr.bf16.mxu0 0
    %2377 = vmatpush1.bf16.msra.mxu0 %v59
    %2378 = vmatprep.subr.bf16.mxu0 0
    %2379 = vmatpush1.bf16.msra.mxu0 %v60
    %2380 = vmatprep.subr.bf16.mxu0 0
    %2381 = vmatpush1.bf16.msra.mxu0 %v61
    %2382 = vmatprep.subr.bf16.mxu0 0
    %2383 = vmatpush1.bf16.msra.mxu0 %v62
    %2384 = vmatprep.subr.bf16.mxu0 0
    %2385 = vmatpush1.bf16.msra.mxu0 %v63
    %2386 = vmatprep.subr.bf16.mxu0 0
    %2387 = vmatpush1.bf16.msra.mxu0 0
    %2388 = vmatprep.subr.bf16.mxu0 0
    %2389 = vmatpush1.bf16.msra.mxu0 0
    %2390 = vmatprep.subr.bf16.mxu0 0
    %2391 = vmatpush1.bf16.msra.mxu0 0
    %2392 = vmatprep.subr.bf16.mxu0 0
    %2393 = vmatpush1.bf16.msra.mxu0 0
    %2394 = vmatprep.subr.bf16.mxu0 0
    %2395 = vmatpush1.bf16.msra.mxu0 0
    %2396 = vmatprep.subr.bf16.mxu0 0
    %2397 = vmatpush1.bf16.msra.mxu0 0
    %2398 = vmatprep.subr.bf16.mxu0 0
    %2399 = vmatpush1.bf16.msra.mxu0 0
    %2400 = vmatprep.subr.bf16.mxu0 0
    %2401 = vmatpush1.bf16.msra.mxu0 0
    %2402 = vmatprep.mubr.bf16.mxu0 0
    %2403 = vmatmul.mubr.bf16.gmra.mrb[0].mxu0 %v2369
    %v2404 = vpop.f32.mrb[0].mxu0
    %v2405 = vadd.f32 0.0, %v2404
    %v2406 = vpop.f32.mrb[0].mxu0
    %v2407 = vpop.f32.mrb[0].mxu0
    %v2408 = vpop.f32.mrb[0].mxu0
    %2409 = vdwg.mxu0
    %v2410 = vmul.f32 %v2405, %v39
    %v2411 = vpack.c.bf16 %v2410, %v2410
    %2412 = vmatprep.subr.bf16.mxu0 0
    %2413 = vmatpush1.bf16.msra.mxu0 %v56
    %2414 = vmatprep.subr.bf16.mxu0 0
    %2415 = vmatpush1.bf16.msra.mxu0 %v57
    %2416 = vmatprep.subr.bf16.mxu0 0
    %2417 = vmatpush1.bf16.msra.mxu0 %v58
    %2418 = vmatprep.subr.bf16.mxu0 0
    %2419 = vmatpush1.bf16.msra.mxu0 %v59
    %2420 = vmatprep.subr.bf16.mxu0 0
    %2421 = vmatpush1.bf16.msra.mxu0 %v60
    %2422 = vmatprep.subr.bf16.mxu0 0
    %2423 = vmatpush1.bf16.msra.mxu0 %v61
    %2424 = vmatprep.subr.bf16.mxu0 0
    %2425 = vmatpush1.bf16.msra.mxu0 %v62
    %2426 = vmatprep.subr.bf16.mxu0 0
    %2427 = vmatpush1.bf16.msra.mxu0 %v63
    %2428 = vmatprep.subr.bf16.mxu0 0
    %2429 = vmatpush1.bf16.msra.mxu0 0
    %2430 = vmatprep.subr.bf16.mxu0 0
    %2431 = vmatpush1.bf16.msra.mxu0 0
    %2432 = vmatprep.subr.bf16.mxu0 0
    %2433 = vmatpush1.bf16.msra.mxu0 0
    %2434 = vmatprep.subr.bf16.mxu0 0
    %2435 = vmatpush1.bf16.msra.mxu0 0
    %2436 = vmatprep.subr.bf16.mxu0 0
    %2437 = vmatpush1.bf16.msra.mxu0 0
    %2438 = vmatprep.subr.bf16.mxu0 0
    %2439 = vmatpush1.bf16.msra.mxu0 0
    %2440 = vmatprep.subr.bf16.mxu0 0
    %2441 = vmatpush1.bf16.msra.mxu0 0
    %2442 = vmatprep.subr.bf16.mxu0 0
    %2443 = vmatpush1.bf16.msra.mxu0 0
    %2444 = vmatprep.mubr.bf16.mxu0 0
    %2445 = vmatmul.mubr.bf16.gmra.mrb[0].mxu0 %v2411
    %v2446 = vpop.f32.mrb[0].mxu0
    %v2447 = vadd.f32 0.0, %v2446
    %v2448 = vpop.f32.mrb[0].mxu0
    %v2449 = vpop.f32.mrb[0].mxu0
    %v2450 = vpop.f32.mrb[0].mxu0
    %2451 = vdwg.mxu0
    %v2452 = vmul.f32 %v2447, %v39
    %v2453 = vpack.c.bf16 %v2452, %v2452
    %2454 = vmatprep.subr.bf16.mxu0 0
    %2455 = vmatpush1.bf16.msra.mxu0 %v56
    %2456 = vmatprep.subr.bf16.mxu0 0
    %2457 = vmatpush1.bf16.msra.mxu0 %v57
    %2458 = vmatprep.subr.bf16.mxu0 0
    %2459 = vmatpush1.bf16.msra.mxu0 %v58
    %2460 = vmatprep.subr.bf16.mxu0 0
    %2461 = vmatpush1.bf16.msra.mxu0 %v59
    %2462 = vmatprep.subr.bf16.mxu0 0
    %2463 = vmatpush1.bf16.msra.mxu0 %v60
    %2464 = vmatprep.subr.bf16.mxu0 0
    %2465 = vmatpush1.bf16.msra.mxu0 %v61
    %2466 = vmatprep.subr.bf16.mxu0 0
    %2467 = vmatpush1.bf16.msra.mxu0 %v62
    %2468 = vmatprep.subr.bf16.mxu0 0
    %2469 = vmatpush1.bf16.msra.mxu0 %v63
    %2470 = vmatprep.subr.bf16.mxu0 0
    %2471 = vmatpush1.bf16.msra.mxu0 0
    %2472 = vmatprep.subr.bf16.mxu0 0
    %2473 = vmatpush1.bf16.msra.mxu0 0
    %2474 = vmatprep.subr.bf16.mxu0 0
    %2475 = vmatpush1.bf16.msra.mxu0 0
    %2476 = vmatprep.subr.bf16.mxu0 0
    %2477 = vmatpush1.bf16.msra.mxu0 0
    %2478 = vmatprep.subr.bf16.mxu0 0
    %2479 = vmatpush1.bf16.msra.mxu0 0
    %2480 = vmatprep.subr.bf16.mxu0 0
    %2481 = vmatpush1.bf16.msra.mxu0 0
    %2482 = vmatprep.subr.bf16.mxu0 0
    %2483 = vmatpush1.bf16.msra.mxu0 0
    %2484 = vmatprep.subr.bf16.mxu0 0
    %2485 = vmatpush1.bf16.msra.mxu0 0
    %2486 = vmatprep.mubr.bf16.mxu0 0
    %2487 = vmatmul.mubr.bf16.gmra.mrb[0].mxu0 %v2453
    %v2488 = vpop.f32.mrb[0].mxu0
    %v2489 = vadd.f32 0.0, %v2488
    %v2490 = vpop.f32.mrb[0].mxu0
    %v2491 = vpop.f32.mrb[0].mxu0
    %v2492 = vpop.f32.mrb[0].mxu0
    %2493 = vdwg.mxu0
    %v2494 = vmul.f32 %v2489, %v39
    %v2495 = vpack.c.bf16 %v2494, %v2494
    %2496 = vmatprep.subr.bf16.mxu0 0
    %2497 = vmatpush1.bf16.msra.mxu0 %v56
    %2498 = vmatprep.subr.bf16.mxu0 0
    %2499 = vmatpush1.bf16.msra.mxu0 %v57
    %2500 = vmatprep.subr.bf16.mxu0 0
    %2501 = vmatpush1.bf16.msra.mxu0 %v58
    %2502 = vmatprep.subr.bf16.mxu0 0
    %2503 = vmatpush1.bf16.msra.mxu0 %v59
    %2504 = vmatprep.subr.bf16.mxu0 0
    %2505 = vmatpush1.bf16.msra.mxu0 %v60
    %2506 = vmatprep.subr.bf16.mxu0 0
    %2507 = vmatpush1.bf16.msra.mxu0 %v61
    %2508 = vmatprep.subr.bf16.mxu0 0
    %2509 = vmatpush1.bf16.msra.mxu0 %v62
    %2510 = vmatprep.subr.bf16.mxu0 0
    %2511 = vmatpush1.bf16.msra.mxu0 %v63
    %2512 = vmatprep.subr.bf16.mxu0 0
    %2513 = vmatpush1.bf16.msra.mxu0 0
    %2514 = vmatprep.subr.bf16.mxu0 0
    %2515 = vmatpush1.bf16.msra.mxu0 0
    %2516 = vmatprep.subr.bf16.mxu0 0
    %2517 = vmatpush1.bf16.msra.mxu0 0
    %2518 = vmatprep.subr.bf16.mxu0 0
    %2519 = vmatpush1.bf16.msra.mxu0 0
    %2520 = vmatprep.subr.bf16.mxu0 0
    %2521 = vmatpush1.bf16.msra.mxu0 0
    %2522 = vmatprep.subr.bf16.mxu0 0
    %2523 = vmatpush1.bf16.msra.mxu0 0
    %2524 = vmatprep.subr.bf16.mxu0 0
    %2525 = vmatpush1.bf16.msra.mxu0 0
    %2526 = vmatprep.subr.bf16.mxu0 0
    %2527 = vmatpush1.bf16.msra.mxu0 0
    %2528 = vmatprep.mubr.bf16.mxu0 0
    %2529 = vmatmul.mubr.bf16.gmra.mrb[0].mxu0 %v2495
    %v2530 = vpop.f32.mrb[0].mxu0
    %v2531 = vadd.f32 0.0, %v2530
    %v2532 = vpop.f32.mrb[0].mxu0
    %v2533 = vpop.f32.mrb[0].mxu0
    %v2534 = vpop.f32.mrb[0].mxu0
    %2535 = vdwg.mxu0
    %v2536 = vmul.f32 %v2531, %v39
    %v2537 = vmul.f32 %v2536, %v2536
    %v2538 = vsel %vm66, %v2537, 0.0
    %2539 = vadd.xlane.f32.xlu0 %v2538
    %v2540 = vpop.xlane.xlu0 %2539
    %v2541 = vrot.slane %v2540, 4
    %v2542 = vadd.f32 %v2540, %v2541
    %v2543 = vrot.slane %v2542, 2
    %v2544 = vadd.f32 %v2542, %v2543
    %v2545 = vrot.slane %v2544, 1
    %v2546 = vadd.f32 %v2544, %v2545
    %s2547 = vtos %v2546
    %s2548 = sadd.f32 %s2547, 1e-30
    %v2549 = vstv %s2548
    %v2550 = vrsqrt.pop %v2549
    %s2551 = vtos %v2550
    %v2552 = vstv %s2551
    %v2553 = vmul.f32 %v2536, %v2552
    %v2554 = vpack.c.bf16 %v2553, %v2553
    %2555 = vmatprep.subr.bf16.mxu0 0
    %2556 = vmatpush1.bf16.msra.mxu0 %v56
    %2557 = vmatprep.subr.bf16.mxu0 0
    %2558 = vmatpush1.bf16.msra.mxu0 %v57
    %2559 = vmatprep.subr.bf16.mxu0 0
    %2560 = vmatpush1.bf16.msra.mxu0 %v58
    %2561 = vmatprep.subr.bf16.mxu0 0
    %2562 = vmatpush1.bf16.msra.mxu0 %v59
    %2563 = vmatprep.subr.bf16.mxu0 0
    %2564 = vmatpush1.bf16.msra.mxu0 %v60
    %2565 = vmatprep.subr.bf16.mxu0 0
    %2566 = vmatpush1.bf16.msra.mxu0 %v61
    %2567 = vmatprep.subr.bf16.mxu0 0
    %2568 = vmatpush1.bf16.msra.mxu0 %v62
    %2569 = vmatprep.subr.bf16.mxu0 0
    %2570 = vmatpush1.bf16.msra.mxu0 %v63
    %2571 = vmatprep.subr.bf16.mxu0 0
    %2572 = vmatpush1.bf16.msra.mxu0 0
    %2573 = vmatprep.subr.bf16.mxu0 0
    %2574 = vmatpush1.bf16.msra.mxu0 0
    %2575 = vmatprep.subr.bf16.mxu0 0
    %2576 = vmatpush1.bf16.msra.mxu0 0
    %2577 = vmatprep.subr.bf16.mxu0 0
    %2578 = vmatpush1.bf16.msra.mxu0 0
    %2579 = vmatprep.subr.bf16.mxu0 0
    %2580 = vmatpush1.bf16.msra.mxu0 0
    %2581 = vmatprep.subr.bf16.mxu0 0
    %2582 = vmatpush1.bf16.msra.mxu0 0
    %2583 = vmatprep.subr.bf16.mxu0 0
    %2584 = vmatpush1.bf16.msra.mxu0 0
    %2585 = vmatprep.subr.bf16.mxu0 0
    %2586 = vmatpush1.bf16.msra.mxu0 0
    %2587 = vmatprep.mubr.bf16.mxu0 0
    %2588 = vmatmul.mubr.bf16.gmra.mrb[0].mxu0 %v2554
    %v2589 = vpop.f32.mrb[0].mxu0
    %v2590 = vadd.f32 0.0, %v2589
    %v2591 = vpop.f32.mrb[0].mxu0
    %v2592 = vpop.f32.mrb[0].mxu0
    %v2593 = vpop.f32.mrb[0].mxu0
    %2594 = vdwg.mxu0
    %v2595 = vmul.f32 %v2590, %v39
    %v2596 = vpack.c.bf16 %v2595, %v2595
    %2597 = vmatprep.subr.bf16.mxu0 0
    %2598 = vmatpush1.bf16.msra.mxu0 %v56
    %2599 = vmatprep.subr.bf16.mxu0 0
    %2600 = vmatpush1.bf16.msra.mxu0 %v57
    %2601 = vmatprep.subr.bf16.mxu0 0
    %2602 = vmatpush1.bf16.msra.mxu0 %v58
    %2603 = vmatprep.subr.bf16.mxu0 0
    %2604 = vmatpush1.bf16.msra.mxu0 %v59
    %2605 = vmatprep.subr.bf16.mxu0 0
    %2606 = vmatpush1.bf16.msra.mxu0 %v60
    %2607 = vmatprep.subr.bf16.mxu0 0
    %2608 = vmatpush1.bf16.msra.mxu0 %v61
    %2609 = vmatprep.subr.bf16.mxu0 0
    %2610 = vmatpush1.bf16.msra.mxu0 %v62
    %2611 = vmatprep.subr.bf16.mxu0 0
    %2612 = vmatpush1.bf16.msra.mxu0 %v63
    %2613 = vmatprep.subr.bf16.mxu0 0
    %2614 = vmatpush1.bf16.msra.mxu0 0
    %2615 = vmatprep.subr.bf16.mxu0 0
    %2616 = vmatpush1.bf16.msra.mxu0 0
    %2617 = vmatprep.subr.bf16.mxu0 0
    %2618 = vmatpush1.bf16.msra.mxu0 0
    %2619 = vmatprep.subr.bf16.mxu0 0
    %2620 = vmatpush1.bf16.msra.mxu0 0
    %2621 = vmatprep.subr.bf16.mxu0 0
    %2622 = vmatpush1.bf16.msra.mxu0 0
    %2623 = vmatprep.subr.bf16.mxu0 0
    %2624 = vmatpush1.bf16.msra.mxu0 0
    %2625 = vmatprep.subr.bf16.mxu0 0
    %2626 = vmatpush1.bf16.msra.mxu0 0
    %2627 = vmatprep.subr.bf16.mxu0 0
    %2628 = vmatpush1.bf16.msra.mxu0 0
    %2629 = vmatprep.mubr.bf16.mxu0 0
    %2630 = vmatmul.mubr.bf16.gmra.mrb[0].mxu0 %v2596
    %v2631 = vpop.f32.mrb[0].mxu0
    %v2632 = vadd.f32 0.0, %v2631
    %v2633 = vpop.f32.mrb[0].mxu0
    %v2634 = vpop.f32.mrb[0].mxu0
    %v2635 = vpop.f32.mrb[0].mxu0
    %2636 = vdwg.mxu0
    %v2637 = vmul.f32 %v2632, %v39
    %v2638 = vpack.c.bf16 %v2637, %v2637
    %2639 = vmatprep.subr.bf16.mxu0 0
    %2640 = vmatpush1.bf16.msra.mxu0 %v56
    %2641 = vmatprep.subr.bf16.mxu0 0
    %2642 = vmatpush1.bf16.msra.mxu0 %v57
    %2643 = vmatprep.subr.bf16.mxu0 0
    %2644 = vmatpush1.bf16.msra.mxu0 %v58
    %2645 = vmatprep.subr.bf16.mxu0 0
    %2646 = vmatpush1.bf16.msra.mxu0 %v59
    %2647 = vmatprep.subr.bf16.mxu0 0
    %2648 = vmatpush1.bf16.msra.mxu0 %v60
    %2649 = vmatprep.subr.bf16.mxu0 0
    %2650 = vmatpush1.bf16.msra.mxu0 %v61
    %2651 = vmatprep.subr.bf16.mxu0 0
    %2652 = vmatpush1.bf16.msra.mxu0 %v62
    %2653 = vmatprep.subr.bf16.mxu0 0
    %2654 = vmatpush1.bf16.msra.mxu0 %v63
    %2655 = vmatprep.subr.bf16.mxu0 0
    %2656 = vmatpush1.bf16.msra.mxu0 0
    %2657 = vmatprep.subr.bf16.mxu0 0
    %2658 = vmatpush1.bf16.msra.mxu0 0
    %2659 = vmatprep.subr.bf16.mxu0 0
    %2660 = vmatpush1.bf16.msra.mxu0 0
    %2661 = vmatprep.subr.bf16.mxu0 0
    %2662 = vmatpush1.bf16.msra.mxu0 0
    %2663 = vmatprep.subr.bf16.mxu0 0
    %2664 = vmatpush1.bf16.msra.mxu0 0
    %2665 = vmatprep.subr.bf16.mxu0 0
    %2666 = vmatpush1.bf16.msra.mxu0 0
    %2667 = vmatprep.subr.bf16.mxu0 0
    %2668 = vmatpush1.bf16.msra.mxu0 0
    %2669 = vmatprep.subr.bf16.mxu0 0
    %2670 = vmatpush1.bf16.msra.mxu0 0
    %2671 = vmatprep.mubr.bf16.mxu0 0
    %2672 = vmatmul.mubr.bf16.gmra.mrb[0].mxu0 %v2638
    %v2673 = vpop.f32.mrb[0].mxu0
    %v2674 = vadd.f32 0.0, %v2673
    %v2675 = vpop.f32.mrb[0].mxu0
    %v2676 = vpop.f32.mrb[0].mxu0
    %v2677 = vpop.f32.mrb[0].mxu0
    %2678 = vdwg.mxu0
    %v2679 = vmul.f32 %v2674, %v39
    %v2680 = vpack.c.bf16 %v2679, %v2679
    %2681 = vmatprep.subr.bf16.mxu0 0
    %2682 = vmatpush1.bf16.msra.mxu0 %v56
    %2683 = vmatprep.subr.bf16.mxu0 0
    %2684 = vmatpush1.bf16.msra.mxu0 %v57
    %2685 = vmatprep.subr.bf16.mxu0 0
    %2686 = vmatpush1.bf16.msra.mxu0 %v58
    %2687 = vmatprep.subr.bf16.mxu0 0
    %2688 = vmatpush1.bf16.msra.mxu0 %v59
    %2689 = vmatprep.subr.bf16.mxu0 0
    %2690 = vmatpush1.bf16.msra.mxu0 %v60
    %2691 = vmatprep.subr.bf16.mxu0 0
    %2692 = vmatpush1.bf16.msra.mxu0 %v61
    %2693 = vmatprep.subr.bf16.mxu0 0
    %2694 = vmatpush1.bf16.msra.mxu0 %v62
    %2695 = vmatprep.subr.bf16.mxu0 0
    %2696 = vmatpush1.bf16.msra.mxu0 %v63
    %2697 = vmatprep.subr.bf16.mxu0 0
    %2698 = vmatpush1.bf16.msra.mxu0 0
    %2699 = vmatprep.subr.bf16.mxu0 0
    %2700 = vmatpush1.bf16.msra.mxu0 0
    %2701 = vmatprep.subr.bf16.mxu0 0
    %2702 = vmatpush1.bf16.msra.mxu0 0
    %2703 = vmatprep.subr.bf16.mxu0 0
    %2704 = vmatpush1.bf16.msra.mxu0 0
    %2705 = vmatprep.subr.bf16.mxu0 0
    %2706 = vmatpush1.bf16.msra.mxu0 0
    %2707 = vmatprep.subr.bf16.mxu0 0
    %2708 = vmatpush1.bf16.msra.mxu0 0
    %2709 = vmatprep.subr.bf16.mxu0 0
    %2710 = vmatpush1.bf16.msra.mxu0 0
    %2711 = vmatprep.subr.bf16.mxu0 0
    %2712 = vmatpush1.bf16.msra.mxu0 0
    %2713 = vmatprep.mubr.bf16.mxu0 0
    %2714 = vmatmul.mubr.bf16.gmra.mrb[0].mxu0 %v2680
    %v2715 = vpop.f32.mrb[0].mxu0
    %v2716 = vadd.f32 0.0, %v2715
    %v2717 = vpop.f32.mrb[0].mxu0
    %v2718 = vpop.f32.mrb[0].mxu0
    %v2719 = vpop.f32.mrb[0].mxu0
    %2720 = vdwg.mxu0
    %v2721 = vmul.f32 %v2716, %v39
    %v2722 = vpack.c.bf16 %v2721, %v2721
    %2723 = vmatprep.subr.bf16.mxu0 0
    %2724 = vmatpush1.bf16.msra.mxu0 %v56
    %2725 = vmatprep.subr.bf16.mxu0 0
    %2726 = vmatpush1.bf16.msra.mxu0 %v57
    %2727 = vmatprep.subr.bf16.mxu0 0
    %2728 = vmatpush1.bf16.msra.mxu0 %v58
    %2729 = vmatprep.subr.bf16.mxu0 0
    %2730 = vmatpush1.bf16.msra.mxu0 %v59
    %2731 = vmatprep.subr.bf16.mxu0 0
    %2732 = vmatpush1.bf16.msra.mxu0 %v60
    %2733 = vmatprep.subr.bf16.mxu0 0
    %2734 = vmatpush1.bf16.msra.mxu0 %v61
    %2735 = vmatprep.subr.bf16.mxu0 0
    %2736 = vmatpush1.bf16.msra.mxu0 %v62
    %2737 = vmatprep.subr.bf16.mxu0 0
    %2738 = vmatpush1.bf16.msra.mxu0 %v63
    %2739 = vmatprep.subr.bf16.mxu0 0
    %2740 = vmatpush1.bf16.msra.mxu0 0
    %2741 = vmatprep.subr.bf16.mxu0 0
    %2742 = vmatpush1.bf16.msra.mxu0 0
    %2743 = vmatprep.subr.bf16.mxu0 0
    %2744 = vmatpush1.bf16.msra.mxu0 0
    %2745 = vmatprep.subr.bf16.mxu0 0
    %2746 = vmatpush1.bf16.msra.mxu0 0
    %2747 = vmatprep.subr.bf16.mxu0 0
    %2748 = vmatpush1.bf16.msra.mxu0 0
    %2749 = vmatprep.subr.bf16.mxu0 0
    %2750 = vmatpush1.bf16.msra.mxu0 0
    %2751 = vmatprep.subr.bf16.mxu0 0
    %2752 = vmatpush1.bf16.msra.mxu0 0
    %2753 = vmatprep.subr.bf16.mxu0 0
    %2754 = vmatpush1.bf16.msra.mxu0 0
    %2755 = vmatprep.mubr.bf16.mxu0 0
    %2756 = vmatmul.mubr.bf16.gmra.mrb[0].mxu0 %v2722
    %v2757 = vpop.f32.mrb[0].mxu0
    %v2758 = vadd.f32 0.0, %v2757
    %v2759 = vpop.f32.mrb[0].mxu0
    %v2760 = vpop.f32.mrb[0].mxu0
    %v2761 = vpop.f32.mrb[0].mxu0
    %2762 = vdwg.mxu0
    %v2763 = vmul.f32 %v2758, %v39
    %v2764 = vpack.c.bf16 %v2763, %v2763
    %2765 = vmatprep.subr.bf16.mxu0 0
    %2766 = vmatpush1.bf16.msra.mxu0 %v56
    %2767 = vmatprep.subr.bf16.mxu0 0
    %2768 = vmatpush1.bf16.msra.mxu0 %v57
    %2769 = vmatprep.subr.bf16.mxu0 0
    %2770 = vmatpush1.bf16.msra.mxu0 %v58
    %2771 = vmatprep.subr.bf16.mxu0 0
    %2772 = vmatpush1.bf16.msra.mxu0 %v59
    %2773 = vmatprep.subr.bf16.mxu0 0
    %2774 = vmatpush1.bf16.msra.mxu0 %v60
    %2775 = vmatprep.subr.bf16.mxu0 0
    %2776 = vmatpush1.bf16.msra.mxu0 %v61
    %2777 = vmatprep.subr.bf16.mxu0 0
    %2778 = vmatpush1.bf16.msra.mxu0 %v62
    %2779 = vmatprep.subr.bf16.mxu0 0
    %2780 = vmatpush1.bf16.msra.mxu0 %v63
    %2781 = vmatprep.subr.bf16.mxu0 0
    %2782 = vmatpush1.bf16.msra.mxu0 0
    %2783 = vmatprep.subr.bf16.mxu0 0
    %2784 = vmatpush1.bf16.msra.mxu0 0
    %2785 = vmatprep.subr.bf16.mxu0 0
    %2786 = vmatpush1.bf16.msra.mxu0 0
    %2787 = vmatprep.subr.bf16.mxu0 0
    %2788 = vmatpush1.bf16.msra.mxu0 0
    %2789 = vmatprep.subr.bf16.mxu0 0
    %2790 = vmatpush1.bf16.msra.mxu0 0
    %2791 = vmatprep.subr.bf16.mxu0 0
    %2792 = vmatpush1.bf16.msra.mxu0 0
    %2793 = vmatprep.subr.bf16.mxu0 0
    %2794 = vmatpush1.bf16.msra.mxu0 0
    %2795 = vmatprep.subr.bf16.mxu0 0
    %2796 = vmatpush1.bf16.msra.mxu0 0
    %2797 = vmatprep.mubr.bf16.mxu0 0
    %2798 = vmatmul.mubr.bf16.gmra.mrb[0].mxu0 %v2764
    %v2799 = vpop.f32.mrb[0].mxu0
    %v2800 = vadd.f32 0.0, %v2799
    %v2801 = vpop.f32.mrb[0].mxu0
    %v2802 = vpop.f32.mrb[0].mxu0
    %v2803 = vpop.f32.mrb[0].mxu0
    %2804 = vdwg.mxu0
    %v2805 = vmul.f32 %v2800, %v39
    %v2806 = vpack.c.bf16 %v2805, %v2805
    %2807 = vmatprep.subr.bf16.mxu0 0
    %2808 = vmatpush1.bf16.msra.mxu0 %v56
    %2809 = vmatprep.subr.bf16.mxu0 0
    %2810 = vmatpush1.bf16.msra.mxu0 %v57
    %2811 = vmatprep.subr.bf16.mxu0 0
    %2812 = vmatpush1.bf16.msra.mxu0 %v58
    %2813 = vmatprep.subr.bf16.mxu0 0
    %2814 = vmatpush1.bf16.msra.mxu0 %v59
    %2815 = vmatprep.subr.bf16.mxu0 0
    %2816 = vmatpush1.bf16.msra.mxu0 %v60
    %2817 = vmatprep.subr.bf16.mxu0 0
    %2818 = vmatpush1.bf16.msra.mxu0 %v61
    %2819 = vmatprep.subr.bf16.mxu0 0
    %2820 = vmatpush1.bf16.msra.mxu0 %v62
    %2821 = vmatprep.subr.bf16.mxu0 0
    %2822 = vmatpush1.bf16.msra.mxu0 %v63
    %2823 = vmatprep.subr.bf16.mxu0 0
    %2824 = vmatpush1.bf16.msra.mxu0 0
    %2825 = vmatprep.subr.bf16.mxu0 0
    %2826 = vmatpush1.bf16.msra.mxu0 0
    %2827 = vmatprep.subr.bf16.mxu0 0
    %2828 = vmatpush1.bf16.msra.mxu0 0
    %2829 = vmatprep.subr.bf16.mxu0 0
    %2830 = vmatpush1.bf16.msra.mxu0 0
    %2831 = vmatprep.subr.bf16.mxu0 0
    %2832 = vmatpush1.bf16.msra.mxu0 0
    %2833 = vmatprep.subr.bf16.mxu0 0
    %2834 = vmatpush1.bf16.msra.mxu0 0
    %2835 = vmatprep.subr.bf16.mxu0 0
    %2836 = vmatpush1.bf16.msra.mxu0 0
    %2837 = vmatprep.subr.bf16.mxu0 0
    %2838 = vmatpush1.bf16.msra.mxu0 0
    %2839 = vmatprep.mubr.bf16.mxu0 0
    %2840 = vmatmul.mubr.bf16.gmra.mrb[0].mxu0 %v2806
    %v2841 = vpop.f32.mrb[0].mxu0
    %v2842 = vadd.f32 0.0, %v2841
    %v2843 = vpop.f32.mrb[0].mxu0
    %v2844 = vpop.f32.mrb[0].mxu0
    %v2845 = vpop.f32.mrb[0].mxu0
    %2846 = vdwg.mxu0
    %v2847 = vmul.f32 %v2842, %v39
    %v2848 = vpack.c.bf16 %v2847, %v2847
    %2849 = vmatprep.subr.bf16.mxu0 0
    %2850 = vmatpush1.bf16.msra.mxu0 %v56
    %2851 = vmatprep.subr.bf16.mxu0 0
    %2852 = vmatpush1.bf16.msra.mxu0 %v57
    %2853 = vmatprep.subr.bf16.mxu0 0
    %2854 = vmatpush1.bf16.msra.mxu0 %v58
    %2855 = vmatprep.subr.bf16.mxu0 0
    %2856 = vmatpush1.bf16.msra.mxu0 %v59
    %2857 = vmatprep.subr.bf16.mxu0 0
    %2858 = vmatpush1.bf16.msra.mxu0 %v60
    %2859 = vmatprep.subr.bf16.mxu0 0
    %2860 = vmatpush1.bf16.msra.mxu0 %v61
    %2861 = vmatprep.subr.bf16.mxu0 0
    %2862 = vmatpush1.bf16.msra.mxu0 %v62
    %2863 = vmatprep.subr.bf16.mxu0 0
    %2864 = vmatpush1.bf16.msra.mxu0 %v63
    %2865 = vmatprep.subr.bf16.mxu0 0
    %2866 = vmatpush1.bf16.msra.mxu0 0
    %2867 = vmatprep.subr.bf16.mxu0 0
    %2868 = vmatpush1.bf16.msra.mxu0 0
    %2869 = vmatprep.subr.bf16.mxu0 0
    %2870 = vmatpush1.bf16.msra.mxu0 0
    %2871 = vmatprep.subr.bf16.mxu0 0
    %2872 = vmatpush1.bf16.msra.mxu0 0
    %2873 = vmatprep.subr.bf16.mxu0 0
    %2874 = vmatpush1.bf16.msra.mxu0 0
    %2875 = vmatprep.subr.bf16.mxu0 0
    %2876 = vmatpush1.bf16.msra.mxu0 0
    %2877 = vmatprep.subr.bf16.mxu0 0
    %2878 = vmatpush1.bf16.msra.mxu0 0
    %2879 = vmatprep.subr.bf16.mxu0 0
    %2880 = vmatpush1.bf16.msra.mxu0 0
    %2881 = vmatprep.mubr.bf16.mxu0 0
    %2882 = vmatmul.mubr.bf16.gmra.mrb[0].mxu0 %v2848
    %v2883 = vpop.f32.mrb[0].mxu0
    %v2884 = vadd.f32 0.0, %v2883
    %v2885 = vpop.f32.mrb[0].mxu0
    %v2886 = vpop.f32.mrb[0].mxu0
    %v2887 = vpop.f32.mrb[0].mxu0
    %2888 = vdwg.mxu0
    %v2889 = vmul.f32 %v2884, %v39
    %v2890 = vmul.f32 %v2889, %v2889
    %v2891 = vsel %vm66, %v2890, 0.0
    %2892 = vadd.xlane.f32.xlu0 %v2891
    %v2893 = vpop.xlane.xlu0 %2892
    %v2894 = vrot.slane %v2893, 4
    %v2895 = vadd.f32 %v2893, %v2894
    %v2896 = vrot.slane %v2895, 2
    %v2897 = vadd.f32 %v2895, %v2896
    %v2898 = vrot.slane %v2897, 1
    %v2899 = vadd.f32 %v2897, %v2898
    %s2900 = vtos %v2899
    %s2901 = sadd.f32 %s2900, 1e-30
    %v2902 = vstv %s2901
    %v2903 = vrsqrt.pop %v2902
    %s2904 = vtos %v2903
    %v2905 = vstv %s2904
    %v2906 = vmul.f32 %v2889, %v2905
    %2907 = vmatprep.subr.mxu0 0.0
    %2908 = vmatpush1.msra.mxu0 %v40
    %2909 = vmatprep.subr.mxu0 0.0
    %2910 = vmatpush1.msra.mxu0 %v41
    %2911 = vmatprep.subr.mxu0 0.0
    %2912 = vmatpush1.msra.mxu0 %v42
    %2913 = vmatprep.subr.mxu0 0.0
    %2914 = vmatpush1.msra.mxu0 %v43
    %2915 = vmatprep.subr.mxu0 0.0
    %2916 = vmatpush1.msra.mxu0 %v44
    %2917 = vmatprep.subr.mxu0 0.0
    %2918 = vmatpush1.msra.mxu0 %v45
    %2919 = vmatprep.subr.mxu0 0.0
    %2920 = vmatpush1.msra.mxu0 %v46
    %2921 = vmatprep.subr.mxu0 0.0
    %2922 = vmatpush1.msra.mxu0 %v47
    %2923 = vmatprep.subr.mxu0 0.0
    %2924 = vmatpush1.msra.mxu0 %v48
    %2925 = vmatprep.subr.mxu0 0.0
    %2926 = vmatpush1.msra.mxu0 %v49
    %2927 = vmatprep.subr.mxu0 0.0
    %2928 = vmatpush1.msra.mxu0 %v50
    %2929 = vmatprep.subr.mxu0 0.0
    %2930 = vmatpush1.msra.mxu0 %v51
    %2931 = vmatprep.subr.mxu0 0.0
    %2932 = vmatpush1.msra.mxu0 %v52
    %2933 = vmatprep.subr.mxu0 0.0
    %2934 = vmatpush1.msra.mxu0 %v53
    %2935 = vmatprep.subr.mxu0 0.0
    %2936 = vmatpush1.msra.mxu0 %v54
    %2937 = vmatprep.subr.mxu0 0.0
    %2938 = vmatpush1.msra.mxu0 %v55
    %2939 = vmatprep.subr.mxu0 0.0
    %2940 = vmatpush1.msra.mxu0 0.0
    %2941 = vmatprep.subr.mxu0 0.0
    %2942 = vmatpush1.msra.mxu0 0.0
    %2943 = vmatprep.subr.mxu0 0.0
    %2944 = vmatpush1.msra.mxu0 0.0
    %2945 = vmatprep.subr.mxu0 0.0
    %2946 = vmatpush1.msra.mxu0 0.0
    %2947 = vmatprep.subr.mxu0 0.0
    %2948 = vmatpush1.msra.mxu0 0.0
    %2949 = vmatprep.subr.mxu0 0.0
    %2950 = vmatpush1.msra.mxu0 0.0
    %2951 = vmatprep.subr.mxu0 0.0
    %2952 = vmatpush1.msra.mxu0 0.0
    %2953 = vmatprep.subr.mxu0 0.0
    %2954 = vmatpush1.msra.mxu0 0.0
    %2955 = vmatprep.subr.mxu0 0.0
    %2956 = vmatpush1.msra.mxu0 0.0
    %2957 = vmatprep.subr.mxu0 0.0
    %2958 = vmatpush1.msra.mxu0 0.0
    %2959 = vmatprep.subr.mxu0 0.0
    %2960 = vmatpush1.msra.mxu0 0.0
    %2961 = vmatprep.subr.mxu0 0.0
    %2962 = vmatpush1.msra.mxu0 0.0
    %2963 = vmatprep.subr.mxu0 0.0
    %2964 = vmatpush1.msra.mxu0 0.0
    %2965 = vmatprep.subr.mxu0 0.0
    %2966 = vmatpush1.msra.mxu0 0.0
    %2967 = vmatprep.subr.mxu0 0.0
    %2968 = vmatpush1.msra.mxu0 0.0
    %2969 = vmatprep.subr.mxu0 0.0
    %2970 = vmatpush1.msra.mxu0 0.0
    %2971 = vmatprep.mubr.f32.mxu0 0.0
    %2972 = vmatmul.mubr.f32.gmra.mrb[0].mxu0 %v2906
    %v2973 = vpop.f32.mrb[0].mxu0
    %v2974 = vadd.f32 0.0, %v2973
    %v2975 = vpop.f32.mrb[0].mxu0
    %2976 = vdwg.mxu0
    %v2977 = vmul.f32 %v2974, %v39
    %v2978 = vmul.f32 %v2906, %v2977
    %v2979 = vsel %vm66, %v2978, 0.0
    %2980 = vadd.xlane.f32.xlu0 %v2979
    %v2981 = vpop.xlane.xlu0 %2980
    %v2982 = vrot.slane %v2981, 4
    %v2983 = vadd.f32 %v2981, %v2982
    %v2984 = vrot.slane %v2983, 2
    %v2985 = vadd.f32 %v2983, %v2984
    %v2986 = vrot.slane %v2985, 1
    %v2987 = vadd.f32 %v2985, %v2986
    %s2988 = vtos %v2987
    %v2989 = vmul.f32 %v2906, %v2906
    %v2990 = vsel %vm66, %v2989, 0.0
    %2991 = vadd.xlane.f32.xlu0 %v2990
    %v2992 = vpop.xlane.xlu0 %2991
    %v2993 = vrot.slane %v2992, 4
    %v2994 = vadd.f32 %v2992, %v2993
    %v2995 = vrot.slane %v2994, 2
    %v2996 = vadd.f32 %v2994, %v2995
    %v2997 = vrot.slane %v2996, 1
    %v2998 = vadd.f32 %v2996, %v2997
    %s2999 = vtos %v2998
    %s3000 = sadd.f32 %s2999, 1e-30
    %v3001 = vstv %s3000
    %v3002 = vrcp.pop %v3001
    %s3003 = vtos %v3002
    %s3004 = smul.f32 %s2988, %s3003
    %s3005 = ssub.f32 0.99, %s3004
    %s3006 = scalar_lea.smem [#allocation5], 0
    %3007 = sst [smem:[%s3006]] %s3005
    // Predicated region
    $region18: #{tpu_custom_call.1} parent=1 // pred_check
      _
    $region19: #{tpu_custom_call.1} parent=1 // pred_check_branch
      %3009 = sbr.rel (0) target = $region21
    $region20: #{tpu_custom_call.1} parent=1 // pred_region
      %s3011 = ssub.s32 16, 16
      %3012 = vsyncadd [#allocation4], %s3011
      %3015 = dma.smem_to_hbm [#allocation5], 16, %s3, [#allocation4]
    $region21: #{tpu_custom_call.1} parent=1 // pred_fallthru
      _
    // Predicated region
    $region22: #{tpu_custom_call.1} parent=1 // pred_check
      _
    $region23: #{tpu_custom_call.1} parent=1 // pred_check_branch
      %3017 = sbr.rel (0) target = $region25
    $region24: #{tpu_custom_call.1} parent=1 // pred_region
      %3018 = dma.done [#allocation4], 16
    $region25: #{tpu_custom_call.1} parent=1 // pred_fallthru
      _
    %3019 = sfence
    %3020 = vsyncpa [#allocation3], 1
    %3021 = vsyncpa [#allocation4], 1

</llo_original>
